<compile_context>
chip_gen: v7x
topology: tpu7x:2x2x1
jax: 0.10.0
libtpu: 0.0.40
codegen_flags: <defaults>
</compile_context>

<pallas_src>
import functools

import jax
import jax.numpy as jnp
from jax.experimental import pallas as pl
from jax.experimental.pallas import tpu as pltpu

WINDOW_SIZE = 11
SIGMA = 1.5


def _gaussian_1d(window_size=WINDOW_SIZE, sigma=SIGMA):
    coords = jnp.arange(window_size, dtype=jnp.float32) - window_size // 2
    g = jnp.exp(-(coords ** 2) / (2.0 * sigma ** 2))
    return g / jnp.sum(g)


def _band_matrix(n, g, window_size=WINDOW_SIZE):
    # M[r, c] = g[c - r + half] for |c - r| <= half else 0 (symmetric since g is).
    # Band truncation at the borders exactly reproduces conv2d zero 'same' padding.
    half = window_size // 2
    idx = jnp.arange(n)
    diff = idx[None, :] - idx[:, None]
    vals = g[jnp.clip(diff + half, 0, window_size - 1)]
    return jnp.where(jnp.abs(diff) <= half, vals, 0.0).astype(jnp.float32)


def _fold8(v):
    """Partial-sum an (..., R, L) array down to (8, L).

    Leading axes are summed with whole-vreg adds; the row axis is folded down to 8
    sublanes.  When R % 8 == 0 the fold is pure VPU vreg adds; otherwise a single
    cross-sublane reduction is used as a fallback."""
    while v.ndim > 2:
        v = jnp.sum(v, axis=0)
    rows, lanes = v.shape
    if rows >= 8 and rows % 8 == 0:
        return jnp.sum(v.reshape(rows // 8, 8, lanes), axis=0)
    s = jnp.sum(v, axis=0, keepdims=True)
    sub = jax.lax.broadcasted_iota(jnp.int32, (8, lanes), 0)
    return jnp.where(sub == 0, jnp.broadcast_to(s, (8, lanes)), 0.0)


def _loss_kernel(*refs, c1, c2, val_range, square, w_l1, w_h, w_v, conv_dtype):
    if square:
        (x_ref, y_ref, a_ref, out_ref, pt_acc, ssim_acc) = refs
        b_ref = None
    else:
        (x_ref, y_ref, a_ref, b_ref, out_ref, pt_acc, ssim_acc) = refs

    i = pl.program_id(1)

    @pl.when(i == 0)
    def _():
        pt_acc[...] = jnp.zeros_like(pt_acc)
        ssim_acc[...] = jnp.zeros_like(ssim_acc)

    x = x_ref[...]                        # (K, H, W) raw "output" images
    y = y_ref[...]                        # (K, H, W) raw "target" images
    K, H, W = x.shape
    A = a_ref[...].astype(conv_dtype)     # (H, H) gaussian band (height conv)
    B = A if square else b_ref[...].astype(conv_dtype)   # (W, W) band (width conv)

    # ---- pointwise terms (L1 + both TV directions), pre-scaled and merged ----
    # TV diffs are realigned to the full (K, H, W) shape (boundary diff is exactly 0),
    # so a single lane-aligned fold/accumulator-add per step suffices.
    ptw = w_l1 * jnp.abs(x - y)
    if w_h is not None:
        xs = jnp.concatenate([x[:, :, :1], x[:, :, :-1]], axis=2)   # column shift
        ptw = ptw + w_h * jnp.abs(x - xs)
    if w_v is not None:
        xv = jnp.concatenate([x[:, :1, :], x[:, :-1, :]], axis=1)   # row shift
        ptw = ptw + w_v * jnp.abs(x - xv)
    pt_acc[...] += _fold8(ptw)                                       # (8, W)

    # ---- SSIM (inputs clamped to [0, val_range]) ----
    xc = jnp.clip(x, 0.0, val_range)
    yc = jnp.clip(y, 0.0, val_range)

    def conv_T(z):
        # Separable gaussian 'same' conv of each (H, W) image via two banded matmuls;
        # result is returned in TRANSPOSED (K, W, H) layout (global sum is invariant).
        zb = jnp.dot(z.reshape(K * H, W).astype(conv_dtype), B,
                     preferred_element_type=jnp.float32)             # width stage
        zbt = jnp.swapaxes(zb.reshape(K, H, W), 1, 2).reshape(K * W, H)
        return jnp.dot(zbt.astype(conv_dtype), A,
                       preferred_element_type=jnp.float32).reshape(K, W, H)

    mu1 = conv_T(xc)
    mu2 = conv_T(yc)
    e_xx = conv_T(xc * xc)
    e_yy = conv_T(yc * yc)
    e_xy = conv_T(xc * yc)

    mu1_sq = mu1 * mu1
    mu2_sq = mu2 * mu2
    mu1_mu2 = mu1 * mu2
    sigma1_sq = e_xx - mu1_sq
    sigma2_sq = e_yy - mu2_sq
    sigma12 = e_xy - mu1_mu2

    num = (2.0 * mu1_mu2 + c1) * (2.0 * sigma12 + c2)
    den = (mu1_sq + mu2_sq + c1) * (sigma1_sq + sigma2_sq + c2)
    # NOTE: exact divide kept (pl.reciprocal(approx=True) would drift SSIM slightly).
    ssim_acc[...] += _fold8(num / den)                               # (8, H)

    # ---- finalize: one lane-dense (8, 128) store per core at the last step ----
    @pl.when(i == pl.num_programs(1) - 1)
    def _():
        pt_s = jnp.sum(pt_acc[...])        # already == L1 + Ltv (pre-scaled)
        ssim_s = jnp.sum(ssim_acc[...])    # raw ssim_map sum (incl. padded images)
        lane = jax.lax.broadcasted_iota(jnp.int32, (8, 128), 1)
        out_ref[0] = (jnp.where(lane == 0, pt_s, 0.0)
                      + jnp.where(lane == 1, ssim_s, 0.0))


def _num_tensorcores_per_device():
    """2 for megacore chips (v4 / v5p / v7x), else 1 (v5e / v6e single TC)."""
    try:
        kind = jax.devices()[0].device_kind.lower()
    except Exception:
        return 1
    if "v4" in kind or "v5p" in kind or "7" in kind:
        return 2
    return 1


def loss_function_pallas(output, target, c=0.5, val_range=1.0, use_bf16_conv=False):
    """Matches loss_function(c, val_range).forward(output, target).
    Note: `c` is stored but unused by the PyTorch forward (all weights are 1)."""
    N, C, H, W = output.shape
    n_img = N * C
    x = output.reshape(n_img, H, W).astype(jnp.float32)
    y = target.reshape(n_img, H, W).astype(jnp.float32)

    n_cores = 2 if (_num_tensorcores_per_device() == 2 and n_img >= 2) else 1

    square = (H == W)
    band_bytes = 4 * (H * H if square else H * H + W * W)
    bytes_per_img = 4 * H * W
    # ~16 live copies of one (H, W) f32 slab per image in the block at peak:
    # 2 double-buffered inputs (x, y), xc/yc, 5 conv results, shift/matmul temporaries.
    per_img_working = 16 * bytes_per_img
    work_budget = max((22 << 20) - band_bytes, 2 << 20)
    per_core_imgs = -(-n_img // n_cores)
    K = int(max(1, min(per_core_imgs, work_budget // per_img_working, 1024)))
    steps = -(-n_img // (n_cores * K))
    n_pad = n_cores * K * steps - n_img
    if n_pad:
        # Zero-image padding contributes 0 to L1/TV and exactly H*W per padded image
        # to the SSIM sum (ssim(0,0) == 1 exactly, even with bf16 matmuls, since the
        # conv of zeros is exactly zero); corrected after the call.
        zpad = jnp.zeros((n_pad, H, W), jnp.float32)
        x = jnp.concatenate([x, zpad], axis=0)
        y = jnp.concatenate([y, zpad], axis=0)

    g = _gaussian_1d()
    bands = ((_band_matrix(H, g),) if square
             else (_band_matrix(H, g), _band_matrix(W, g)))

    c1 = (0.01 * val_range) ** 2
    c2 = (0.03 * val_range) ** 2
    # Mean denominators folded into per-pixel weights so L1 + TV share one accumulator.
    w_l1 = 1.0 / float(n_img * H * W)
    w_h = (1.0 / float(n_img * H * (W - 1))) if W > 1 else None
    w_v = (1.0 / float(n_img * (H - 1) * W)) if H > 1 else None
    conv_dtype = jnp.bfloat16 if use_bf16_conv else jnp.float32

    kernel = functools.partial(
        _loss_kernel, c1=c1, c2=c2, val_range=val_range, square=square,
        w_l1=w_l1, w_h=w_h, w_v=w_v, conv_dtype=conv_dtype)

    img_spec = pl.BlockSpec((K, H, W), lambda cc, i: (cc * steps + i, 0, 0))
    band_specs = [pl.BlockSpec(tuple(b.shape), lambda cc, i: (0, 0)) for b in bands]

    est_bytes = band_bytes + per_img_working * K + (2 << 20)
    # >= 32 MiB so we never go below any generation's default scoped VMEM;
    # <= 40 MiB so it stays well under v7x's 64 MiB physical VMEM.
    vmem_limit = int(min(max(est_bytes + est_bytes // 2, 32 << 20), 40 << 20))

    out = pl.pallas_call(
        kernel,
        out_shape=jax.ShapeDtypeStruct((n_cores, 8, 128), jnp.float32),
        grid_spec=pltpu.PrefetchScalarGridSpec(
            num_scalar_prefetch=0,
            grid=(n_cores, steps),
            in_specs=[img_spec, img_spec, *band_specs],
            out_specs=pl.BlockSpec((1, 8, 128), lambda cc, i: (cc, 0, 0)),
            scratch_shapes=[
                pltpu.VMEM((8, W), jnp.float32),   # pre-scaled L1 + TV partials
                pltpu.VMEM((8, H), jnp.float32),   # ssim_map partials (transposed)
            ]),
        compiler_params=pltpu.CompilerParams(
            dimension_semantics=("parallel", "arbitrary"),
            vmem_limit_bytes=vmem_limit),
    )(x, y, *bands)

    pt_sum = jnp.sum(out[:, 0, 0])                              # == L1 + Ltv
    ssim_sum = jnp.sum(out[:, 0, 1]) - n_pad * float(H * W)     # remove pad contamination
    # sum_c (1 - mean_{n,h,w} ssim_map_c)  ==  C - total_ssim_sum / (N*H*W)
    lssim = C - ssim_sum / (N * H * W)
    return pt_sum + lssim


if __name__ == "__main__":
    key = jax.random.PRNGKey(0)
    k1, k2 = jax.random.split(key)
    # small shapes consistent with an image loss: N=2, C=4, H=W=16
    output = jax.random.uniform(k1, (2, 4, 16, 16), dtype=jnp.float32)
    target = jax.random.uniform(k2, (2, 4, 16, 16), dtype=jnp.float32)

    total = loss_function_pallas(output, target, c=0.5, val_range=1.0)
    jax.block_until_ready(total)
    print("KERNEL_OK")
</pallas_src>

<mosaic_0001>
module attributes {stable_mosaic.version = 11 : i64} {
  func.func @_loss_kernel(%arg0: i32, %arg1: i32, %arg2: memref<8x16x16xf32, #tpu.memory_space<vmem>>, %arg3: memref<8x16x16xf32, #tpu.memory_space<vmem>>, %arg4: memref<16x16xf32, #tpu.memory_space<vmem>>, %arg5: memref<1x8x128xf32, #tpu.memory_space<vmem>>, %arg6: memref<8x16xf32, #tpu.memory_space<vmem>>, %arg7: memref<8x16xf32, #tpu.memory_space<vmem>>) attributes {dimension_semantics = [#tpu.dimension_semantics<parallel>, #tpu.dimension_semantics<arbitrary>], iteration_bounds = array<i64: 1, 1>, scalar_prefetch = 0 : i64, scratch_operands = 2 : i64, tpu.core_type = #tpu.core_type<tc>, window_params = [{transform_indices = @transform_0, window_bounds = array<i64: 8, 16, 16>}, {transform_indices = @transform_1, window_bounds = array<i64: 8, 16, 16>}, {pipeline_mode = #tpu.pipeline_mode<synchronous>, transform_indices = @transform_2, window_bounds = array<i64: 16, 16>}, {transform_indices = @transform_3, window_bounds = array<i64: 1, 8, 128>}]} {
    %c0_i32 = arith.constant 0 : i32
    %0 = arith.cmpi eq, %arg1, %c0_i32 : i32
    %1 = arith.extui %0 : i1 to i32
    %c0_i32_0 = arith.constant 0 : i32
    %2 = arith.cmpi ne, %1, %c0_i32_0 : i32
    scf.if %2 {
      %cst_44 = arith.constant 0.000000e+00 : f32
      %110 = vector.broadcast %cst_44 : f32 to vector<8x16xf32>
      %c0_45 = arith.constant 0 : index
      %c0_46 = arith.constant 0 : index
      %111 = vector.load %arg6[%c0_45, %c0_46] : memref<8x16xf32, #tpu.memory_space<vmem>>, vector<8x16xf32>
      tpu.vector_store %arg6[%c0_45, %c0_46], %110 {strides = array<i32>} : memref<8x16xf32, #tpu.memory_space<vmem>>, vector<8x16xf32>,
      %cst_47 = arith.constant 0.000000e+00 : f32
      %112 = vector.broadcast %cst_47 : f32 to vector<8x16xf32>
      %c0_48 = arith.constant 0 : index
      %c0_49 = arith.constant 0 : index
      %113 = vector.load %arg7[%c0_48, %c0_49] : memref<8x16xf32, #tpu.memory_space<vmem>>, vector<8x16xf32>
      tpu.vector_store %arg7[%c0_48, %c0_49], %112 {strides = array<i32>} : memref<8x16xf32, #tpu.memory_space<vmem>>, vector<8x16xf32>,
    } else {
    }
    %c0 = arith.constant 0 : index
    %c0_1 = arith.constant 0 : index
    %c0_2 = arith.constant 0 : index
    %3 = vector.load %arg2[%c0, %c0_1, %c0_2] : memref<8x16x16xf32, #tpu.memory_space<vmem>>, vector<8x16x16xf32>
    %c0_3 = arith.constant 0 : index
    %c0_4 = arith.constant 0 : index
    %c0_5 = arith.constant 0 : index
    %4 = vector.load %arg3[%c0_3, %c0_4, %c0_5] : memref<8x16x16xf32, #tpu.memory_space<vmem>>, vector<8x16x16xf32>
    %c0_6 = arith.constant 0 : index
    %c0_7 = arith.constant 0 : index
    %5 = vector.load %arg4[%c0_6, %c0_7] : memref<16x16xf32, #tpu.memory_space<vmem>>, vector<16x16xf32>
    %6 = arith.subf %3, %4 : vector<8x16x16xf32>
    %7 = math.absf %6 : vector<8x16x16xf32>
    %cst = arith.constant 4.8828125E-4 : f32
    %8 = vector.broadcast %cst : f32 to vector<8x16x16xf32>
    %9 = arith.mulf %8, %7 : vector<8x16x16xf32>
    %10 = vector.extract_strided_slice %3 {offsets = [0, 0, 0], sizes = [8, 16, 1], strides = [1, 1, 1]} : vector<8x16x16xf32> to vector<8x16x1xf32>
    %11 = vector.extract_strided_slice %3 {offsets = [0, 0, 0], sizes = [8, 16, 15], strides = [1, 1, 1]} : vector<8x16x16xf32> to vector<8x16x15xf32>
    %12 = tpu.concatenate %10, %11 in 2 : vector<8x16x1xf32>, vector<8x16x15xf32> -> vector<8x16x16xf32>
    %13 = arith.subf %3, %12 : vector<8x16x16xf32>
    %14 = math.absf %13 : vector<8x16x16xf32>
    %cst_8 = arith.constant 5.2083336E-4 : f32
    %15 = vector.broadcast %cst_8 : f32 to vector<8x16x16xf32>
    %16 = arith.mulf %15, %14 : vector<8x16x16xf32>
    %17 = arith.addf %9, %16 : vector<8x16x16xf32>
    %18 = vector.extract_strided_slice %3 {offsets = [0, 0, 0], sizes = [8, 1, 16], strides = [1, 1, 1]} : vector<8x16x16xf32> to vector<8x1x16xf32>
    %19 = vector.extract_strided_slice %3 {offsets = [0, 0, 0], sizes = [8, 15, 16], strides = [1, 1, 1]} : vector<8x16x16xf32> to vector<8x15x16xf32>
    %20 = tpu.concatenate %18, %19 in 1 : vector<8x1x16xf32>, vector<8x15x16xf32> -> vector<8x16x16xf32>
    %21 = arith.subf %3, %20 : vector<8x16x16xf32>
    %22 = math.absf %21 : vector<8x16x16xf32>
    %cst_9 = arith.constant 5.2083336E-4 : f32
    %23 = vector.broadcast %cst_9 : f32 to vector<8x16x16xf32>
    %24 = arith.mulf %23, %22 : vector<8x16x16xf32>
    %25 = arith.addf %17, %24 : vector<8x16x16xf32>
    %c0_10 = arith.constant 0 : index
    %c0_11 = arith.constant 0 : index
    %26 = vector.load %arg6[%c0_10, %c0_11] : memref<8x16xf32, #tpu.memory_space<vmem>>, vector<8x16xf32>
    %cst_12 = arith.constant dense<0.000000e+00> : vector<16x16xf32>
    %27 = vector.multi_reduction <add>, %25, %cst_12 [0] : vector<8x16x16xf32> to vector<16x16xf32>
    %28 = vector.shape_cast %27 : vector<16x16xf32> to vector<2x8x16xf32>
    %cst_13 = arith.constant dense<0.000000e+00> : vector<8x16xf32>
    %29 = vector.multi_reduction <add>, %28, %cst_13 [0] : vector<2x8x16xf32> to vector<8x16xf32>
    %30 = arith.addf %26, %29 : vector<8x16xf32>
    %c0_14 = arith.constant 0 : index
    %c0_15 = arith.constant 0 : index
    %31 = vector.load %arg6[%c0_14, %c0_15] : memref<8x16xf32, #tpu.memory_space<vmem>>, vector<8x16xf32>
    tpu.vector_store %arg6[%c0_14, %c0_15], %30 {strides = array<i32>} : memref<8x16xf32, #tpu.memory_space<vmem>>, vector<8x16xf32>,
    %cst_16 = arith.constant 0.000000e+00 : f32
    %cst_17 = arith.constant 1.000000e+00 : f32
    %32 = vector.broadcast %cst_16 : f32 to vector<8x16x16xf32>
    %33 = arith.maximumf %32, %3 : vector<8x16x16xf32>
    %34 = vector.broadcast %cst_17 : f32 to vector<8x16x16xf32>
    %35 = arith.minimumf %34, %33 : vector<8x16x16xf32>
    %cst_18 = arith.constant 0.000000e+00 : f32
    %cst_19 = arith.constant 1.000000e+00 : f32
    %36 = vector.broadcast %cst_18 : f32 to vector<8x16x16xf32>
    %37 = arith.maximumf %36, %4 : vector<8x16x16xf32>
    %38 = vector.broadcast %cst_19 : f32 to vector<8x16x16xf32>
    %39 = arith.minimumf %38, %37 : vector<8x16x16xf32>
    %40 = vector.shape_cast %35 : vector<8x16x16xf32> to vector<128x16xf32>
    %cst_20 = arith.constant dense<0.000000e+00> : vector<128x16xf32>
    %41 = tpu.matmul %40, %5, %cst_20 {dimension_numbers = #tpu.dot_dimension_numbers<[1], [0], [0], [1], [0, 0, 1, 1], [], []>} : vector<128x16xf32>, vector<16x16xf32>, vector<128x16xf32> -> vector<128x16xf32>
    %42 = vector.shape_cast %41 : vector<128x16xf32> to vector<8x16x16xf32>
    %43 = tpu.transpose %42, [0, 2, 1] : vector<8x16x16xf32> -> vector<8x16x16xf32>
    %44 = vector.shape_cast %43 : vector<8x16x16xf32> to vector<128x16xf32>
    %cst_21 = arith.constant dense<0.000000e+00> : vector<128x16xf32>
    %45 = tpu.matmul %44, %5, %cst_21 {dimension_numbers = #tpu.dot_dimension_numbers<[1], [0], [0], [1], [0, 0, 1, 1], [], []>} : vector<128x16xf32>, vector<16x16xf32>, vector<128x16xf32> -> vector<128x16xf32>
    %46 = vector.shape_cast %45 : vector<128x16xf32> to vector<8x16x16xf32>
    %47 = vector.shape_cast %39 : vector<8x16x16xf32> to vector<128x16xf32>
    %cst_22 = arith.constant dense<0.000000e+00> : vector<128x16xf32>
    %48 = tpu.matmul %47, %5, %cst_22 {dimension_numbers = #tpu.dot_dimension_numbers<[1], [0], [0], [1], [0, 0, 1, 1], [], []>} : vector<128x16xf32>, vector<16x16xf32>, vector<128x16xf32> -> vector<128x16xf32>
    %49 = vector.shape_cast %48 : vector<128x16xf32> to vector<8x16x16xf32>
    %50 = tpu.transpose %49, [0, 2, 1] : vector<8x16x16xf32> -> vector<8x16x16xf32>
    %51 = vector.shape_cast %50 : vector<8x16x16xf32> to vector<128x16xf32>
    %cst_23 = arith.constant dense<0.000000e+00> : vector<128x16xf32>
    %52 = tpu.matmul %51, %5, %cst_23 {dimension_numbers = #tpu.dot_dimension_numbers<[1], [0], [0], [1], [0, 0, 1, 1], [], []>} : vector<128x16xf32>, vector<16x16xf32>, vector<128x16xf32> -> vector<128x16xf32>
    %53 = vector.shape_cast %52 : vector<128x16xf32> to vector<8x16x16xf32>
    %54 = arith.mulf %35, %35 : vector<8x16x16xf32>
    %55 = vector.shape_cast %54 : vector<8x16x16xf32> to vector<128x16xf32>
    %cst_24 = arith.constant dense<0.000000e+00> : vector<128x16xf32>
    %56 = tpu.matmul %55, %5, %cst_24 {dimension_numbers = #tpu.dot_dimension_numbers<[1], [0], [0], [1], [0, 0, 1, 1], [], []>} : vector<128x16xf32>, vector<16x16xf32>, vector<128x16xf32> -> vector<128x16xf32>
    %57 = vector.shape_cast %56 : vector<128x16xf32> to vector<8x16x16xf32>
    %58 = tpu.transpose %57, [0, 2, 1] : vector<8x16x16xf32> -> vector<8x16x16xf32>
    %59 = vector.shape_cast %58 : vector<8x16x16xf32> to vector<128x16xf32>
    %cst_25 = arith.constant dense<0.000000e+00> : vector<128x16xf32>
    %60 = tpu.matmul %59, %5, %cst_25 {dimension_numbers = #tpu.dot_dimension_numbers<[1], [0], [0], [1], [0, 0, 1, 1], [], []>} : vector<128x16xf32>, vector<16x16xf32>, vector<128x16xf32> -> vector<128x16xf32>
    %61 = vector.shape_cast %60 : vector<128x16xf32> to vector<8x16x16xf32>
    %62 = arith.mulf %39, %39 : vector<8x16x16xf32>
    %63 = vector.shape_cast %62 : vector<8x16x16xf32> to vector<128x16xf32>
    %cst_26 = arith.constant dense<0.000000e+00> : vector<128x16xf32>
    %64 = tpu.matmul %63, %5, %cst_26 {dimension_numbers = #tpu.dot_dimension_numbers<[1], [0], [0], [1], [0, 0, 1, 1], [], []>} : vector<128x16xf32>, vector<16x16xf32>, vector<128x16xf32> -> vector<128x16xf32>
    %65 = vector.shape_cast %64 : vector<128x16xf32> to vector<8x16x16xf32>
    %66 = tpu.transpose %65, [0, 2, 1] : vector<8x16x16xf32> -> vector<8x16x16xf32>
    %67 = vector.shape_cast %66 : vector<8x16x16xf32> to vector<128x16xf32>
    %cst_27 = arith.constant dense<0.000000e+00> : vector<128x16xf32>
    %68 = tpu.matmul %67, %5, %cst_27 {dimension_numbers = #tpu.dot_dimension_numbers<[1], [0], [0], [1], [0, 0, 1, 1], [], []>} : vector<128x16xf32>, vector<16x16xf32>, vector<128x16xf32> -> vector<128x16xf32>
    %69 = vector.shape_cast %68 : vector<128x16xf32> to vector<8x16x16xf32>
    %70 = arith.mulf %35, %39 : vector<8x16x16xf32>
    %71 = vector.shape_cast %70 : vector<8x16x16xf32> to vector<128x16xf32>
    %cst_28 = arith.constant dense<0.000000e+00> : vector<128x16xf32>
    %72 = tpu.matmul %71, %5, %cst_28 {dimension_numbers = #tpu.dot_dimension_numbers<[1], [0], [0], [1], [0, 0, 1, 1], [], []>} : vector<128x16xf32>, vector<16x16xf32>, vector<128x16xf32> -> vector<128x16xf32>
    %73 = vector.shape_cast %72 : vector<128x16xf32> to vector<8x16x16xf32>
    %74 = tpu.transpose %73, [0, 2, 1] : vector<8x16x16xf32> -> vector<8x16x16xf32>
    %75 = vector.shape_cast %74 : vector<8x16x16xf32> to vector<128x16xf32>
    %cst_29 = arith.constant dense<0.000000e+00> : vector<128x16xf32>
    %76 = tpu.matmul %75, %5, %cst_29 {dimension_numbers = #tpu.dot_dimension_numbers<[1], [0], [0], [1], [0, 0, 1, 1], [], []>} : vector<128x16xf32>, vector<16x16xf32>, vector<128x16xf32> -> vector<128x16xf32>
    %77 = vector.shape_cast %76 : vector<128x16xf32> to vector<8x16x16xf32>
    %78 = arith.mulf %46, %46 : vector<8x16x16xf32>
    %79 = arith.mulf %53, %53 : vector<8x16x16xf32>
    %80 = arith.mulf %46, %53 : vector<8x16x16xf32>
    %81 = arith.subf %61, %78 : vector<8x16x16xf32>
    %82 = arith.subf %69, %79 : vector<8x16x16xf32>
    %83 = arith.subf %77, %80 : vector<8x16x16xf32>
    %cst_30 = arith.constant 2.000000e+00 : f32
    %84 = vector.broadcast %cst_30 : f32 to vector<8x16x16xf32>
    %85 = arith.mulf %84, %80 : vector<8x16x16xf32>
    %cst_31 = arith.constant 9.99999974E-5 : f32
    %86 = vector.broadcast %cst_31 : f32 to vector<8x16x16xf32>
    %87 = arith.addf %85, %86 : vector<8x16x16xf32>
    %cst_32 = arith.constant 2.000000e+00 : f32
    %88 = vector.broadcast %cst_32 : f32 to vector<8x16x16xf32>
    %89 = arith.mulf %88, %83 : vector<8x16x16xf32>
    %cst_33 = arith.constant 8.99999984E-4 : f32
    %90 = vector.broadcast %cst_33 : f32 to vector<8x16x16xf32>
    %91 = arith.addf %89, %90 : vector<8x16x16xf32>
    %92 = arith.mulf %87, %91 : vector<8x16x16xf32>
    %93 = arith.addf %78, %79 : vector<8x16x16xf32>
    %cst_34 = arith.constant 9.99999974E-5 : f32
    %94 = vector.broadcast %cst_34 : f32 to vector<8x16x16xf32>
    %95 = arith.addf %93, %94 : vector<8x16x16xf32>
    %96 = arith.addf %81, %82 : vector<8x16x16xf32>
    %cst_35 = arith.constant 8.99999984E-4 : f32
    %97 = vector.broadcast %cst_35 : f32 to vector<8x16x16xf32>
    %98 = arith.addf %96, %97 : vector<8x16x16xf32>
    %99 = arith.mulf %95, %98 : vector<8x16x16xf32>
    %c0_36 = arith.constant 0 : index
    %c0_37 = arith.constant 0 : index
    %100 = vector.load %arg7[%c0_36, %c0_37] : memref<8x16xf32, #tpu.memory_space<vmem>>, vector<8x16xf32>
    %101 = arith.divf %92, %99 : vector<8x16x16xf32>
    %cst_38 = arith.constant dense<0.000000e+00> : vector<16x16xf32>
    %102 = vector.multi_reduction <add>, %101, %cst_38 [0] : vector<8x16x16xf32> to vector<16x16xf32>
    %103 = vector.shape_cast %102 : vector<16x16xf32> to vector<2x8x16xf32>
    %cst_39 = arith.constant dense<0.000000e+00> : vector<8x16xf32>
    %104 = vector.multi_reduction <add>, %103, %cst_39 [0] : vector<2x8x16xf32> to vector<8x16xf32>
    %105 = arith.addf %100, %104 : vector<8x16xf32>
    %c0_40 = arith.constant 0 : index
    %c0_41 = arith.constant 0 : index
    %106 = vector.load %arg7[%c0_40, %c0_41] : memref<8x16xf32, #tpu.memory_space<vmem>>, vector<8x16xf32>
    tpu.vector_store %arg7[%c0_40, %c0_41], %105 {strides = array<i32>} : memref<8x16xf32, #tpu.memory_space<vmem>>, vector<8x16xf32>,
    %c0_i32_42 = arith.constant 0 : i32
    %107 = arith.cmpi eq, %arg1, %c0_i32_42 : i32
    %108 = arith.extui %107 : i1 to i32
    %c0_i32_43 = arith.constant 0 : i32
    %109 = arith.cmpi ne, %108, %c0_i32_43 : i32
    scf.if %109 {
      %c0_44 = arith.constant 0 : index
      %c0_45 = arith.constant 0 : index
      %110 = vector.load %arg6[%c0_44, %c0_45] : memref<8x16xf32, #tpu.memory_space<vmem>>, vector<8x16xf32>
      %111 = vector.shape_cast %110 : vector<8x16xf32> to vector<1x8x16xf32>
      %cst_46 = arith.constant dense<0.000000e+00> : vector<1xf32>
      %112 = vector.multi_reduction <add>, %111, %cst_46 [1, 2] : vector<1x8x16xf32> to vector<1xf32>
      %113 = vector.shape_cast %112 : vector<1xf32> to vector<1x1x1xf32>
      %114 = vector.extract %113[0, 0, 0] : f32 from vector<1x1x1xf32>
      %c0_47 = arith.constant 0 : index
      %c0_48 = arith.constant 0 : index
      %115 = vector.load %arg7[%c0_47, %c0_48] : memref<8x16xf32, #tpu.memory_space<vmem>>, vector<8x16xf32>
      %116 = vector.shape_cast %115 : vector<8x16xf32> to vector<1x8x16xf32>
      %cst_49 = arith.constant dense<0.000000e+00> : vector<1xf32>
      %117 = vector.multi_reduction <add>, %116, %cst_49 [1, 2] : vector<1x8x16xf32> to vector<1xf32>
      %118 = vector.shape_cast %117 : vector<1xf32> to vector<1x1x1xf32>
      %119 = vector.extract %118[0, 0, 0] : f32 from vector<1x1x1xf32>
      %120 = tpu.iota {dimensions = array<i32: 1>} : vector<8x128xi32>
      %c0_i32_50 = arith.constant 0 : i32
      %121 = vector.broadcast %c0_i32_50 : i32 to vector<8x128xi32>
      %122 = arith.cmpi eq, %120, %121 : vector<8x128xi32>
      %cst_51 = arith.constant 0.000000e+00 : f32
      %123 = vector.broadcast %114 : f32 to vector<8x128xf32>
      %124 = vector.broadcast %cst_51 : f32 to vector<8x128xf32>
      %125 = arith.select %122, %123, %124 : vector<8x128xi1>, vector<8x128xf32>
      %c1_i32 = arith.constant 1 : i32
      %126 = vector.broadcast %c1_i32 : i32 to vector<8x128xi32>
      %127 = arith.cmpi eq, %120, %126 : vector<8x128xi32>
      %cst_52 = arith.constant 0.000000e+00 : f32
      %128 = vector.broadcast %119 : f32 to vector<8x128xf32>
      %129 = vector.broadcast %cst_52 : f32 to vector<8x128xf32>
      %130 = arith.select %127, %128, %129 : vector<8x128xi1>, vector<8x128xf32>
      %131 = arith.addf %125, %130 : vector<8x128xf32>
      %c0_53 = arith.constant 0 : index
      %c0_54 = arith.constant 0 : index
      %c0_55 = arith.constant 0 : index
      %132 = vector.load %arg5[%c0_53, %c0_54, %c0_55] : memref<1x8x128xf32, #tpu.memory_space<vmem>>, vector<1x8x128xf32>
      %133 = vector.shape_cast %132 : vector<1x8x128xf32> to vector<8x128xf32>
      %134 = vector.shape_cast %131 : vector<8x128xf32> to vector<1x8x128xf32>
      tpu.vector_store %arg5[%c0_53, %c0_54, %c0_55], %134 {strides = array<i32>} : memref<1x8x128xf32, #tpu.memory_space<vmem>>, vector<1x8x128xf32>,
    } else {
    }
    return
  }
  func.func @transform_0(%arg0: i32, %arg1: i32) -> (i32, i32, i32) {
    %c1_i32 = arith.constant 1 : i32
    %0 = arith.muli %arg0, %c1_i32 : i32
    %1 = arith.addi %0, %arg1 : i32
    %c0_i32 = arith.constant 0 : i32
    %c0_i32_0 = arith.constant 0 : i32
    %c0_i32_1 = arith.constant 0 : i32
    return %1, %c0_i32, %c0_i32_0 : i32, i32, i32
  }
  func.func @transform_1(%arg0: i32, %arg1: i32) -> (i32, i32, i32) {
    %c1_i32 = arith.constant 1 : i32
    %0 = arith.muli %arg0, %c1_i32 : i32
    %1 = arith.addi %0, %arg1 : i32
    %c0_i32 = arith.constant 0 : i32
    %c0_i32_0 = arith.constant 0 : i32
    %c0_i32_1 = arith.constant 0 : i32
    return %1, %c0_i32, %c0_i32_0 : i32, i32, i32
  }
  func.func @transform_2(%arg0: i32, %arg1: i32) -> (i32, i32) {
    %c0_i32 = arith.constant 0 : i32
    %c0_i32_0 = arith.constant 0 : i32
    %c0_i32_1 = arith.constant 0 : i32
    return %c0_i32, %c0_i32_0 : i32, i32
  }
  func.func @transform_3(%arg0: i32, %arg1: i32) -> (i32, i32, i32) {
    %c0_i32 = arith.constant 0 : i32
    %c0_i32_0 = arith.constant 0 : i32
    %c0_i32_1 = arith.constant 0 : i32
    return %arg0, %c0_i32, %c0_i32_0 : i32, i32, i32
  }
}

</mosaic_0001>

<llo_original>
// kernel: tpu_custom_call.1
$region0: #{tpu_custom_call.1}
  #allocation0 [shape = 'u32[]', space=smem, size = 0x4, offset = 0x4, fixed_abs, tag = 'smem constant byte address 0x4 - core index']
  #allocation1 [shape = 'u32[144,128]{1,0:T(1,128)}', space=vmem, size = 0x12000, scoped, tag = 'internal scratch']
  #allocation2 [shape = 'f32[8,16]{1,0:T(8,128)}', space=vmem, size = 0x1000, scoped, tag = 'scratch operand']
  #allocation3 [shape = 'f32[8,16]{1,0:T(8,128)}', space=vmem, size = 0x1000, scoped, tag = 'scratch operand']
  %s0 = inlined_call_operand.hbm [shape: f32[8,16,16], index: 0, kind: input, shape index: {}]
  %s1 = inlined_call_operand.hbm [shape: f32[8,16,16], index: 1, kind: input, shape index: {}]
  %s2 = inlined_call_operand.hbm [shape: f32[16,16], index: 2, kind: input, shape index: {}]
  %s3 = inlined_call_operand.hbm [shape: f32[1,8,128], index: 3, kind: output, shape index: {}]
  %s4 = sld [smem:[#allocation0]]
  $region42: #{tpu_custom_call.1} parent=0
    _
  %s6 = ssub.s32 1, %s4
  %s7 = scalar_select 0, %s6, %s4
  $region1: #{tpu_custom_call.1} parent=0
    #allocation4 [shape = 'u8[65536]{0}', space=vmem, size = 0x10000, scoped, tag = 'input window, operand 0, single buffered']
    #allocation5 [shape = 's32[1]{0}', space=sflag, size = 0x4, scoped, tag = 'scoped memory for tpu_custom_call.1']
    #allocation6 [shape = 's32[1]{0}', space=sflag, size = 0x4, scoped, tag = 'scoped memory for tpu_custom_call.1']
    #allocation7 [shape = 'u8[65536]{0}', space=vmem, size = 0x10000, scoped, tag = 'input window, operand 1, single buffered']
    #allocation8 [shape = 's32[1]{0}', space=sflag, size = 0x4, scoped, tag = 'scoped memory for tpu_custom_call.1']
    #allocation9 [shape = 'u8[8192]{0}', space=vmem, size = 0x2000, scoped, tag = 'input window, operand 2, single buffered']
    #allocation10 [shape = 'u8[4096]{0}', space=vmem, size = 0x1000, scoped, tag = 'output window, operand 0, single buffered']
    %8 = vsyncpa [#allocation5], 0
    %9 = vsyncpa [#allocation8], 0
    %10 = vsyncpa [#allocation6], 0
    // Predicated region
    $region2: #{tpu_custom_call.1} parent=1 // pred_check
      _
    $region3: #{tpu_custom_call.1} parent=1 // pred_check_branch
      %12 = sbr.rel (0) target = $region5
    $region4: #{tpu_custom_call.1} parent=1 // pred_region
      %s13 = sadd.s32 0, 0
      %s14 = smul.u32 8, %s13
      %s16 = ssub.s32 2048, 2048
      %17 = vsyncadd [#allocation5], %s16
      %s18 = smul.addr %s14, 2
      %s19 = smul.addr %s18, 128
      %s20 = scalar_lea.hbm %s0, %s19
      %s21 = sshll.u32 [#allocation4], 4
      %s22 = int_to_ptr.vmem [resolvable:$true] %s21
      %27 = dma.hbm_to_vmem [thread:$0]  %s20, 2048, %s22, [#allocation5], 128, 128, 8
    $region5: #{tpu_custom_call.1} parent=1 // pred_fallthru
      _
    // Predicated region
    $region6: #{tpu_custom_call.1} parent=1 // pred_check
      _
    $region7: #{tpu_custom_call.1} parent=1 // pred_check_branch
      %29 = sbr.rel (0) target = $region9
    $region8: #{tpu_custom_call.1} parent=1 // pred_region
      %s30 = sadd.s32 0, 0
      %s31 = smul.u32 8, %s30
      %s33 = ssub.s32 2048, 2048
      %34 = vsyncadd [#allocation8], %s33
      %s35 = smul.addr %s31, 2
      %s36 = smul.addr %s35, 128
      %s37 = scalar_lea.hbm %s1, %s36
      %s38 = sshll.u32 [#allocation7], 4
      %s39 = int_to_ptr.vmem [resolvable:$true] %s38
      %44 = dma.hbm_to_vmem [thread:$0]  %s37, 2048, %s39, [#allocation8], 128, 128, 8
    $region9: #{tpu_custom_call.1} parent=1 // pred_fallthru
      _
    // Predicated region
    $region10: #{tpu_custom_call.1} parent=1 // pred_check
      _
    $region11: #{tpu_custom_call.1} parent=1 // pred_check_branch
      %46 = sbr.rel (0) target = $region13
    $region12: #{tpu_custom_call.1} parent=1 // pred_region
      %s48 = ssub.s32 256, 256
      %49 = vsyncadd [#allocation8], %s48
      %s50 = sshll.u32 [#allocation9], 4
      %s51 = int_to_ptr.vmem [resolvable:$true] %s50
      %56 = dma.hbm_to_vmem [thread:$0]  %s2, 256, %s51, [#allocation8], 128, 128, 8
    $region13: #{tpu_custom_call.1} parent=1 // pred_fallthru
      _
    // Predicated region
    $region14: #{tpu_custom_call.1} parent=1 // pred_check
      _
    $region15: #{tpu_custom_call.1} parent=1 // pred_check_branch
      %58 = sbr.rel (0) target = $region17
    $region16: #{tpu_custom_call.1} parent=1 // pred_region
      %59 = dma.done [#allocation5], 2048
    $region17: #{tpu_custom_call.1} parent=1 // pred_fallthru
      _
    // Predicated region
    $region18: #{tpu_custom_call.1} parent=1 // pred_check
      _
    $region19: #{tpu_custom_call.1} parent=1 // pred_check_branch
      %61 = sbr.rel (0) target = $region21
    $region20: #{tpu_custom_call.1} parent=1 // pred_region
      %62 = dma.done [#allocation8], 2048
    $region21: #{tpu_custom_call.1} parent=1 // pred_fallthru
      _
    // Predicated region
    $region22: #{tpu_custom_call.1} parent=1 // pred_check
      _
    $region23: #{tpu_custom_call.1} parent=1 // pred_check_branch
      %64 = sbr.rel (0) target = $region25
    $region24: #{tpu_custom_call.1} parent=1 // pred_region
      %65 = dma.done [#allocation8], 256
    $region25: #{tpu_custom_call.1} parent=1 // pred_fallthru
      _
    %s66 = sadd.s32 0, 0
    %s67 = smul.u32 8, %s66
    %s68 = sadd.s32 0, 0
    %s69 = smul.u32 8, %s68
    %p70 = scmp.eq.s32.totalorder 0, 0
    // Predicated region
    $region26: #{tpu_custom_call.1} parent=1 // pred_check
      %p71 = pneg %p70
    $region27: #{tpu_custom_call.1} parent=1 // pred_check_branch
      %73 = sbr.rel (%p71) target = $region29
    $region28: #{tpu_custom_call.1} parent=1 // pred_region
      %vm74 = vcmask 130048
      %75 = vst.msk [vmem:[#allocation2] sm:$0xff] %vm74, 0.0
      %76 = vst.msk [vmem:[#allocation3] sm:$0xff] %vm74, 0.0
    $region29: #{tpu_custom_call.1} parent=1 // pred_fallthru
      _
    %v77 = vld [vmem:[#allocation4] sm:$0xff]
    %v78 = vld [vmem:[#allocation4 + $0x8] sm:$0xff]
    %v79 = vld [vmem:[#allocation4 + $0x10] sm:$0xff]
    %v80 = vld [vmem:[#allocation4 + $0x18] sm:$0xff]
    %v81 = vld [vmem:[#allocation4 + $0x20] sm:$0xff]
    %v82 = vld [vmem:[#allocation4 + $0x28] sm:$0xff]
    %v83 = vld [vmem:[#allocation4 + $0x30] sm:$0xff]
    %v84 = vld [vmem:[#allocation4 + $0x38] sm:$0xff]
    %v85 = vld [vmem:[#allocation4 + $0x40] sm:$0xff]
    %v86 = vld [vmem:[#allocation4 + $0x48] sm:$0xff]
    %v87 = vld [vmem:[#allocation4 + $0x50] sm:$0xff]
    %v88 = vld [vmem:[#allocation4 + $0x58] sm:$0xff]
    %v89 = vld [vmem:[#allocation4 + $0x60] sm:$0xff]
    %v90 = vld [vmem:[#allocation4 + $0x68] sm:$0xff]
    %v91 = vld [vmem:[#allocation4 + $0x70] sm:$0xff]
    %v92 = vld [vmem:[#allocation4 + $0x78] sm:$0xff]
    %v93 = vld [vmem:[#allocation7] sm:$0xff]
    %v94 = vld [vmem:[#allocation7 + $0x8] sm:$0xff]
    %v95 = vld [vmem:[#allocation7 + $0x10] sm:$0xff]
    %v96 = vld [vmem:[#allocation7 + $0x18] sm:$0xff]
    %v97 = vld [vmem:[#allocation7 + $0x20] sm:$0xff]
    %v98 = vld [vmem:[#allocation7 + $0x28] sm:$0xff]
    %v99 = vld [vmem:[#allocation7 + $0x30] sm:$0xff]
    %v100 = vld [vmem:[#allocation7 + $0x38] sm:$0xff]
    %v101 = vld [vmem:[#allocation7 + $0x40] sm:$0xff]
    %v102 = vld [vmem:[#allocation7 + $0x48] sm:$0xff]
    %v103 = vld [vmem:[#allocation7 + $0x50] sm:$0xff]
    %v104 = vld [vmem:[#allocation7 + $0x58] sm:$0xff]
    %v105 = vld [vmem:[#allocation7 + $0x60] sm:$0xff]
    %v106 = vld [vmem:[#allocation7 + $0x68] sm:$0xff]
    %v107 = vld [vmem:[#allocation7 + $0x70] sm:$0xff]
    %v108 = vld [vmem:[#allocation7 + $0x78] sm:$0xff]
    %v109 = vld [vmem:[#allocation9] sm:$0xff]
    %v110 = vld [vmem:[#allocation9 + $0x8] sm:$0xff]
    %v111 = vsub.f32 %v77, %v93
    %v112 = vsub.f32 %v78, %v94
    %v113 = vsub.f32 %v79, %v95
    %v114 = vsub.f32 %v80, %v96
    %v115 = vsub.f32 %v81, %v97
    %v116 = vsub.f32 %v82, %v98
    %v117 = vsub.f32 %v83, %v99
    %v118 = vsub.f32 %v84, %v100
    %v119 = vsub.f32 %v85, %v101
    %v120 = vsub.f32 %v86, %v102
    %v121 = vsub.f32 %v87, %v103
    %v122 = vsub.f32 %v88, %v104
    %v123 = vsub.f32 %v89, %v105
    %v124 = vsub.f32 %v90, %v106
    %v125 = vsub.f32 %v91, %v107
    %v126 = vsub.f32 %v92, %v108
    %v127 = vand.u32 2147483647, %v111
    %v128 = vand.u32 2147483647, %v112
    %v129 = vand.u32 2147483647, %v113
    %v130 = vand.u32 2147483647, %v114
    %v131 = vand.u32 2147483647, %v115
    %v132 = vand.u32 2147483647, %v116
    %v133 = vand.u32 2147483647, %v117
    %v134 = vand.u32 2147483647, %v118
    %v135 = vand.u32 2147483647, %v119
    %v136 = vand.u32 2147483647, %v120
    %v137 = vand.u32 2147483647, %v121
    %v138 = vand.u32 2147483647, %v122
    %v139 = vand.u32 2147483647, %v123
    %v140 = vand.u32 2147483647, %v124
    %v141 = vand.u32 2147483647, %v125
    %v142 = vand.u32 2147483647, %v126
    %v143 = vmul.f32 %v127, 0.00048828125
    %v144 = vmul.f32 %v128, 0.00048828125
    %v145 = vmul.f32 %v129, 0.00048828125
    %v146 = vmul.f32 %v130, 0.00048828125
    %v147 = vmul.f32 %v131, 0.00048828125
    %v148 = vmul.f32 %v132, 0.00048828125
    %v149 = vmul.f32 %v133, 0.00048828125
    %v150 = vmul.f32 %v134, 0.00048828125
    %v151 = vmul.f32 %v135, 0.00048828125
    %v152 = vmul.f32 %v136, 0.00048828125
    %v153 = vmul.f32 %v137, 0.00048828125
    %v154 = vmul.f32 %v138, 0.00048828125
    %v155 = vmul.f32 %v139, 0.00048828125
    %v156 = vmul.f32 %v140, 0.00048828125
    %v157 = vmul.f32 %v141, 0.00048828125
    %v158 = vmul.f32 %v142, 0.00048828125
    %175 = vrot.lane.b32.xlu0 %v77, 1
    %v176 = vpop.permute.xlu0 %175
    %177 = vrot.lane.b32.xlu0 %v78, 1
    %v178 = vpop.permute.xlu0 %177
    %179 = vrot.lane.b32.xlu0 %v79, 1
    %v180 = vpop.permute.xlu0 %179
    %181 = vrot.lane.b32.xlu0 %v80, 1
    %v182 = vpop.permute.xlu0 %181
    %183 = vrot.lane.b32.xlu0 %v81, 1
    %v184 = vpop.permute.xlu0 %183
    %185 = vrot.lane.b32.xlu0 %v82, 1
    %v186 = vpop.permute.xlu0 %185
    %187 = vrot.lane.b32.xlu0 %v83, 1
    %v188 = vpop.permute.xlu0 %187
    %189 = vrot.lane.b32.xlu0 %v84, 1
    %v190 = vpop.permute.xlu0 %189
    %191 = vrot.lane.b32.xlu0 %v85, 1
    %v192 = vpop.permute.xlu0 %191
    %193 = vrot.lane.b32.xlu0 %v86, 1
    %v194 = vpop.permute.xlu0 %193
    %195 = vrot.lane.b32.xlu0 %v87, 1
    %v196 = vpop.permute.xlu0 %195
    %197 = vrot.lane.b32.xlu0 %v88, 1
    %v198 = vpop.permute.xlu0 %197
    %199 = vrot.lane.b32.xlu0 %v89, 1
    %v200 = vpop.permute.xlu0 %199
    %201 = vrot.lane.b32.xlu0 %v90, 1
    %v202 = vpop.permute.xlu0 %201
    %203 = vrot.lane.b32.xlu0 %v91, 1
    %v204 = vpop.permute.xlu0 %203
    %205 = vrot.lane.b32.xlu0 %v92, 1
    %v206 = vpop.permute.xlu0 %205
    %vm223 = vcmask 7168
    %v224 = vsel %vm223, %v77, %v176
    %v225 = vsel %vm223, %v78, %v178
    %v226 = vsel %vm223, %v79, %v180
    %v227 = vsel %vm223, %v80, %v182
    %v228 = vsel %vm223, %v81, %v184
    %v229 = vsel %vm223, %v82, %v186
    %v230 = vsel %vm223, %v83, %v188
    %v231 = vsel %vm223, %v84, %v190
    %v232 = vsel %vm223, %v85, %v192
    %v233 = vsel %vm223, %v86, %v194
    %v234 = vsel %vm223, %v87, %v196
    %v235 = vsel %vm223, %v88, %v198
    %v236 = vsel %vm223, %v89, %v200
    %v237 = vsel %vm223, %v90, %v202
    %v238 = vsel %vm223, %v91, %v204
    %v239 = vsel %vm223, %v92, %v206
    %v240 = vsub.f32 %v77, %v224
    %v241 = vsub.f32 %v78, %v225
    %v242 = vsub.f32 %v79, %v226
    %v243 = vsub.f32 %v80, %v227
    %v244 = vsub.f32 %v81, %v228
    %v245 = vsub.f32 %v82, %v229
    %v246 = vsub.f32 %v83, %v230
    %v247 = vsub.f32 %v84, %v231
    %v248 = vsub.f32 %v85, %v232
    %v249 = vsub.f32 %v86, %v233
    %v250 = vsub.f32 %v87, %v234
    %v251 = vsub.f32 %v88, %v235
    %v252 = vsub.f32 %v89, %v236
    %v253 = vsub.f32 %v90, %v237
    %v254 = vsub.f32 %v91, %v238
    %v255 = vsub.f32 %v92, %v239
    %v256 = vand.u32 2147483647, %v240
    %v257 = vand.u32 2147483647, %v241
    %v258 = vand.u32 2147483647, %v242
    %v259 = vand.u32 2147483647, %v243
    %v260 = vand.u32 2147483647, %v244
    %v261 = vand.u32 2147483647, %v245
    %v262 = vand.u32 2147483647, %v246
    %v263 = vand.u32 2147483647, %v247
    %v264 = vand.u32 2147483647, %v248
    %v265 = vand.u32 2147483647, %v249
    %v266 = vand.u32 2147483647, %v250
    %v267 = vand.u32 2147483647, %v251
    %v268 = vand.u32 2147483647, %v252
    %v269 = vand.u32 2147483647, %v253
    %v270 = vand.u32 2147483647, %v254
    %v271 = vand.u32 2147483647, %v255
    %v272 = vmul.f32 %v256, 0.00052083336
    %v273 = vmul.f32 %v257, 0.00052083336
    %v274 = vmul.f32 %v258, 0.00052083336
    %v275 = vmul.f32 %v259, 0.00052083336
    %v276 = vmul.f32 %v260, 0.00052083336
    %v277 = vmul.f32 %v261, 0.00052083336
    %v278 = vmul.f32 %v262, 0.00052083336
    %v279 = vmul.f32 %v263, 0.00052083336
    %v280 = vmul.f32 %v264, 0.00052083336
    %v281 = vmul.f32 %v265, 0.00052083336
    %v282 = vmul.f32 %v266, 0.00052083336
    %v283 = vmul.f32 %v267, 0.00052083336
    %v284 = vmul.f32 %v268, 0.00052083336
    %v285 = vmul.f32 %v269, 0.00052083336
    %v286 = vmul.f32 %v270, 0.00052083336
    %v287 = vmul.f32 %v271, 0.00052083336
    %v288 = vadd.f32 %v143, %v272
    %v289 = vadd.f32 %v144, %v273
    %v290 = vadd.f32 %v145, %v274
    %v291 = vadd.f32 %v146, %v275
    %v292 = vadd.f32 %v147, %v276
    %v293 = vadd.f32 %v148, %v277
    %v294 = vadd.f32 %v149, %v278
    %v295 = vadd.f32 %v150, %v279
    %v296 = vadd.f32 %v151, %v280
    %v297 = vadd.f32 %v152, %v281
    %v298 = vadd.f32 %v153, %v282
    %v299 = vadd.f32 %v154, %v283
    %v300 = vadd.f32 %v155, %v284
    %v301 = vadd.f32 %v156, %v285
    %v302 = vadd.f32 %v157, %v286
    %v303 = vadd.f32 %v158, %v287
    %vm304 = vcmask 1040384
    %v305 = vrot.slane %v77, 7
    %v306 = vrot.slane %v78, 7
    %v307 = vsel %vm304, %v305, %v306
    %v308 = vrot.slane %v79, 7
    %v309 = vrot.slane %v80, 7
    %v310 = vsel %vm304, %v308, %v309
    %v311 = vrot.slane %v81, 7
    %v312 = vrot.slane %v82, 7
    %v313 = vsel %vm304, %v311, %v312
    %v314 = vrot.slane %v83, 7
    %v315 = vrot.slane %v84, 7
    %v316 = vsel %vm304, %v314, %v315
    %v317 = vrot.slane %v85, 7
    %v318 = vrot.slane %v86, 7
    %v319 = vsel %vm304, %v317, %v318
    %v320 = vrot.slane %v87, 7
    %v321 = vrot.slane %v88, 7
    %v322 = vsel %vm304, %v320, %v321
    %v323 = vrot.slane %v89, 7
    %v324 = vrot.slane %v90, 7
    %v325 = vsel %vm304, %v323, %v324
    %v326 = vrot.slane %v91, 7
    %v327 = vrot.slane %v92, 7
    %v328 = vsel %vm304, %v326, %v327
    %v345 = vsel %vm304, %v77, %v305
    %v346 = vsel %vm304, %v79, %v308
    %v347 = vsel %vm304, %v81, %v311
    %v348 = vsel %vm304, %v83, %v314
    %v349 = vsel %vm304, %v85, %v317
    %v350 = vsel %vm304, %v87, %v320
    %v351 = vsel %vm304, %v89, %v323
    %v352 = vsel %vm304, %v91, %v326
    %v353 = vsub.f32 %v77, %v345
    %v354 = vsub.f32 %v78, %v307
    %v355 = vsub.f32 %v79, %v346
    %v356 = vsub.f32 %v80, %v310
    %v357 = vsub.f32 %v81, %v347
    %v358 = vsub.f32 %v82, %v313
    %v359 = vsub.f32 %v83, %v348
    %v360 = vsub.f32 %v84, %v316
    %v361 = vsub.f32 %v85, %v349
    %v362 = vsub.f32 %v86, %v319
    %v363 = vsub.f32 %v87, %v350
    %v364 = vsub.f32 %v88, %v322
    %v365 = vsub.f32 %v89, %v351
    %v366 = vsub.f32 %v90, %v325
    %v367 = vsub.f32 %v91, %v352
    %v368 = vsub.f32 %v92, %v328
    %v369 = vand.u32 2147483647, %v353
    %v370 = vand.u32 2147483647, %v354
    %v371 = vand.u32 2147483647, %v355
    %v372 = vand.u32 2147483647, %v356
    %v373 = vand.u32 2147483647, %v357
    %v374 = vand.u32 2147483647, %v358
    %v375 = vand.u32 2147483647, %v359
    %v376 = vand.u32 2147483647, %v360
    %v377 = vand.u32 2147483647, %v361
    %v378 = vand.u32 2147483647, %v362
    %v379 = vand.u32 2147483647, %v363
    %v380 = vand.u32 2147483647, %v364
    %v381 = vand.u32 2147483647, %v365
    %v382 = vand.u32 2147483647, %v366
    %v383 = vand.u32 2147483647, %v367
    %v384 = vand.u32 2147483647, %v368
    %v385 = vmul.f32 %v369, 0.00052083336
    %v386 = vmul.f32 %v370, 0.00052083336
    %v387 = vmul.f32 %v371, 0.00052083336
    %v388 = vmul.f32 %v372, 0.00052083336
    %v389 = vmul.f32 %v373, 0.00052083336
    %v390 = vmul.f32 %v374, 0.00052083336
    %v391 = vmul.f32 %v375, 0.00052083336
    %v392 = vmul.f32 %v376, 0.00052083336
    %v393 = vmul.f32 %v377, 0.00052083336
    %v394 = vmul.f32 %v378, 0.00052083336
    %v395 = vmul.f32 %v379, 0.00052083336
    %v396 = vmul.f32 %v380, 0.00052083336
    %v397 = vmul.f32 %v381, 0.00052083336
    %v398 = vmul.f32 %v382, 0.00052083336
    %v399 = vmul.f32 %v383, 0.00052083336
    %v400 = vmul.f32 %v384, 0.00052083336
    %v401 = vadd.f32 %v288, %v385
    %v402 = vadd.f32 %v289, %v386
    %v403 = vadd.f32 %v290, %v387
    %v404 = vadd.f32 %v291, %v388
    %v405 = vadd.f32 %v292, %v389
    %v406 = vadd.f32 %v293, %v390
    %v407 = vadd.f32 %v294, %v391
    %v408 = vadd.f32 %v295, %v392
    %v409 = vadd.f32 %v296, %v393
    %v410 = vadd.f32 %v297, %v394
    %v411 = vadd.f32 %v298, %v395
    %v412 = vadd.f32 %v299, %v396
    %v413 = vadd.f32 %v300, %v397
    %v414 = vadd.f32 %v301, %v398
    %v415 = vadd.f32 %v302, %v399
    %v416 = vadd.f32 %v303, %v400
    %v417 = vld [vmem:[#allocation2] sm:$0xff]
    %vm418 = vcmask 130048
    %v419 = vsel %vm418, %v401, 0.0
    %v420 = vsel %vm418, %v403, 0.0
    %v421 = vadd.f32 %v419, %v420
    %v422 = vsel %vm418, %v405, 0.0
    %v423 = vadd.f32 %v421, %v422
    %v424 = vsel %vm418, %v407, 0.0
    %v425 = vadd.f32 %v423, %v424
    %v426 = vsel %vm418, %v409, 0.0
    %v427 = vadd.f32 %v425, %v426
    %v428 = vsel %vm418, %v411, 0.0
    %v429 = vadd.f32 %v427, %v428
    %v430 = vsel %vm418, %v413, 0.0
    %v431 = vadd.f32 %v429, %v430
    %v432 = vsel %vm418, %v415, 0.0
    %v433 = vadd.f32 %v431, %v432
    %v434 = vsel %vm418, %v402, 0.0
    %v435 = vsel %vm418, %v404, 0.0
    %v436 = vadd.f32 %v434, %v435
    %v437 = vsel %vm418, %v406, 0.0
    %v438 = vadd.f32 %v436, %v437
    %v439 = vsel %vm418, %v408, 0.0
    %v440 = vadd.f32 %v438, %v439
    %v441 = vsel %vm418, %v410, 0.0
    %v442 = vadd.f32 %v440, %v441
    %v443 = vsel %vm418, %v412, 0.0
    %v444 = vadd.f32 %v442, %v443
    %v445 = vsel %vm418, %v414, 0.0
    %v446 = vadd.f32 %v444, %v445
    %v447 = vsel %vm418, %v416, 0.0
    %v448 = vadd.f32 %v446, %v447
    %v449 = vsel %vm418, %v433, 0.0
    %v450 = vsel %vm418, %v448, 0.0
    %v451 = vadd.f32 %v449, %v450
    %v452 = vadd.f32 %v417, %v451
    %453 = vst.msk [vmem:[#allocation2] sm:$0xff] %vm418, %v452
    %v454 = vmax.f32 %v77, 0.0
    %v455 = vmax.f32 %v78, 0.0
    %v456 = vmax.f32 %v79, 0.0
    %v457 = vmax.f32 %v80, 0.0
    %v458 = vmax.f32 %v81, 0.0
    %v459 = vmax.f32 %v82, 0.0
    %v460 = vmax.f32 %v83, 0.0
    %v461 = vmax.f32 %v84, 0.0
    %v462 = vmax.f32 %v85, 0.0
    %v463 = vmax.f32 %v86, 0.0
    %v464 = vmax.f32 %v87, 0.0
    %v465 = vmax.f32 %v88, 0.0
    %v466 = vmax.f32 %v89, 0.0
    %v467 = vmax.f32 %v90, 0.0
    %v468 = vmax.f32 %v91, 0.0
    %v469 = vmax.f32 %v92, 0.0
    %v470 = vmin.f32 %v454, 1.0
    %v471 = vmin.f32 %v455, 1.0
    %v472 = vmin.f32 %v456, 1.0
    %v473 = vmin.f32 %v457, 1.0
    %v474 = vmin.f32 %v458, 1.0
    %v475 = vmin.f32 %v459, 1.0
    %v476 = vmin.f32 %v460, 1.0
    %v477 = vmin.f32 %v461, 1.0
    %v478 = vmin.f32 %v462, 1.0
    %v479 = vmin.f32 %v463, 1.0
    %v480 = vmin.f32 %v464, 1.0
    %v481 = vmin.f32 %v465, 1.0
    %v482 = vmin.f32 %v466, 1.0
    %v483 = vmin.f32 %v467, 1.0
    %v484 = vmin.f32 %v468, 1.0
    %v485 = vmin.f32 %v469, 1.0
    %v486 = vmax.f32 %v93, 0.0
    %v487 = vmax.f32 %v94, 0.0
    %v488 = vmax.f32 %v95, 0.0
    %v489 = vmax.f32 %v96, 0.0
    %v490 = vmax.f32 %v97, 0.0
    %v491 = vmax.f32 %v98, 0.0
    %v492 = vmax.f32 %v99, 0.0
    %v493 = vmax.f32 %v100, 0.0
    %v494 = vmax.f32 %v101, 0.0
    %v495 = vmax.f32 %v102, 0.0
    %v496 = vmax.f32 %v103, 0.0
    %v497 = vmax.f32 %v104, 0.0
    %v498 = vmax.f32 %v105, 0.0
    %v499 = vmax.f32 %v106, 0.0
    %v500 = vmax.f32 %v107, 0.0
    %v501 = vmax.f32 %v108, 0.0
    %v502 = vmin.f32 %v486, 1.0
    %v503 = vmin.f32 %v487, 1.0
    %v504 = vmin.f32 %v488, 1.0
    %v505 = vmin.f32 %v489, 1.0
    %v506 = vmin.f32 %v490, 1.0
    %v507 = vmin.f32 %v491, 1.0
    %v508 = vmin.f32 %v492, 1.0
    %v509 = vmin.f32 %v493, 1.0
    %v510 = vmin.f32 %v494, 1.0
    %v511 = vmin.f32 %v495, 1.0
    %v512 = vmin.f32 %v496, 1.0
    %v513 = vmin.f32 %v497, 1.0
    %v514 = vmin.f32 %v498, 1.0
    %v515 = vmin.f32 %v499, 1.0
    %v516 = vmin.f32 %v500, 1.0
    %v517 = vmin.f32 %v501, 1.0
    %v519 = vsel %vm418, %v470, 0
    %v522 = vsel %vm418, %v471, 0
    %v525 = vsel %vm418, %v472, 0
    %v528 = vsel %vm418, %v473, 0
    %v531 = vsel %vm418, %v474, 0
    %v534 = vsel %vm418, %v475, 0
    %v537 = vsel %vm418, %v476, 0
    %v540 = vsel %vm418, %v477, 0
    %v543 = vsel %vm418, %v478, 0
    %v546 = vsel %vm418, %v479, 0
    %v549 = vsel %vm418, %v480, 0
    %v552 = vsel %vm418, %v481, 0
    %v555 = vsel %vm418, %v482, 0
    %v558 = vsel %vm418, %v483, 0
    %v561 = vsel %vm418, %v484, 0
    %v564 = vsel %vm418, %v485, 0
    %566 = vmatprep.subr.mxu0 0.0
    %567 = vmatpush1.msra.mxu0 %v109
    %568 = vmatprep.subr.mxu0 0.0
    %569 = vmatpush1.msra.mxu0 %v110
    %570 = vmatprep.subr.mxu0 0.0
    %571 = vmatpush1.msra.mxu0 0.0
    %572 = vmatprep.subr.mxu0 0.0
    %573 = vmatpush1.msra.mxu0 0.0
    %574 = vmatprep.subr.mxu0 0.0
    %575 = vmatpush1.msra.mxu0 0.0
    %576 = vmatprep.subr.mxu0 0.0
    %577 = vmatpush1.msra.mxu0 0.0
    %578 = vmatprep.subr.mxu0 0.0
    %579 = vmatpush1.msra.mxu0 0.0
    %580 = vmatprep.subr.mxu0 0.0
    %581 = vmatpush1.msra.mxu0 0.0
    %582 = vmatprep.subr.mxu0 0.0
    %583 = vmatpush1.msra.mxu0 0.0
    %584 = vmatprep.subr.mxu0 0.0
    %585 = vmatpush1.msra.mxu0 0.0
    %586 = vmatprep.subr.mxu0 0.0
    %587 = vmatpush1.msra.mxu0 0.0
    %588 = vmatprep.subr.mxu0 0.0
    %589 = vmatpush1.msra.mxu0 0.0
    %590 = vmatprep.subr.mxu0 0.0
    %591 = vmatpush1.msra.mxu0 0.0
    %592 = vmatprep.subr.mxu0 0.0
    %593 = vmatpush1.msra.mxu0 0.0
    %594 = vmatprep.subr.mxu0 0.0
    %595 = vmatpush1.msra.mxu0 0.0
    %596 = vmatprep.subr.mxu0 0.0
    %597 = vmatpush1.msra.mxu0 0.0
    %598 = vmatprep.subr.mxu0 0.0
    %599 = vmatpush1.msra.mxu0 0.0
    %600 = vmatprep.subr.mxu0 0.0
    %601 = vmatpush1.msra.mxu0 0.0
    %602 = vmatprep.subr.mxu0 0.0
    %603 = vmatpush1.msra.mxu0 0.0
    %604 = vmatprep.subr.mxu0 0.0
    %605 = vmatpush1.msra.mxu0 0.0
    %606 = vmatprep.subr.mxu0 0.0
    %607 = vmatpush1.msra.mxu0 0.0
    %608 = vmatprep.subr.mxu0 0.0
    %609 = vmatpush1.msra.mxu0 0.0
    %610 = vmatprep.subr.mxu0 0.0
    %611 = vmatpush1.msra.mxu0 0.0
    %612 = vmatprep.subr.mxu0 0.0
    %613 = vmatpush1.msra.mxu0 0.0
    %614 = vmatprep.subr.mxu0 0.0
    %615 = vmatpush1.msra.mxu0 0.0
    %616 = vmatprep.subr.mxu0 0.0
    %617 = vmatpush1.msra.mxu0 0.0
    %618 = vmatprep.subr.mxu0 0.0
    %619 = vmatpush1.msra.mxu0 0.0
    %620 = vmatprep.subr.mxu0 0.0
    %621 = vmatpush1.msra.mxu0 0.0
    %622 = vmatprep.subr.mxu0 0.0
    %623 = vmatpush1.msra.mxu0 0.0
    %624 = vmatprep.subr.mxu0 0.0
    %625 = vmatpush1.msra.mxu0 0.0
    %626 = vmatprep.subr.mxu0 0.0
    %627 = vmatpush1.msra.mxu0 0.0
    %628 = vmatprep.subr.mxu0 0.0
    %629 = vmatpush1.msra.mxu0 0.0
    %630 = vmatprep.mubr.f32.mxu0 0.0
    %631 = vmatmul.mubr.f32.gmra.mrb[0].mxu0 %v519
    %v632 = vpop.f32.mrb[0].mxu0
    %v633 = vadd.f32 0.0, %v632
    %v634 = vpop.f32.mrb[0].mxu0
    %635 = vmatprep.mubr.f32.mxu0 0.0
    %636 = vmatmul.mubr.f32.gmra.mrb[0].mxu0 %v522
    %v637 = vpop.f32.mrb[0].mxu0
    %v638 = vadd.f32 0.0, %v637
    %v639 = vpop.f32.mrb[0].mxu0
    %640 = vmatprep.mubr.f32.mxu0 0.0
    %641 = vmatmul.mubr.f32.gmra.mrb[0].mxu0 %v525
    %v642 = vpop.f32.mrb[0].mxu0
    %v643 = vadd.f32 0.0, %v642
    %v644 = vpop.f32.mrb[0].mxu0
    %645 = vmatprep.mubr.f32.mxu0 0.0
    %646 = vmatmul.mubr.f32.gmra.mrb[0].mxu0 %v528
    %v647 = vpop.f32.mrb[0].mxu0
    %v648 = vadd.f32 0.0, %v647
    %v649 = vpop.f32.mrb[0].mxu0
    %650 = vmatprep.mubr.f32.mxu0 0.0
    %651 = vmatmul.mubr.f32.gmra.mrb[0].mxu0 %v531
    %v652 = vpop.f32.mrb[0].mxu0
    %v653 = vadd.f32 0.0, %v652
    %v654 = vpop.f32.mrb[0].mxu0
    %655 = vmatprep.mubr.f32.mxu0 0.0
    %656 = vmatmul.mubr.f32.gmra.mrb[0].mxu0 %v534
    %v657 = vpop.f32.mrb[0].mxu0
    %v658 = vadd.f32 0.0, %v657
    %v659 = vpop.f32.mrb[0].mxu0
    %660 = vmatprep.mubr.f32.mxu0 0.0
    %661 = vmatmul.mubr.f32.gmra.mrb[0].mxu0 %v537
    %v662 = vpop.f32.mrb[0].mxu0
    %v663 = vadd.f32 0.0, %v662
    %v664 = vpop.f32.mrb[0].mxu0
    %665 = vmatprep.mubr.f32.mxu0 0.0
    %666 = vmatmul.mubr.f32.gmra.mrb[0].mxu0 %v540
    %v667 = vpop.f32.mrb[0].mxu0
    %v668 = vadd.f32 0.0, %v667
    %v669 = vpop.f32.mrb[0].mxu0
    %670 = vmatprep.mubr.f32.mxu0 0.0
    %671 = vmatmul.mubr.f32.gmra.mrb[0].mxu0 %v543
    %v672 = vpop.f32.mrb[0].mxu0
    %v673 = vadd.f32 0.0, %v672
    %v674 = vpop.f32.mrb[0].mxu0
    %675 = vmatprep.mubr.f32.mxu0 0.0
    %676 = vmatmul.mubr.f32.gmra.mrb[0].mxu0 %v546
    %v677 = vpop.f32.mrb[0].mxu0
    %v678 = vadd.f32 0.0, %v677
    %v679 = vpop.f32.mrb[0].mxu0
    %680 = vmatprep.mubr.f32.mxu0 0.0
    %681 = vmatmul.mubr.f32.gmra.mrb[0].mxu0 %v549
    %v682 = vpop.f32.mrb[0].mxu0
    %v683 = vadd.f32 0.0, %v682
    %v684 = vpop.f32.mrb[0].mxu0
    %685 = vmatprep.mubr.f32.mxu0 0.0
    %686 = vmatmul.mubr.f32.gmra.mrb[0].mxu0 %v552
    %v687 = vpop.f32.mrb[0].mxu0
    %v688 = vadd.f32 0.0, %v687
    %v689 = vpop.f32.mrb[0].mxu0
    %690 = vmatprep.mubr.f32.mxu0 0.0
    %691 = vmatmul.mubr.f32.gmra.mrb[0].mxu0 %v555
    %v692 = vpop.f32.mrb[0].mxu0
    %v693 = vadd.f32 0.0, %v692
    %v694 = vpop.f32.mrb[0].mxu0
    %695 = vmatprep.mubr.f32.mxu0 0.0
    %696 = vmatmul.mubr.f32.gmra.mrb[0].mxu0 %v558
    %v697 = vpop.f32.mrb[0].mxu0
    %v698 = vadd.f32 0.0, %v697
    %v699 = vpop.f32.mrb[0].mxu0
    %700 = vmatprep.mubr.f32.mxu0 0.0
    %701 = vmatmul.mubr.f32.gmra.mrb[0].mxu0 %v561
    %v702 = vpop.f32.mrb[0].mxu0
    %v703 = vadd.f32 0.0, %v702
    %v704 = vpop.f32.mrb[0].mxu0
    %705 = vmatprep.mubr.f32.mxu0 0.0
    %706 = vmatmul.mubr.f32.gmra.mrb[0].mxu0 %v564
    %v707 = vpop.f32.mrb[0].mxu0
    %v708 = vadd.f32 0.0, %v707
    %v709 = vpop.f32.mrb[0].mxu0
    %710 = vdwg.mxu0
    %711 = vxpose.xlu0.b32.start [1/16] %v633, 128
    %712 = vxpose.xlu0.b32.cont [2/16] %v638, 128
    %713 = vxpose.xlu0.b32.cont [3/16] 0.0, 128
    %714 = vxpose.xlu0.b32.cont [4/16] 0.0, 128
    %715 = vxpose.xlu0.b32.cont [5/16] 0.0, 128
    %716 = vxpose.xlu0.b32.cont [6/16] 0.0, 128
    %717 = vxpose.xlu0.b32.cont [7/16] 0.0, 128
    %718 = vxpose.xlu0.b32.cont [8/16] 0.0, 128
    %719 = vxpose.xlu0.b32.cont [9/16] 0.0, 128
    %720 = vxpose.xlu0.b32.cont [10/16] 0.0, 128
    %721 = vxpose.xlu0.b32.cont [11/16] 0.0, 128
    %722 = vxpose.xlu0.b32.cont [12/16] 0.0, 128
    %723 = vxpose.xlu0.b32.cont [13/16] 0.0, 128
    %724 = vxpose.xlu0.b32.cont [14/16] 0.0, 128
    %725 = vxpose.xlu0.b32.cont [15/16] 0.0, 128
    %726 = vxpose.xlu0.b32.end [16/16] 0.0, 128
    %v727 = vpop.trf.xlu0
    %v728 = vpop.trf.xlu0
    %v729 = vpop.trf.xlu0
    %v730 = vpop.trf.xlu0
    %v731 = vpop.trf.xlu0
    %v732 = vpop.trf.xlu0
    %v733 = vpop.trf.xlu0
    %v734 = vpop.trf.xlu0
    %v735 = vpop.trf.xlu0
    %v736 = vpop.trf.xlu0
    %v737 = vpop.trf.xlu0
    %v738 = vpop.trf.xlu0
    %v739 = vpop.trf.xlu0
    %v740 = vpop.trf.xlu0
    %v741 = vpop.trf.xlu0
    %v742 = vpop.trf.xlu0
    %743 = vxpose.xlu0.b32.start [1/16] %v643, 128
    %744 = vxpose.xlu0.b32.cont [2/16] %v648, 128
    %745 = vxpose.xlu0.b32.cont [3/16] 0.0, 128
    %746 = vxpose.xlu0.b32.cont [4/16] 0.0, 128
    %747 = vxpose.xlu0.b32.cont [5/16] 0.0, 128
    %748 = vxpose.xlu0.b32.cont [6/16] 0.0, 128
    %749 = vxpose.xlu0.b32.cont [7/16] 0.0, 128
    %750 = vxpose.xlu0.b32.cont [8/16] 0.0, 128
    %751 = vxpose.xlu0.b32.cont [9/16] 0.0, 128
    %752 = vxpose.xlu0.b32.cont [10/16] 0.0, 128
    %753 = vxpose.xlu0.b32.cont [11/16] 0.0, 128
    %754 = vxpose.xlu0.b32.cont [12/16] 0.0, 128
    %755 = vxpose.xlu0.b32.cont [13/16] 0.0, 128
    %756 = vxpose.xlu0.b32.cont [14/16] 0.0, 128
    %757 = vxpose.xlu0.b32.cont [15/16] 0.0, 128
    %758 = vxpose.xlu0.b32.end [16/16] 0.0, 128
    %v759 = vpop.trf.xlu0
    %v760 = vpop.trf.xlu0
    %v761 = vpop.trf.xlu0
    %v762 = vpop.trf.xlu0
    %v763 = vpop.trf.xlu0
    %v764 = vpop.trf.xlu0
    %v765 = vpop.trf.xlu0
    %v766 = vpop.trf.xlu0
    %v767 = vpop.trf.xlu0
    %v768 = vpop.trf.xlu0
    %v769 = vpop.trf.xlu0
    %v770 = vpop.trf.xlu0
    %v771 = vpop.trf.xlu0
    %v772 = vpop.trf.xlu0
    %v773 = vpop.trf.xlu0
    %v774 = vpop.trf.xlu0
    %775 = vxpose.xlu0.b32.start [1/16] %v653, 128
    %776 = vxpose.xlu0.b32.cont [2/16] %v658, 128
    %777 = vxpose.xlu0.b32.cont [3/16] 0.0, 128
    %778 = vxpose.xlu0.b32.cont [4/16] 0.0, 128
    %779 = vxpose.xlu0.b32.cont [5/16] 0.0, 128
    %780 = vxpose.xlu0.b32.cont [6/16] 0.0, 128
    %781 = vxpose.xlu0.b32.cont [7/16] 0.0, 128
    %782 = vxpose.xlu0.b32.cont [8/16] 0.0, 128
    %783 = vxpose.xlu0.b32.cont [9/16] 0.0, 128
    %784 = vxpose.xlu0.b32.cont [10/16] 0.0, 128
    %785 = vxpose.xlu0.b32.cont [11/16] 0.0, 128
    %786 = vxpose.xlu0.b32.cont [12/16] 0.0, 128
    %787 = vxpose.xlu0.b32.cont [13/16] 0.0, 128
    %788 = vxpose.xlu0.b32.cont [14/16] 0.0, 128
    %789 = vxpose.xlu0.b32.cont [15/16] 0.0, 128
    %790 = vxpose.xlu0.b32.end [16/16] 0.0, 128
    %v791 = vpop.trf.xlu0
    %v792 = vpop.trf.xlu0
    %v793 = vpop.trf.xlu0
    %v794 = vpop.trf.xlu0
    %v795 = vpop.trf.xlu0
    %v796 = vpop.trf.xlu0
    %v797 = vpop.trf.xlu0
    %v798 = vpop.trf.xlu0
    %v799 = vpop.trf.xlu0
    %v800 = vpop.trf.xlu0
    %v801 = vpop.trf.xlu0
    %v802 = vpop.trf.xlu0
    %v803 = vpop.trf.xlu0
    %v804 = vpop.trf.xlu0
    %v805 = vpop.trf.xlu0
    %v806 = vpop.trf.xlu0
    %807 = vxpose.xlu0.b32.start [1/16] %v663, 128
    %808 = vxpose.xlu0.b32.cont [2/16] %v668, 128
    %809 = vxpose.xlu0.b32.cont [3/16] 0.0, 128
    %810 = vxpose.xlu0.b32.cont [4/16] 0.0, 128
    %811 = vxpose.xlu0.b32.cont [5/16] 0.0, 128
    %812 = vxpose.xlu0.b32.cont [6/16] 0.0, 128
    %813 = vxpose.xlu0.b32.cont [7/16] 0.0, 128
    %814 = vxpose.xlu0.b32.cont [8/16] 0.0, 128
    %815 = vxpose.xlu0.b32.cont [9/16] 0.0, 128
    %816 = vxpose.xlu0.b32.cont [10/16] 0.0, 128
    %817 = vxpose.xlu0.b32.cont [11/16] 0.0, 128
    %818 = vxpose.xlu0.b32.cont [12/16] 0.0, 128
    %819 = vxpose.xlu0.b32.cont [13/16] 0.0, 128
    %820 = vxpose.xlu0.b32.cont [14/16] 0.0, 128
    %821 = vxpose.xlu0.b32.cont [15/16] 0.0, 128
    %822 = vxpose.xlu0.b32.end [16/16] 0.0, 128
    %v823 = vpop.trf.xlu0
    %v824 = vpop.trf.xlu0
    %v825 = vpop.trf.xlu0
    %v826 = vpop.trf.xlu0
    %v827 = vpop.trf.xlu0
    %v828 = vpop.trf.xlu0
    %v829 = vpop.trf.xlu0
    %v830 = vpop.trf.xlu0
    %v831 = vpop.trf.xlu0
    %v832 = vpop.trf.xlu0
    %v833 = vpop.trf.xlu0
    %v834 = vpop.trf.xlu0
    %v835 = vpop.trf.xlu0
    %v836 = vpop.trf.xlu0
    %v837 = vpop.trf.xlu0
    %v838 = vpop.trf.xlu0
    %839 = vxpose.xlu0.b32.start [1/16] %v673, 128
    %840 = vxpose.xlu0.b32.cont [2/16] %v678, 128
    %841 = vxpose.xlu0.b32.cont [3/16] 0.0, 128
    %842 = vxpose.xlu0.b32.cont [4/16] 0.0, 128
    %843 = vxpose.xlu0.b32.cont [5/16] 0.0, 128
    %844 = vxpose.xlu0.b32.cont [6/16] 0.0, 128
    %845 = vxpose.xlu0.b32.cont [7/16] 0.0, 128
    %846 = vxpose.xlu0.b32.cont [8/16] 0.0, 128
    %847 = vxpose.xlu0.b32.cont [9/16] 0.0, 128
    %848 = vxpose.xlu0.b32.cont [10/16] 0.0, 128
    %849 = vxpose.xlu0.b32.cont [11/16] 0.0, 128
    %850 = vxpose.xlu0.b32.cont [12/16] 0.0, 128
    %851 = vxpose.xlu0.b32.cont [13/16] 0.0, 128
    %852 = vxpose.xlu0.b32.cont [14/16] 0.0, 128
    %853 = vxpose.xlu0.b32.cont [15/16] 0.0, 128
    %854 = vxpose.xlu0.b32.end [16/16] 0.0, 128
    %v855 = vpop.trf.xlu0
    %v856 = vpop.trf.xlu0
    %v857 = vpop.trf.xlu0
    %v858 = vpop.trf.xlu0
    %v859 = vpop.trf.xlu0
    %v860 = vpop.trf.xlu0
    %v861 = vpop.trf.xlu0
    %v862 = vpop.trf.xlu0
    %v863 = vpop.trf.xlu0
    %v864 = vpop.trf.xlu0
    %v865 = vpop.trf.xlu0
    %v866 = vpop.trf.xlu0
    %v867 = vpop.trf.xlu0
    %v868 = vpop.trf.xlu0
    %v869 = vpop.trf.xlu0
    %v870 = vpop.trf.xlu0
    %871 = vxpose.xlu0.b32.start [1/16] %v683, 128
    %872 = vxpose.xlu0.b32.cont [2/16] %v688, 128
    %873 = vxpose.xlu0.b32.cont [3/16] 0.0, 128
    %874 = vxpose.xlu0.b32.cont [4/16] 0.0, 128
    %875 = vxpose.xlu0.b32.cont [5/16] 0.0, 128
    %876 = vxpose.xlu0.b32.cont [6/16] 0.0, 128
    %877 = vxpose.xlu0.b32.cont [7/16] 0.0, 128
    %878 = vxpose.xlu0.b32.cont [8/16] 0.0, 128
    %879 = vxpose.xlu0.b32.cont [9/16] 0.0, 128
    %880 = vxpose.xlu0.b32.cont [10/16] 0.0, 128
    %881 = vxpose.xlu0.b32.cont [11/16] 0.0, 128
    %882 = vxpose.xlu0.b32.cont [12/16] 0.0, 128
    %883 = vxpose.xlu0.b32.cont [13/16] 0.0, 128
    %884 = vxpose.xlu0.b32.cont [14/16] 0.0, 128
    %885 = vxpose.xlu0.b32.cont [15/16] 0.0, 128
    %886 = vxpose.xlu0.b32.end [16/16] 0.0, 128
    %v887 = vpop.trf.xlu0
    %v888 = vpop.trf.xlu0
    %v889 = vpop.trf.xlu0
    %v890 = vpop.trf.xlu0
    %v891 = vpop.trf.xlu0
    %v892 = vpop.trf.xlu0
    %v893 = vpop.trf.xlu0
    %v894 = vpop.trf.xlu0
    %v895 = vpop.trf.xlu0
    %v896 = vpop.trf.xlu0
    %v897 = vpop.trf.xlu0
    %v898 = vpop.trf.xlu0
    %v899 = vpop.trf.xlu0
    %v900 = vpop.trf.xlu0
    %v901 = vpop.trf.xlu0
    %v902 = vpop.trf.xlu0
    %903 = vxpose.xlu0.b32.start [1/16] %v693, 128
    %904 = vxpose.xlu0.b32.cont [2/16] %v698, 128
    %905 = vxpose.xlu0.b32.cont [3/16] 0.0, 128
    %906 = vxpose.xlu0.b32.cont [4/16] 0.0, 128
    %907 = vxpose.xlu0.b32.cont [5/16] 0.0, 128
    %908 = vxpose.xlu0.b32.cont [6/16] 0.0, 128
    %909 = vxpose.xlu0.b32.cont [7/16] 0.0, 128
    %910 = vxpose.xlu0.b32.cont [8/16] 0.0, 128
    %911 = vxpose.xlu0.b32.cont [9/16] 0.0, 128
    %912 = vxpose.xlu0.b32.cont [10/16] 0.0, 128
    %913 = vxpose.xlu0.b32.cont [11/16] 0.0, 128
    %914 = vxpose.xlu0.b32.cont [12/16] 0.0, 128
    %915 = vxpose.xlu0.b32.cont [13/16] 0.0, 128
    %916 = vxpose.xlu0.b32.cont [14/16] 0.0, 128
    %917 = vxpose.xlu0.b32.cont [15/16] 0.0, 128
    %918 = vxpose.xlu0.b32.end [16/16] 0.0, 128
    %v919 = vpop.trf.xlu0
    %v920 = vpop.trf.xlu0
    %v921 = vpop.trf.xlu0
    %v922 = vpop.trf.xlu0
    %v923 = vpop.trf.xlu0
    %v924 = vpop.trf.xlu0
    %v925 = vpop.trf.xlu0
    %v926 = vpop.trf.xlu0
    %v927 = vpop.trf.xlu0
    %v928 = vpop.trf.xlu0
    %v929 = vpop.trf.xlu0
    %v930 = vpop.trf.xlu0
    %v931 = vpop.trf.xlu0
    %v932 = vpop.trf.xlu0
    %v933 = vpop.trf.xlu0
    %v934 = vpop.trf.xlu0
    %935 = vxpose.xlu0.b32.start [1/16] %v703, 128
    %936 = vxpose.xlu0.b32.cont [2/16] %v708, 128
    %937 = vxpose.xlu0.b32.cont [3/16] 0.0, 128
    %938 = vxpose.xlu0.b32.cont [4/16] 0.0, 128
    %939 = vxpose.xlu0.b32.cont [5/16] 0.0, 128
    %940 = vxpose.xlu0.b32.cont [6/16] 0.0, 128
    %941 = vxpose.xlu0.b32.cont [7/16] 0.0, 128
    %942 = vxpose.xlu0.b32.cont [8/16] 0.0, 128
    %943 = vxpose.xlu0.b32.cont [9/16] 0.0, 128
    %944 = vxpose.xlu0.b32.cont [10/16] 0.0, 128
    %945 = vxpose.xlu0.b32.cont [11/16] 0.0, 128
    %946 = vxpose.xlu0.b32.cont [12/16] 0.0, 128
    %947 = vxpose.xlu0.b32.cont [13/16] 0.0, 128
    %948 = vxpose.xlu0.b32.cont [14/16] 0.0, 128
    %949 = vxpose.xlu0.b32.cont [15/16] 0.0, 128
    %950 = vxpose.xlu0.b32.end [16/16] 0.0, 128
    %v951 = vpop.trf.xlu0
    %v952 = vpop.trf.xlu0
    %v953 = vpop.trf.xlu0
    %v954 = vpop.trf.xlu0
    %v955 = vpop.trf.xlu0
    %v956 = vpop.trf.xlu0
    %v957 = vpop.trf.xlu0
    %v958 = vpop.trf.xlu0
    %v959 = vpop.trf.xlu0
    %v960 = vpop.trf.xlu0
    %v961 = vpop.trf.xlu0
    %v962 = vpop.trf.xlu0
    %v963 = vpop.trf.xlu0
    %v964 = vpop.trf.xlu0
    %v965 = vpop.trf.xlu0
    %v966 = vpop.trf.xlu0
    %v968 = vsel %vm418, %v727, 0
    %v971 = vsel %vm418, %v728, 0
    %v974 = vsel %vm418, %v759, 0
    %v977 = vsel %vm418, %v760, 0
    %v980 = vsel %vm418, %v791, 0
    %v983 = vsel %vm418, %v792, 0
    %v986 = vsel %vm418, %v823, 0
    %v989 = vsel %vm418, %v824, 0
    %v992 = vsel %vm418, %v855, 0
    %v995 = vsel %vm418, %v856, 0
    %v998 = vsel %vm418, %v887, 0
    %v1001 = vsel %vm418, %v888, 0
    %v1004 = vsel %vm418, %v919, 0
    %v1007 = vsel %vm418, %v920, 0
    %v1010 = vsel %vm418, %v951, 0
    %v1013 = vsel %vm418, %v952, 0
    %1015 = vmatprep.subr.mxu0 0.0
    %1016 = vmatpush1.msra.mxu0 %v109
    %1017 = vmatprep.subr.mxu0 0.0
    %1018 = vmatpush1.msra.mxu0 %v110
    %1019 = vmatprep.subr.mxu0 0.0
    %1020 = vmatpush1.msra.mxu0 0.0
    %1021 = vmatprep.subr.mxu0 0.0
    %1022 = vmatpush1.msra.mxu0 0.0
    %1023 = vmatprep.subr.mxu0 0.0
    %1024 = vmatpush1.msra.mxu0 0.0
    %1025 = vmatprep.subr.mxu0 0.0
    %1026 = vmatpush1.msra.mxu0 0.0
    %1027 = vmatprep.subr.mxu0 0.0
    %1028 = vmatpush1.msra.mxu0 0.0
    %1029 = vmatprep.subr.mxu0 0.0
    %1030 = vmatpush1.msra.mxu0 0.0
    %1031 = vmatprep.subr.mxu0 0.0
    %1032 = vmatpush1.msra.mxu0 0.0
    %1033 = vmatprep.subr.mxu0 0.0
    %1034 = vmatpush1.msra.mxu0 0.0
    %1035 = vmatprep.subr.mxu0 0.0
    %1036 = vmatpush1.msra.mxu0 0.0
    %1037 = vmatprep.subr.mxu0 0.0
    %1038 = vmatpush1.msra.mxu0 0.0
    %1039 = vmatprep.subr.mxu0 0.0
    %1040 = vmatpush1.msra.mxu0 0.0
    %1041 = vmatprep.subr.mxu0 0.0
    %1042 = vmatpush1.msra.mxu0 0.0
    %1043 = vmatprep.subr.mxu0 0.0
    %1044 = vmatpush1.msra.mxu0 0.0
    %1045 = vmatprep.subr.mxu0 0.0
    %1046 = vmatpush1.msra.mxu0 0.0
    %1047 = vmatprep.subr.mxu0 0.0
    %1048 = vmatpush1.msra.mxu0 0.0
    %1049 = vmatprep.subr.mxu0 0.0
    %1050 = vmatpush1.msra.mxu0 0.0
    %1051 = vmatprep.subr.mxu0 0.0
    %1052 = vmatpush1.msra.mxu0 0.0
    %1053 = vmatprep.subr.mxu0 0.0
    %1054 = vmatpush1.msra.mxu0 0.0
    %1055 = vmatprep.subr.mxu0 0.0
    %1056 = vmatpush1.msra.mxu0 0.0
    %1057 = vmatprep.subr.mxu0 0.0
    %1058 = vmatpush1.msra.mxu0 0.0
    %1059 = vmatprep.subr.mxu0 0.0
    %1060 = vmatpush1.msra.mxu0 0.0
    %1061 = vmatprep.subr.mxu0 0.0
    %1062 = vmatpush1.msra.mxu0 0.0
    %1063 = vmatprep.subr.mxu0 0.0
    %1064 = vmatpush1.msra.mxu0 0.0
    %1065 = vmatprep.subr.mxu0 0.0
    %1066 = vmatpush1.msra.mxu0 0.0
    %1067 = vmatprep.subr.mxu0 0.0
    %1068 = vmatpush1.msra.mxu0 0.0
    %1069 = vmatprep.subr.mxu0 0.0
    %1070 = vmatpush1.msra.mxu0 0.0
    %1071 = vmatprep.subr.mxu0 0.0
    %1072 = vmatpush1.msra.mxu0 0.0
    %1073 = vmatprep.subr.mxu0 0.0
    %1074 = vmatpush1.msra.mxu0 0.0
    %1075 = vmatprep.subr.mxu0 0.0
    %1076 = vmatpush1.msra.mxu0 0.0
    %1077 = vmatprep.subr.mxu0 0.0
    %1078 = vmatpush1.msra.mxu0 0.0
    %1079 = vmatprep.mubr.f32.mxu0 0.0
    %1080 = vmatmul.mubr.f32.gmra.mrb[0].mxu0 %v968
    %v1081 = vpop.f32.mrb[0].mxu0
    %v1082 = vadd.f32 0.0, %v1081
    %v1083 = vpop.f32.mrb[0].mxu0
    %1084 = vmatprep.mubr.f32.mxu0 0.0
    %1085 = vmatmul.mubr.f32.gmra.mrb[0].mxu0 %v971
    %v1086 = vpop.f32.mrb[0].mxu0
    %v1087 = vadd.f32 0.0, %v1086
    %v1088 = vpop.f32.mrb[0].mxu0
    %1089 = vmatprep.mubr.f32.mxu0 0.0
    %1090 = vmatmul.mubr.f32.gmra.mrb[0].mxu0 %v974
    %v1091 = vpop.f32.mrb[0].mxu0
    %v1092 = vadd.f32 0.0, %v1091
    %v1093 = vpop.f32.mrb[0].mxu0
    %1094 = vmatprep.mubr.f32.mxu0 0.0
    %1095 = vmatmul.mubr.f32.gmra.mrb[0].mxu0 %v977
    %v1096 = vpop.f32.mrb[0].mxu0
    %v1097 = vadd.f32 0.0, %v1096
    %v1098 = vpop.f32.mrb[0].mxu0
    %1099 = vmatprep.mubr.f32.mxu0 0.0
    %1100 = vmatmul.mubr.f32.gmra.mrb[0].mxu0 %v980
    %v1101 = vpop.f32.mrb[0].mxu0
    %v1102 = vadd.f32 0.0, %v1101
    %v1103 = vpop.f32.mrb[0].mxu0
    %1104 = vmatprep.mubr.f32.mxu0 0.0
    %1105 = vmatmul.mubr.f32.gmra.mrb[0].mxu0 %v983
    %v1106 = vpop.f32.mrb[0].mxu0
    %v1107 = vadd.f32 0.0, %v1106
    %v1108 = vpop.f32.mrb[0].mxu0
    %1109 = vmatprep.mubr.f32.mxu0 0.0
    %1110 = vmatmul.mubr.f32.gmra.mrb[0].mxu0 %v986
    %v1111 = vpop.f32.mrb[0].mxu0
    %v1112 = vadd.f32 0.0, %v1111
    %v1113 = vpop.f32.mrb[0].mxu0
    %1114 = vmatprep.mubr.f32.mxu0 0.0
    %1115 = vmatmul.mubr.f32.gmra.mrb[0].mxu0 %v989
    %v1116 = vpop.f32.mrb[0].mxu0
    %v1117 = vadd.f32 0.0, %v1116
    %v1118 = vpop.f32.mrb[0].mxu0
    %1119 = vmatprep.mubr.f32.mxu0 0.0
    %1120 = vmatmul.mubr.f32.gmra.mrb[0].mxu0 %v992
    %v1121 = vpop.f32.mrb[0].mxu0
    %v1122 = vadd.f32 0.0, %v1121
    %v1123 = vpop.f32.mrb[0].mxu0
    %1124 = vmatprep.mubr.f32.mxu0 0.0
    %1125 = vmatmul.mubr.f32.gmra.mrb[0].mxu0 %v995
    %v1126 = vpop.f32.mrb[0].mxu0
    %v1127 = vadd.f32 0.0, %v1126
    %v1128 = vpop.f32.mrb[0].mxu0
    %1129 = vmatprep.mubr.f32.mxu0 0.0
    %1130 = vmatmul.mubr.f32.gmra.mrb[0].mxu0 %v998
    %v1131 = vpop.f32.mrb[0].mxu0
    %v1132 = vadd.f32 0.0, %v1131
    %v1133 = vpop.f32.mrb[0].mxu0
    %1134 = vmatprep.mubr.f32.mxu0 0.0
    %1135 = vmatmul.mubr.f32.gmra.mrb[0].mxu0 %v1001
    %v1136 = vpop.f32.mrb[0].mxu0
    %v1137 = vadd.f32 0.0, %v1136
    %v1138 = vpop.f32.mrb[0].mxu0
    %1139 = vmatprep.mubr.f32.mxu0 0.0
    %1140 = vmatmul.mubr.f32.gmra.mrb[0].mxu0 %v1004
    %v1141 = vpop.f32.mrb[0].mxu0
    %v1142 = vadd.f32 0.0, %v1141
    %v1143 = vpop.f32.mrb[0].mxu0
    %1144 = vmatprep.mubr.f32.mxu0 0.0
    %1145 = vmatmul.mubr.f32.gmra.mrb[0].mxu0 %v1007
    %v1146 = vpop.f32.mrb[0].mxu0
    %v1147 = vadd.f32 0.0, %v1146
    %v1148 = vpop.f32.mrb[0].mxu0
    %1149 = vmatprep.mubr.f32.mxu0 0.0
    %1150 = vmatmul.mubr.f32.gmra.mrb[0].mxu0 %v1010
    %v1151 = vpop.f32.mrb[0].mxu0
    %v1152 = vadd.f32 0.0, %v1151
    %v1153 = vpop.f32.mrb[0].mxu0
    %1154 = vmatprep.mubr.f32.mxu0 0.0
    %1155 = vmatmul.mubr.f32.gmra.mrb[0].mxu0 %v1013
    %v1156 = vpop.f32.mrb[0].mxu0
    %v1157 = vadd.f32 0.0, %v1156
    %v1158 = vpop.f32.mrb[0].mxu0
    %1159 = vdwg.mxu0
    %v1161 = vsel %vm418, %v502, 0
    %v1164 = vsel %vm418, %v503, 0
    %v1167 = vsel %vm418, %v504, 0
    %v1170 = vsel %vm418, %v505, 0
    %v1173 = vsel %vm418, %v506, 0
    %v1176 = vsel %vm418, %v507, 0
    %v1179 = vsel %vm418, %v508, 0
    %v1182 = vsel %vm418, %v509, 0
    %v1185 = vsel %vm418, %v510, 0
    %v1188 = vsel %vm418, %v511, 0
    %v1191 = vsel %vm418, %v512, 0
    %v1194 = vsel %vm418, %v513, 0
    %v1197 = vsel %vm418, %v514, 0
    %v1200 = vsel %vm418, %v515, 0
    %v1203 = vsel %vm418, %v516, 0
    %v1206 = vsel %vm418, %v517, 0
    %1208 = vmatprep.subr.mxu0 0.0
    %1209 = vmatpush1.msra.mxu0 %v109
    %1210 = vmatprep.subr.mxu0 0.0
    %1211 = vmatpush1.msra.mxu0 %v110
    %1212 = vmatprep.subr.mxu0 0.0
    %1213 = vmatpush1.msra.mxu0 0.0
    %1214 = vmatprep.subr.mxu0 0.0
    %1215 = vmatpush1.msra.mxu0 0.0
    %1216 = vmatprep.subr.mxu0 0.0
    %1217 = vmatpush1.msra.mxu0 0.0
    %1218 = vmatprep.subr.mxu0 0.0
    %1219 = vmatpush1.msra.mxu0 0.0
    %1220 = vmatprep.subr.mxu0 0.0
    %1221 = vmatpush1.msra.mxu0 0.0
    %1222 = vmatprep.subr.mxu0 0.0
    %1223 = vmatpush1.msra.mxu0 0.0
    %1224 = vmatprep.subr.mxu0 0.0
    %1225 = vmatpush1.msra.mxu0 0.0
    %1226 = vmatprep.subr.mxu0 0.0
    %1227 = vmatpush1.msra.mxu0 0.0
    %1228 = vmatprep.subr.mxu0 0.0
    %1229 = vmatpush1.msra.mxu0 0.0
    %1230 = vmatprep.subr.mxu0 0.0
    %1231 = vmatpush1.msra.mxu0 0.0
    %1232 = vmatprep.subr.mxu0 0.0
    %1233 = vmatpush1.msra.mxu0 0.0
    %1234 = vmatprep.subr.mxu0 0.0
    %1235 = vmatpush1.msra.mxu0 0.0
    %1236 = vmatprep.subr.mxu0 0.0
    %1237 = vmatpush1.msra.mxu0 0.0
    %1238 = vmatprep.subr.mxu0 0.0
    %1239 = vmatpush1.msra.mxu0 0.0
    %1240 = vmatprep.subr.mxu0 0.0
    %1241 = vmatpush1.msra.mxu0 0.0
    %1242 = vmatprep.subr.mxu0 0.0
    %1243 = vmatpush1.msra.mxu0 0.0
    %1244 = vmatprep.subr.mxu0 0.0
    %1245 = vmatpush1.msra.mxu0 0.0
    %1246 = vmatprep.subr.mxu0 0.0
    %1247 = vmatpush1.msra.mxu0 0.0
    %1248 = vmatprep.subr.mxu0 0.0
    %1249 = vmatpush1.msra.mxu0 0.0
    %1250 = vmatprep.subr.mxu0 0.0
    %1251 = vmatpush1.msra.mxu0 0.0
    %1252 = vmatprep.subr.mxu0 0.0
    %1253 = vmatpush1.msra.mxu0 0.0
    %1254 = vmatprep.subr.mxu0 0.0
    %1255 = vmatpush1.msra.mxu0 0.0
    %1256 = vmatprep.subr.mxu0 0.0
    %1257 = vmatpush1.msra.mxu0 0.0
    %1258 = vmatprep.subr.mxu0 0.0
    %1259 = vmatpush1.msra.mxu0 0.0
    %1260 = vmatprep.subr.mxu0 0.0
    %1261 = vmatpush1.msra.mxu0 0.0
    %1262 = vmatprep.subr.mxu0 0.0
    %1263 = vmatpush1.msra.mxu0 0.0
    %1264 = vmatprep.subr.mxu0 0.0
    %1265 = vmatpush1.msra.mxu0 0.0
    %1266 = vmatprep.subr.mxu0 0.0
    %1267 = vmatpush1.msra.mxu0 0.0
    %1268 = vmatprep.subr.mxu0 0.0
    %1269 = vmatpush1.msra.mxu0 0.0
    %1270 = vmatprep.subr.mxu0 0.0
    %1271 = vmatpush1.msra.mxu0 0.0
    %1272 = vmatprep.mubr.f32.mxu0 0.0
    %1273 = vmatmul.mubr.f32.gmra.mrb[0].mxu0 %v1161
    %v1274 = vpop.f32.mrb[0].mxu0
    %v1275 = vadd.f32 0.0, %v1274
    %v1276 = vpop.f32.mrb[0].mxu0
    %1277 = vmatprep.mubr.f32.mxu0 0.0
    %1278 = vmatmul.mubr.f32.gmra.mrb[0].mxu0 %v1164
    %v1279 = vpop.f32.mrb[0].mxu0
    %v1280 = vadd.f32 0.0, %v1279
    %v1281 = vpop.f32.mrb[0].mxu0
    %1282 = vmatprep.mubr.f32.mxu0 0.0
    %1283 = vmatmul.mubr.f32.gmra.mrb[0].mxu0 %v1167
    %v1284 = vpop.f32.mrb[0].mxu0
    %v1285 = vadd.f32 0.0, %v1284
    %v1286 = vpop.f32.mrb[0].mxu0
    %1287 = vmatprep.mubr.f32.mxu0 0.0
    %1288 = vmatmul.mubr.f32.gmra.mrb[0].mxu0 %v1170
    %v1289 = vpop.f32.mrb[0].mxu0
    %v1290 = vadd.f32 0.0, %v1289
    %v1291 = vpop.f32.mrb[0].mxu0
    %1292 = vmatprep.mubr.f32.mxu0 0.0
    %1293 = vmatmul.mubr.f32.gmra.mrb[0].mxu0 %v1173
    %v1294 = vpop.f32.mrb[0].mxu0
    %v1295 = vadd.f32 0.0, %v1294
    %v1296 = vpop.f32.mrb[0].mxu0
    %1297 = vmatprep.mubr.f32.mxu0 0.0
    %1298 = vmatmul.mubr.f32.gmra.mrb[0].mxu0 %v1176
    %v1299 = vpop.f32.mrb[0].mxu0
    %v1300 = vadd.f32 0.0, %v1299
    %v1301 = vpop.f32.mrb[0].mxu0
    %1302 = vmatprep.mubr.f32.mxu0 0.0
    %1303 = vmatmul.mubr.f32.gmra.mrb[0].mxu0 %v1179
    %v1304 = vpop.f32.mrb[0].mxu0
    %v1305 = vadd.f32 0.0, %v1304
    %v1306 = vpop.f32.mrb[0].mxu0
    %1307 = vmatprep.mubr.f32.mxu0 0.0
    %1308 = vmatmul.mubr.f32.gmra.mrb[0].mxu0 %v1182
    %v1309 = vpop.f32.mrb[0].mxu0
    %v1310 = vadd.f32 0.0, %v1309
    %v1311 = vpop.f32.mrb[0].mxu0
    %1312 = vmatprep.mubr.f32.mxu0 0.0
    %1313 = vmatmul.mubr.f32.gmra.mrb[0].mxu0 %v1185
    %v1314 = vpop.f32.mrb[0].mxu0
    %v1315 = vadd.f32 0.0, %v1314
    %v1316 = vpop.f32.mrb[0].mxu0
    %1317 = vmatprep.mubr.f32.mxu0 0.0
    %1318 = vmatmul.mubr.f32.gmra.mrb[0].mxu0 %v1188
    %v1319 = vpop.f32.mrb[0].mxu0
    %v1320 = vadd.f32 0.0, %v1319
    %v1321 = vpop.f32.mrb[0].mxu0
    %1322 = vmatprep.mubr.f32.mxu0 0.0
    %1323 = vmatmul.mubr.f32.gmra.mrb[0].mxu0 %v1191
    %v1324 = vpop.f32.mrb[0].mxu0
    %v1325 = vadd.f32 0.0, %v1324
    %v1326 = vpop.f32.mrb[0].mxu0
    %1327 = vmatprep.mubr.f32.mxu0 0.0
    %1328 = vmatmul.mubr.f32.gmra.mrb[0].mxu0 %v1194
    %v1329 = vpop.f32.mrb[0].mxu0
    %v1330 = vadd.f32 0.0, %v1329
    %v1331 = vpop.f32.mrb[0].mxu0
    %1332 = vmatprep.mubr.f32.mxu0 0.0
    %1333 = vmatmul.mubr.f32.gmra.mrb[0].mxu0 %v1197
    %v1334 = vpop.f32.mrb[0].mxu0
    %v1335 = vadd.f32 0.0, %v1334
    %v1336 = vpop.f32.mrb[0].mxu0
    %1337 = vmatprep.mubr.f32.mxu0 0.0
    %1338 = vmatmul.mubr.f32.gmra.mrb[0].mxu0 %v1200
    %v1339 = vpop.f32.mrb[0].mxu0
    %v1340 = vadd.f32 0.0, %v1339
    %v1341 = vpop.f32.mrb[0].mxu0
    %1342 = vmatprep.mubr.f32.mxu0 0.0
    %1343 = vmatmul.mubr.f32.gmra.mrb[0].mxu0 %v1203
    %v1344 = vpop.f32.mrb[0].mxu0
    %v1345 = vadd.f32 0.0, %v1344
    %v1346 = vpop.f32.mrb[0].mxu0
    %1347 = vmatprep.mubr.f32.mxu0 0.0
    %1348 = vmatmul.mubr.f32.gmra.mrb[0].mxu0 %v1206
    %v1349 = vpop.f32.mrb[0].mxu0
    %v1350 = vadd.f32 0.0, %v1349
    %v1351 = vpop.f32.mrb[0].mxu0
    %1352 = vdwg.mxu0
    %1353 = vxpose.xlu0.b32.start [1/16] %v1275, 128
    %1354 = vxpose.xlu0.b32.cont [2/16] %v1280, 128
    %1355 = vxpose.xlu0.b32.cont [3/16] 0.0, 128
    %1356 = vxpose.xlu0.b32.cont [4/16] 0.0, 128
    %1357 = vxpose.xlu0.b32.cont [5/16] 0.0, 128
    %1358 = vxpose.xlu0.b32.cont [6/16] 0.0, 128
    %1359 = vxpose.xlu0.b32.cont [7/16] 0.0, 128
    %1360 = vxpose.xlu0.b32.cont [8/16] 0.0, 128
    %1361 = vxpose.xlu0.b32.cont [9/16] 0.0, 128
    %1362 = vxpose.xlu0.b32.cont [10/16] 0.0, 128
    %1363 = vxpose.xlu0.b32.cont [11/16] 0.0, 128
    %1364 = vxpose.xlu0.b32.cont [12/16] 0.0, 128
    %1365 = vxpose.xlu0.b32.cont [13/16] 0.0, 128
    %1366 = vxpose.xlu0.b32.cont [14/16] 0.0, 128
    %1367 = vxpose.xlu0.b32.cont [15/16] 0.0, 128
    %1368 = vxpose.xlu0.b32.end [16/16] 0.0, 128
    %v1369 = vpop.trf.xlu0
    %v1370 = vpop.trf.xlu0
    %v1371 = vpop.trf.xlu0
    %v1372 = vpop.trf.xlu0
    %v1373 = vpop.trf.xlu0
    %v1374 = vpop.trf.xlu0
    %v1375 = vpop.trf.xlu0
    %v1376 = vpop.trf.xlu0
    %v1377 = vpop.trf.xlu0
    %v1378 = vpop.trf.xlu0
    %v1379 = vpop.trf.xlu0
    %v1380 = vpop.trf.xlu0
    %v1381 = vpop.trf.xlu0
    %v1382 = vpop.trf.xlu0
    %v1383 = vpop.trf.xlu0
    %v1384 = vpop.trf.xlu0
    %1385 = vxpose.xlu0.b32.start [1/16] %v1285, 128
    %1386 = vxpose.xlu0.b32.cont [2/16] %v1290, 128
    %1387 = vxpose.xlu0.b32.cont [3/16] 0.0, 128
    %1388 = vxpose.xlu0.b32.cont [4/16] 0.0, 128
    %1389 = vxpose.xlu0.b32.cont [5/16] 0.0, 128
    %1390 = vxpose.xlu0.b32.cont [6/16] 0.0, 128
    %1391 = vxpose.xlu0.b32.cont [7/16] 0.0, 128
    %1392 = vxpose.xlu0.b32.cont [8/16] 0.0, 128
    %1393 = vxpose.xlu0.b32.cont [9/16] 0.0, 128
    %1394 = vxpose.xlu0.b32.cont [10/16] 0.0, 128
    %1395 = vxpose.xlu0.b32.cont [11/16] 0.0, 128
    %1396 = vxpose.xlu0.b32.cont [12/16] 0.0, 128
    %1397 = vxpose.xlu0.b32.cont [13/16] 0.0, 128
    %1398 = vxpose.xlu0.b32.cont [14/16] 0.0, 128
    %1399 = vxpose.xlu0.b32.cont [15/16] 0.0, 128
    %1400 = vxpose.xlu0.b32.end [16/16] 0.0, 128
    %v1401 = vpop.trf.xlu0
    %v1402 = vpop.trf.xlu0
    %v1403 = vpop.trf.xlu0
    %v1404 = vpop.trf.xlu0
    %v1405 = vpop.trf.xlu0
    %v1406 = vpop.trf.xlu0
    %v1407 = vpop.trf.xlu0
    %v1408 = vpop.trf.xlu0
    %v1409 = vpop.trf.xlu0
    %v1410 = vpop.trf.xlu0
    %v1411 = vpop.trf.xlu0
    %v1412 = vpop.trf.xlu0
    %v1413 = vpop.trf.xlu0
    %v1414 = vpop.trf.xlu0
    %v1415 = vpop.trf.xlu0
    %v1416 = vpop.trf.xlu0
    %1417 = vxpose.xlu0.b32.start [1/16] %v1295, 128
    %1418 = vxpose.xlu0.b32.cont [2/16] %v1300, 128
    %1419 = vxpose.xlu0.b32.cont [3/16] 0.0, 128
    %1420 = vxpose.xlu0.b32.cont [4/16] 0.0, 128
    %1421 = vxpose.xlu0.b32.cont [5/16] 0.0, 128
    %1422 = vxpose.xlu0.b32.cont [6/16] 0.0, 128
    %1423 = vxpose.xlu0.b32.cont [7/16] 0.0, 128
    %1424 = vxpose.xlu0.b32.cont [8/16] 0.0, 128
    %1425 = vxpose.xlu0.b32.cont [9/16] 0.0, 128
    %1426 = vxpose.xlu0.b32.cont [10/16] 0.0, 128
    %1427 = vxpose.xlu0.b32.cont [11/16] 0.0, 128
    %1428 = vxpose.xlu0.b32.cont [12/16] 0.0, 128
    %1429 = vxpose.xlu0.b32.cont [13/16] 0.0, 128
    %1430 = vxpose.xlu0.b32.cont [14/16] 0.0, 128
    %1431 = vxpose.xlu0.b32.cont [15/16] 0.0, 128
    %1432 = vxpose.xlu0.b32.end [16/16] 0.0, 128
    %v1433 = vpop.trf.xlu0
    %v1434 = vpop.trf.xlu0
    %v1435 = vpop.trf.xlu0
    %v1436 = vpop.trf.xlu0
    %v1437 = vpop.trf.xlu0
    %v1438 = vpop.trf.xlu0
    %v1439 = vpop.trf.xlu0
    %v1440 = vpop.trf.xlu0
    %v1441 = vpop.trf.xlu0
    %v1442 = vpop.trf.xlu0
    %v1443 = vpop.trf.xlu0
    %v1444 = vpop.trf.xlu0
    %v1445 = vpop.trf.xlu0
    %v1446 = vpop.trf.xlu0
    %v1447 = vpop.trf.xlu0
    %v1448 = vpop.trf.xlu0
    %1449 = vxpose.xlu0.b32.start [1/16] %v1305, 128
    %1450 = vxpose.xlu0.b32.cont [2/16] %v1310, 128
    %1451 = vxpose.xlu0.b32.cont [3/16] 0.0, 128
    %1452 = vxpose.xlu0.b32.cont [4/16] 0.0, 128
    %1453 = vxpose.xlu0.b32.cont [5/16] 0.0, 128
    %1454 = vxpose.xlu0.b32.cont [6/16] 0.0, 128
    %1455 = vxpose.xlu0.b32.cont [7/16] 0.0, 128
    %1456 = vxpose.xlu0.b32.cont [8/16] 0.0, 128
    %1457 = vxpose.xlu0.b32.cont [9/16] 0.0, 128
    %1458 = vxpose.xlu0.b32.cont [10/16] 0.0, 128
    %1459 = vxpose.xlu0.b32.cont [11/16] 0.0, 128
    %1460 = vxpose.xlu0.b32.cont [12/16] 0.0, 128
    %1461 = vxpose.xlu0.b32.cont [13/16] 0.0, 128
    %1462 = vxpose.xlu0.b32.cont [14/16] 0.0, 128
    %1463 = vxpose.xlu0.b32.cont [15/16] 0.0, 128
    %1464 = vxpose.xlu0.b32.end [16/16] 0.0, 128
    %v1465 = vpop.trf.xlu0
    %v1466 = vpop.trf.xlu0
    %v1467 = vpop.trf.xlu0
    %v1468 = vpop.trf.xlu0
    %v1469 = vpop.trf.xlu0
    %v1470 = vpop.trf.xlu0
    %v1471 = vpop.trf.xlu0
    %v1472 = vpop.trf.xlu0
    %v1473 = vpop.trf.xlu0
    %v1474 = vpop.trf.xlu0
    %v1475 = vpop.trf.xlu0
    %v1476 = vpop.trf.xlu0
    %v1477 = vpop.trf.xlu0
    %v1478 = vpop.trf.xlu0
    %v1479 = vpop.trf.xlu0
    %v1480 = vpop.trf.xlu0
    %1481 = vxpose.xlu0.b32.start [1/16] %v1315, 128
    %1482 = vxpose.xlu0.b32.cont [2/16] %v1320, 128
    %1483 = vxpose.xlu0.b32.cont [3/16] 0.0, 128
    %1484 = vxpose.xlu0.b32.cont [4/16] 0.0, 128
    %1485 = vxpose.xlu0.b32.cont [5/16] 0.0, 128
    %1486 = vxpose.xlu0.b32.cont [6/16] 0.0, 128
    %1487 = vxpose.xlu0.b32.cont [7/16] 0.0, 128
    %1488 = vxpose.xlu0.b32.cont [8/16] 0.0, 128
    %1489 = vxpose.xlu0.b32.cont [9/16] 0.0, 128
    %1490 = vxpose.xlu0.b32.cont [10/16] 0.0, 128
    %1491 = vxpose.xlu0.b32.cont [11/16] 0.0, 128
    %1492 = vxpose.xlu0.b32.cont [12/16] 0.0, 128
    %1493 = vxpose.xlu0.b32.cont [13/16] 0.0, 128
    %1494 = vxpose.xlu0.b32.cont [14/16] 0.0, 128
    %1495 = vxpose.xlu0.b32.cont [15/16] 0.0, 128
    %1496 = vxpose.xlu0.b32.end [16/16] 0.0, 128
    %v1497 = vpop.trf.xlu0
    %v1498 = vpop.trf.xlu0
    %v1499 = vpop.trf.xlu0
    %v1500 = vpop.trf.xlu0
    %v1501 = vpop.trf.xlu0
    %v1502 = vpop.trf.xlu0
    %v1503 = vpop.trf.xlu0
    %v1504 = vpop.trf.xlu0
    %v1505 = vpop.trf.xlu0
    %v1506 = vpop.trf.xlu0
    %v1507 = vpop.trf.xlu0
    %v1508 = vpop.trf.xlu0
    %v1509 = vpop.trf.xlu0
    %v1510 = vpop.trf.xlu0
    %v1511 = vpop.trf.xlu0
    %v1512 = vpop.trf.xlu0
    %1513 = vxpose.xlu0.b32.start [1/16] %v1325, 128
    %1514 = vxpose.xlu0.b32.cont [2/16] %v1330, 128
    %1515 = vxpose.xlu0.b32.cont [3/16] 0.0, 128
    %1516 = vxpose.xlu0.b32.cont [4/16] 0.0, 128
    %1517 = vxpose.xlu0.b32.cont [5/16] 0.0, 128
    %1518 = vxpose.xlu0.b32.cont [6/16] 0.0, 128
    %1519 = vxpose.xlu0.b32.cont [7/16] 0.0, 128
    %1520 = vxpose.xlu0.b32.cont [8/16] 0.0, 128
    %1521 = vxpose.xlu0.b32.cont [9/16] 0.0, 128
    %1522 = vxpose.xlu0.b32.cont [10/16] 0.0, 128
    %1523 = vxpose.xlu0.b32.cont [11/16] 0.0, 128
    %1524 = vxpose.xlu0.b32.cont [12/16] 0.0, 128
    %1525 = vxpose.xlu0.b32.cont [13/16] 0.0, 128
    %1526 = vxpose.xlu0.b32.cont [14/16] 0.0, 128
    %1527 = vxpose.xlu0.b32.cont [15/16] 0.0, 128
    %1528 = vxpose.xlu0.b32.end [16/16] 0.0, 128
    %v1529 = vpop.trf.xlu0
    %v1530 = vpop.trf.xlu0
    %v1531 = vpop.trf.xlu0
    %v1532 = vpop.trf.xlu0
    %v1533 = vpop.trf.xlu0
    %v1534 = vpop.trf.xlu0
    %v1535 = vpop.trf.xlu0
    %v1536 = vpop.trf.xlu0
    %v1537 = vpop.trf.xlu0
    %v1538 = vpop.trf.xlu0
    %v1539 = vpop.trf.xlu0
    %v1540 = vpop.trf.xlu0
    %v1541 = vpop.trf.xlu0
    %v1542 = vpop.trf.xlu0
    %v1543 = vpop.trf.xlu0
    %v1544 = vpop.trf.xlu0
    %1545 = vxpose.xlu0.b32.start [1/16] %v1335, 128
    %1546 = vxpose.xlu0.b32.cont [2/16] %v1340, 128
    %1547 = vxpose.xlu0.b32.cont [3/16] 0.0, 128
    %1548 = vxpose.xlu0.b32.cont [4/16] 0.0, 128
    %1549 = vxpose.xlu0.b32.cont [5/16] 0.0, 128
    %1550 = vxpose.xlu0.b32.cont [6/16] 0.0, 128
    %1551 = vxpose.xlu0.b32.cont [7/16] 0.0, 128
    %1552 = vxpose.xlu0.b32.cont [8/16] 0.0, 128
    %1553 = vxpose.xlu0.b32.cont [9/16] 0.0, 128
    %1554 = vxpose.xlu0.b32.cont [10/16] 0.0, 128
    %1555 = vxpose.xlu0.b32.cont [11/16] 0.0, 128
    %1556 = vxpose.xlu0.b32.cont [12/16] 0.0, 128
    %1557 = vxpose.xlu0.b32.cont [13/16] 0.0, 128
    %1558 = vxpose.xlu0.b32.cont [14/16] 0.0, 128
    %1559 = vxpose.xlu0.b32.cont [15/16] 0.0, 128
    %1560 = vxpose.xlu0.b32.end [16/16] 0.0, 128
    %v1561 = vpop.trf.xlu0
    %v1562 = vpop.trf.xlu0
    %v1563 = vpop.trf.xlu0
    %v1564 = vpop.trf.xlu0
    %v1565 = vpop.trf.xlu0
    %v1566 = vpop.trf.xlu0
    %v1567 = vpop.trf.xlu0
    %v1568 = vpop.trf.xlu0
    %v1569 = vpop.trf.xlu0
    %v1570 = vpop.trf.xlu0
    %v1571 = vpop.trf.xlu0
    %v1572 = vpop.trf.xlu0
    %v1573 = vpop.trf.xlu0
    %v1574 = vpop.trf.xlu0
    %v1575 = vpop.trf.xlu0
    %v1576 = vpop.trf.xlu0
    %1577 = vxpose.xlu0.b32.start [1/16] %v1345, 128
    %1578 = vxpose.xlu0.b32.cont [2/16] %v1350, 128
    %1579 = vxpose.xlu0.b32.cont [3/16] 0.0, 128
    %1580 = vxpose.xlu0.b32.cont [4/16] 0.0, 128
    %1581 = vxpose.xlu0.b32.cont [5/16] 0.0, 128
    %1582 = vxpose.xlu0.b32.cont [6/16] 0.0, 128
    %1583 = vxpose.xlu0.b32.cont [7/16] 0.0, 128
    %1584 = vxpose.xlu0.b32.cont [8/16] 0.0, 128
    %1585 = vxpose.xlu0.b32.cont [9/16] 0.0, 128
    %1586 = vxpose.xlu0.b32.cont [10/16] 0.0, 128
    %1587 = vxpose.xlu0.b32.cont [11/16] 0.0, 128
    %1588 = vxpose.xlu0.b32.cont [12/16] 0.0, 128
    %1589 = vxpose.xlu0.b32.cont [13/16] 0.0, 128
    %1590 = vxpose.xlu0.b32.cont [14/16] 0.0, 128
    %1591 = vxpose.xlu0.b32.cont [15/16] 0.0, 128
    %1592 = vxpose.xlu0.b32.end [16/16] 0.0, 128
    %v1593 = vpop.trf.xlu0
    %v1594 = vpop.trf.xlu0
    %v1595 = vpop.trf.xlu0
    %v1596 = vpop.trf.xlu0
    %v1597 = vpop.trf.xlu0
    %v1598 = vpop.trf.xlu0
    %v1599 = vpop.trf.xlu0
    %v1600 = vpop.trf.xlu0
    %v1601 = vpop.trf.xlu0
    %v1602 = vpop.trf.xlu0
    %v1603 = vpop.trf.xlu0
    %v1604 = vpop.trf.xlu0
    %v1605 = vpop.trf.xlu0
    %v1606 = vpop.trf.xlu0
    %v1607 = vpop.trf.xlu0
    %v1608 = vpop.trf.xlu0
    %v1610 = vsel %vm418, %v1369, 0
    %v1613 = vsel %vm418, %v1370, 0
    %v1616 = vsel %vm418, %v1401, 0
    %v1619 = vsel %vm418, %v1402, 0
    %v1622 = vsel %vm418, %v1433, 0
    %v1625 = vsel %vm418, %v1434, 0
    %v1628 = vsel %vm418, %v1465, 0
    %v1631 = vsel %vm418, %v1466, 0
    %v1634 = vsel %vm418, %v1497, 0
    %v1637 = vsel %vm418, %v1498, 0
    %v1640 = vsel %vm418, %v1529, 0
    %v1643 = vsel %vm418, %v1530, 0
    %v1646 = vsel %vm418, %v1561, 0
    %v1649 = vsel %vm418, %v1562, 0
    %v1652 = vsel %vm418, %v1593, 0
    %v1655 = vsel %vm418, %v1594, 0
    %1657 = vmatprep.subr.mxu0 0.0
    %1658 = vmatpush1.msra.mxu0 %v109
    %1659 = vmatprep.subr.mxu0 0.0
    %1660 = vmatpush1.msra.mxu0 %v110
    %1661 = vmatprep.subr.mxu0 0.0
    %1662 = vmatpush1.msra.mxu0 0.0
    %1663 = vmatprep.subr.mxu0 0.0
    %1664 = vmatpush1.msra.mxu0 0.0
    %1665 = vmatprep.subr.mxu0 0.0
    %1666 = vmatpush1.msra.mxu0 0.0
    %1667 = vmatprep.subr.mxu0 0.0
    %1668 = vmatpush1.msra.mxu0 0.0
    %1669 = vmatprep.subr.mxu0 0.0
    %1670 = vmatpush1.msra.mxu0 0.0
    %1671 = vmatprep.subr.mxu0 0.0
    %1672 = vmatpush1.msra.mxu0 0.0
    %1673 = vmatprep.subr.mxu0 0.0
    %1674 = vmatpush1.msra.mxu0 0.0
    %1675 = vmatprep.subr.mxu0 0.0
    %1676 = vmatpush1.msra.mxu0 0.0
    %1677 = vmatprep.subr.mxu0 0.0
    %1678 = vmatpush1.msra.mxu0 0.0
    %1679 = vmatprep.subr.mxu0 0.0
    %1680 = vmatpush1.msra.mxu0 0.0
    %1681 = vmatprep.subr.mxu0 0.0
    %1682 = vmatpush1.msra.mxu0 0.0
    %1683 = vmatprep.subr.mxu0 0.0
    %1684 = vmatpush1.msra.mxu0 0.0
    %1685 = vmatprep.subr.mxu0 0.0
    %1686 = vmatpush1.msra.mxu0 0.0
    %1687 = vmatprep.subr.mxu0 0.0
    %1688 = vmatpush1.msra.mxu0 0.0
    %1689 = vmatprep.subr.mxu0 0.0
    %1690 = vmatpush1.msra.mxu0 0.0
    %1691 = vmatprep.subr.mxu0 0.0
    %1692 = vmatpush1.msra.mxu0 0.0
    %1693 = vmatprep.subr.mxu0 0.0
    %1694 = vmatpush1.msra.mxu0 0.0
    %1695 = vmatprep.subr.mxu0 0.0
    %1696 = vmatpush1.msra.mxu0 0.0
    %1697 = vmatprep.subr.mxu0 0.0
    %1698 = vmatpush1.msra.mxu0 0.0
    %1699 = vmatprep.subr.mxu0 0.0
    %1700 = vmatpush1.msra.mxu0 0.0
    %1701 = vmatprep.subr.mxu0 0.0
    %1702 = vmatpush1.msra.mxu0 0.0
    %1703 = vmatprep.subr.mxu0 0.0
    %1704 = vmatpush1.msra.mxu0 0.0
    %1705 = vmatprep.subr.mxu0 0.0
    %1706 = vmatpush1.msra.mxu0 0.0
    %1707 = vmatprep.subr.mxu0 0.0
    %1708 = vmatpush1.msra.mxu0 0.0
    %1709 = vmatprep.subr.mxu0 0.0
    %1710 = vmatpush1.msra.mxu0 0.0
    %1711 = vmatprep.subr.mxu0 0.0
    %1712 = vmatpush1.msra.mxu0 0.0
    %1713 = vmatprep.subr.mxu0 0.0
    %1714 = vmatpush1.msra.mxu0 0.0
    %1715 = vmatprep.subr.mxu0 0.0
    %1716 = vmatpush1.msra.mxu0 0.0
    %1717 = vmatprep.subr.mxu0 0.0
    %1718 = vmatpush1.msra.mxu0 0.0
    %1719 = vmatprep.subr.mxu0 0.0
    %1720 = vmatpush1.msra.mxu0 0.0
    %1721 = vmatprep.mubr.f32.mxu0 0.0
    %1722 = vmatmul.mubr.f32.gmra.mrb[0].mxu0 %v1610
    %v1723 = vpop.f32.mrb[0].mxu0
    %v1724 = vadd.f32 0.0, %v1723
    %v1725 = vpop.f32.mrb[0].mxu0
    %1726 = vmatprep.mubr.f32.mxu0 0.0
    %1727 = vmatmul.mubr.f32.gmra.mrb[0].mxu0 %v1613
    %v1728 = vpop.f32.mrb[0].mxu0
    %v1729 = vadd.f32 0.0, %v1728
    %v1730 = vpop.f32.mrb[0].mxu0
    %1731 = vmatprep.mubr.f32.mxu0 0.0
    %1732 = vmatmul.mubr.f32.gmra.mrb[0].mxu0 %v1616
    %v1733 = vpop.f32.mrb[0].mxu0
    %v1734 = vadd.f32 0.0, %v1733
    %v1735 = vpop.f32.mrb[0].mxu0
    %1736 = vmatprep.mubr.f32.mxu0 0.0
    %1737 = vmatmul.mubr.f32.gmra.mrb[0].mxu0 %v1619
    %v1738 = vpop.f32.mrb[0].mxu0
    %v1739 = vadd.f32 0.0, %v1738
    %v1740 = vpop.f32.mrb[0].mxu0
    %1741 = vmatprep.mubr.f32.mxu0 0.0
    %1742 = vmatmul.mubr.f32.gmra.mrb[0].mxu0 %v1622
    %v1743 = vpop.f32.mrb[0].mxu0
    %v1744 = vadd.f32 0.0, %v1743
    %v1745 = vpop.f32.mrb[0].mxu0
    %1746 = vmatprep.mubr.f32.mxu0 0.0
    %1747 = vmatmul.mubr.f32.gmra.mrb[0].mxu0 %v1625
    %v1748 = vpop.f32.mrb[0].mxu0
    %v1749 = vadd.f32 0.0, %v1748
    %v1750 = vpop.f32.mrb[0].mxu0
    %1751 = vmatprep.mubr.f32.mxu0 0.0
    %1752 = vmatmul.mubr.f32.gmra.mrb[0].mxu0 %v1628
    %v1753 = vpop.f32.mrb[0].mxu0
    %v1754 = vadd.f32 0.0, %v1753
    %v1755 = vpop.f32.mrb[0].mxu0
    %1756 = vmatprep.mubr.f32.mxu0 0.0
    %1757 = vmatmul.mubr.f32.gmra.mrb[0].mxu0 %v1631
    %v1758 = vpop.f32.mrb[0].mxu0
    %v1759 = vadd.f32 0.0, %v1758
    %v1760 = vpop.f32.mrb[0].mxu0
    %1761 = vmatprep.mubr.f32.mxu0 0.0
    %1762 = vmatmul.mubr.f32.gmra.mrb[0].mxu0 %v1634
    %v1763 = vpop.f32.mrb[0].mxu0
    %v1764 = vadd.f32 0.0, %v1763
    %v1765 = vpop.f32.mrb[0].mxu0
    %1766 = vmatprep.mubr.f32.mxu0 0.0
    %1767 = vmatmul.mubr.f32.gmra.mrb[0].mxu0 %v1637
    %v1768 = vpop.f32.mrb[0].mxu0
    %v1769 = vadd.f32 0.0, %v1768
    %v1770 = vpop.f32.mrb[0].mxu0
    %1771 = vmatprep.mubr.f32.mxu0 0.0
    %1772 = vmatmul.mubr.f32.gmra.mrb[0].mxu0 %v1640
    %v1773 = vpop.f32.mrb[0].mxu0
    %v1774 = vadd.f32 0.0, %v1773
    %v1775 = vpop.f32.mrb[0].mxu0
    %1776 = vmatprep.mubr.f32.mxu0 0.0
    %1777 = vmatmul.mubr.f32.gmra.mrb[0].mxu0 %v1643
    %v1778 = vpop.f32.mrb[0].mxu0
    %v1779 = vadd.f32 0.0, %v1778
    %v1780 = vpop.f32.mrb[0].mxu0
    %1781 = vmatprep.mubr.f32.mxu0 0.0
    %1782 = vmatmul.mubr.f32.gmra.mrb[0].mxu0 %v1646
    %v1783 = vpop.f32.mrb[0].mxu0
    %v1784 = vadd.f32 0.0, %v1783
    %v1785 = vpop.f32.mrb[0].mxu0
    %1786 = vmatprep.mubr.f32.mxu0 0.0
    %1787 = vmatmul.mubr.f32.gmra.mrb[0].mxu0 %v1649
    %v1788 = vpop.f32.mrb[0].mxu0
    %v1789 = vadd.f32 0.0, %v1788
    %v1790 = vpop.f32.mrb[0].mxu0
    %1791 = vmatprep.mubr.f32.mxu0 0.0
    %1792 = vmatmul.mubr.f32.gmra.mrb[0].mxu0 %v1652
    %v1793 = vpop.f32.mrb[0].mxu0
    %v1794 = vadd.f32 0.0, %v1793
    %v1795 = vpop.f32.mrb[0].mxu0
    %1796 = vmatprep.mubr.f32.mxu0 0.0
    %1797 = vmatmul.mubr.f32.gmra.mrb[0].mxu0 %v1655
    %v1798 = vpop.f32.mrb[0].mxu0
    %v1799 = vadd.f32 0.0, %v1798
    %v1800 = vpop.f32.mrb[0].mxu0
    %1801 = vdwg.mxu0
    %v1802 = vmul.f32 %v470, %v470
    %v1803 = vmul.f32 %v471, %v471
    %v1804 = vmul.f32 %v472, %v472
    %v1805 = vmul.f32 %v473, %v473
    %v1806 = vmul.f32 %v474, %v474
    %v1807 = vmul.f32 %v475, %v475
    %v1808 = vmul.f32 %v476, %v476
    %v1809 = vmul.f32 %v477, %v477
    %v1810 = vmul.f32 %v478, %v478
    %v1811 = vmul.f32 %v479, %v479
    %v1812 = vmul.f32 %v480, %v480
    %v1813 = vmul.f32 %v481, %v481
    %v1814 = vmul.f32 %v482, %v482
    %v1815 = vmul.f32 %v483, %v483
    %v1816 = vmul.f32 %v484, %v484
    %v1817 = vmul.f32 %v485, %v485
    %v1819 = vsel %vm418, %v1802, 0
    %v1822 = vsel %vm418, %v1803, 0
    %v1825 = vsel %vm418, %v1804, 0
    %v1828 = vsel %vm418, %v1805, 0
    %v1831 = vsel %vm418, %v1806, 0
    %v1834 = vsel %vm418, %v1807, 0
    %v1837 = vsel %vm418, %v1808, 0
    %v1840 = vsel %vm418, %v1809, 0
    %v1843 = vsel %vm418, %v1810, 0
    %v1846 = vsel %vm418, %v1811, 0
    %v1849 = vsel %vm418, %v1812, 0
    %v1852 = vsel %vm418, %v1813, 0
    %v1855 = vsel %vm418, %v1814, 0
    %v1858 = vsel %vm418, %v1815, 0
    %v1861 = vsel %vm418, %v1816, 0
    %v1864 = vsel %vm418, %v1817, 0
    %1866 = vmatprep.subr.mxu0 0.0
    %1867 = vmatpush1.msra.mxu0 %v109
    %1868 = vmatprep.subr.mxu0 0.0
    %1869 = vmatpush1.msra.mxu0 %v110
    %1870 = vmatprep.subr.mxu0 0.0
    %1871 = vmatpush1.msra.mxu0 0.0
    %1872 = vmatprep.subr.mxu0 0.0
    %1873 = vmatpush1.msra.mxu0 0.0
    %1874 = vmatprep.subr.mxu0 0.0
    %1875 = vmatpush1.msra.mxu0 0.0
    %1876 = vmatprep.subr.mxu0 0.0
    %1877 = vmatpush1.msra.mxu0 0.0
    %1878 = vmatprep.subr.mxu0 0.0
    %1879 = vmatpush1.msra.mxu0 0.0
    %1880 = vmatprep.subr.mxu0 0.0
    %1881 = vmatpush1.msra.mxu0 0.0
    %1882 = vmatprep.subr.mxu0 0.0
    %1883 = vmatpush1.msra.mxu0 0.0
    %1884 = vmatprep.subr.mxu0 0.0
    %1885 = vmatpush1.msra.mxu0 0.0
    %1886 = vmatprep.subr.mxu0 0.0
    %1887 = vmatpush1.msra.mxu0 0.0
    %1888 = vmatprep.subr.mxu0 0.0
    %1889 = vmatpush1.msra.mxu0 0.0
    %1890 = vmatprep.subr.mxu0 0.0
    %1891 = vmatpush1.msra.mxu0 0.0
    %1892 = vmatprep.subr.mxu0 0.0
    %1893 = vmatpush1.msra.mxu0 0.0
    %1894 = vmatprep.subr.mxu0 0.0
    %1895 = vmatpush1.msra.mxu0 0.0
    %1896 = vmatprep.subr.mxu0 0.0
    %1897 = vmatpush1.msra.mxu0 0.0
    %1898 = vmatprep.subr.mxu0 0.0
    %1899 = vmatpush1.msra.mxu0 0.0
    %1900 = vmatprep.subr.mxu0 0.0
    %1901 = vmatpush1.msra.mxu0 0.0
    %1902 = vmatprep.subr.mxu0 0.0
    %1903 = vmatpush1.msra.mxu0 0.0
    %1904 = vmatprep.subr.mxu0 0.0
    %1905 = vmatpush1.msra.mxu0 0.0
    %1906 = vmatprep.subr.mxu0 0.0
    %1907 = vmatpush1.msra.mxu0 0.0
    %1908 = vmatprep.subr.mxu0 0.0
    %1909 = vmatpush1.msra.mxu0 0.0
    %1910 = vmatprep.subr.mxu0 0.0
    %1911 = vmatpush1.msra.mxu0 0.0
    %1912 = vmatprep.subr.mxu0 0.0
    %1913 = vmatpush1.msra.mxu0 0.0
    %1914 = vmatprep.subr.mxu0 0.0
    %1915 = vmatpush1.msra.mxu0 0.0
    %1916 = vmatprep.subr.mxu0 0.0
    %1917 = vmatpush1.msra.mxu0 0.0
    %1918 = vmatprep.subr.mxu0 0.0
    %1919 = vmatpush1.msra.mxu0 0.0
    %1920 = vmatprep.subr.mxu0 0.0
    %1921 = vmatpush1.msra.mxu0 0.0
    %1922 = vmatprep.subr.mxu0 0.0
    %1923 = vmatpush1.msra.mxu0 0.0
    %1924 = vmatprep.subr.mxu0 0.0
    %1925 = vmatpush1.msra.mxu0 0.0
    %1926 = vmatprep.subr.mxu0 0.0
    %1927 = vmatpush1.msra.mxu0 0.0
    %1928 = vmatprep.subr.mxu0 0.0
    %1929 = vmatpush1.msra.mxu0 0.0
    %1930 = vmatprep.mubr.f32.mxu0 0.0
    %1931 = vmatmul.mubr.f32.gmra.mrb[0].mxu0 %v1819
    %v1932 = vpop.f32.mrb[0].mxu0
    %v1933 = vadd.f32 0.0, %v1932
    %v1934 = vpop.f32.mrb[0].mxu0
    %1935 = vmatprep.mubr.f32.mxu0 0.0
    %1936 = vmatmul.mubr.f32.gmra.mrb[0].mxu0 %v1822
    %v1937 = vpop.f32.mrb[0].mxu0
    %v1938 = vadd.f32 0.0, %v1937
    %v1939 = vpop.f32.mrb[0].mxu0
    %1940 = vmatprep.mubr.f32.mxu0 0.0
    %1941 = vmatmul.mubr.f32.gmra.mrb[0].mxu0 %v1825
    %v1942 = vpop.f32.mrb[0].mxu0
    %v1943 = vadd.f32 0.0, %v1942
    %v1944 = vpop.f32.mrb[0].mxu0
    %1945 = vmatprep.mubr.f32.mxu0 0.0
    %1946 = vmatmul.mubr.f32.gmra.mrb[0].mxu0 %v1828
    %v1947 = vpop.f32.mrb[0].mxu0
    %v1948 = vadd.f32 0.0, %v1947
    %v1949 = vpop.f32.mrb[0].mxu0
    %1950 = vmatprep.mubr.f32.mxu0 0.0
    %1951 = vmatmul.mubr.f32.gmra.mrb[0].mxu0 %v1831
    %v1952 = vpop.f32.mrb[0].mxu0
    %v1953 = vadd.f32 0.0, %v1952
    %v1954 = vpop.f32.mrb[0].mxu0
    %1955 = vmatprep.mubr.f32.mxu0 0.0
    %1956 = vmatmul.mubr.f32.gmra.mrb[0].mxu0 %v1834
    %v1957 = vpop.f32.mrb[0].mxu0
    %v1958 = vadd.f32 0.0, %v1957
    %v1959 = vpop.f32.mrb[0].mxu0
    %1960 = vmatprep.mubr.f32.mxu0 0.0
    %1961 = vmatmul.mubr.f32.gmra.mrb[0].mxu0 %v1837
    %v1962 = vpop.f32.mrb[0].mxu0
    %v1963 = vadd.f32 0.0, %v1962
    %v1964 = vpop.f32.mrb[0].mxu0
    %1965 = vmatprep.mubr.f32.mxu0 0.0
    %1966 = vmatmul.mubr.f32.gmra.mrb[0].mxu0 %v1840
    %v1967 = vpop.f32.mrb[0].mxu0
    %v1968 = vadd.f32 0.0, %v1967
    %v1969 = vpop.f32.mrb[0].mxu0
    %1970 = vmatprep.mubr.f32.mxu0 0.0
    %1971 = vmatmul.mubr.f32.gmra.mrb[0].mxu0 %v1843
    %v1972 = vpop.f32.mrb[0].mxu0
    %v1973 = vadd.f32 0.0, %v1972
    %v1974 = vpop.f32.mrb[0].mxu0
    %1975 = vmatprep.mubr.f32.mxu0 0.0
    %1976 = vmatmul.mubr.f32.gmra.mrb[0].mxu0 %v1846
    %v1977 = vpop.f32.mrb[0].mxu0
    %v1978 = vadd.f32 0.0, %v1977
    %v1979 = vpop.f32.mrb[0].mxu0
    %1980 = vmatprep.mubr.f32.mxu0 0.0
    %1981 = vmatmul.mubr.f32.gmra.mrb[0].mxu0 %v1849
    %v1982 = vpop.f32.mrb[0].mxu0
    %v1983 = vadd.f32 0.0, %v1982
    %v1984 = vpop.f32.mrb[0].mxu0
    %1985 = vmatprep.mubr.f32.mxu0 0.0
    %1986 = vmatmul.mubr.f32.gmra.mrb[0].mxu0 %v1852
    %v1987 = vpop.f32.mrb[0].mxu0
    %v1988 = vadd.f32 0.0, %v1987
    %v1989 = vpop.f32.mrb[0].mxu0
    %1990 = vmatprep.mubr.f32.mxu0 0.0
    %1991 = vmatmul.mubr.f32.gmra.mrb[0].mxu0 %v1855
    %v1992 = vpop.f32.mrb[0].mxu0
    %v1993 = vadd.f32 0.0, %v1992
    %v1994 = vpop.f32.mrb[0].mxu0
    %1995 = vmatprep.mubr.f32.mxu0 0.0
    %1996 = vmatmul.mubr.f32.gmra.mrb[0].mxu0 %v1858
    %v1997 = vpop.f32.mrb[0].mxu0
    %v1998 = vadd.f32 0.0, %v1997
    %v1999 = vpop.f32.mrb[0].mxu0
    %2000 = vmatprep.mubr.f32.mxu0 0.0
    %2001 = vmatmul.mubr.f32.gmra.mrb[0].mxu0 %v1861
    %v2002 = vpop.f32.mrb[0].mxu0
    %v2003 = vadd.f32 0.0, %v2002
    %v2004 = vpop.f32.mrb[0].mxu0
    %2005 = vmatprep.mubr.f32.mxu0 0.0
    %2006 = vmatmul.mubr.f32.gmra.mrb[0].mxu0 %v1864
    %v2007 = vpop.f32.mrb[0].mxu0
    %v2008 = vadd.f32 0.0, %v2007
    %v2009 = vpop.f32.mrb[0].mxu0
    %2010 = vdwg.mxu0
    %2011 = vxpose.xlu0.b32.start [1/16] %v1933, 128
    %2012 = vxpose.xlu0.b32.cont [2/16] %v1938, 128
    %2013 = vxpose.xlu0.b32.cont [3/16] 0.0, 128
    %2014 = vxpose.xlu0.b32.cont [4/16] 0.0, 128
    %2015 = vxpose.xlu0.b32.cont [5/16] 0.0, 128
    %2016 = vxpose.xlu0.b32.cont [6/16] 0.0, 128
    %2017 = vxpose.xlu0.b32.cont [7/16] 0.0, 128
    %2018 = vxpose.xlu0.b32.cont [8/16] 0.0, 128
    %2019 = vxpose.xlu0.b32.cont [9/16] 0.0, 128
    %2020 = vxpose.xlu0.b32.cont [10/16] 0.0, 128
    %2021 = vxpose.xlu0.b32.cont [11/16] 0.0, 128
    %2022 = vxpose.xlu0.b32.cont [12/16] 0.0, 128
    %2023 = vxpose.xlu0.b32.cont [13/16] 0.0, 128
    %2024 = vxpose.xlu0.b32.cont [14/16] 0.0, 128
    %2025 = vxpose.xlu0.b32.cont [15/16] 0.0, 128
    %2026 = vxpose.xlu0.b32.end [16/16] 0.0, 128
    %v2027 = vpop.trf.xlu0
    %v2028 = vpop.trf.xlu0
    %v2029 = vpop.trf.xlu0
    %v2030 = vpop.trf.xlu0
    %v2031 = vpop.trf.xlu0
    %v2032 = vpop.trf.xlu0
    %v2033 = vpop.trf.xlu0
    %v2034 = vpop.trf.xlu0
    %v2035 = vpop.trf.xlu0
    %v2036 = vpop.trf.xlu0
    %v2037 = vpop.trf.xlu0
    %v2038 = vpop.trf.xlu0
    %v2039 = vpop.trf.xlu0
    %v2040 = vpop.trf.xlu0
    %v2041 = vpop.trf.xlu0
    %v2042 = vpop.trf.xlu0
    %2043 = vxpose.xlu0.b32.start [1/16] %v1943, 128
    %2044 = vxpose.xlu0.b32.cont [2/16] %v1948, 128
    %2045 = vxpose.xlu0.b32.cont [3/16] 0.0, 128
    %2046 = vxpose.xlu0.b32.cont [4/16] 0.0, 128
    %2047 = vxpose.xlu0.b32.cont [5/16] 0.0, 128
    %2048 = vxpose.xlu0.b32.cont [6/16] 0.0, 128
    %2049 = vxpose.xlu0.b32.cont [7/16] 0.0, 128
    %2050 = vxpose.xlu0.b32.cont [8/16] 0.0, 128
    %2051 = vxpose.xlu0.b32.cont [9/16] 0.0, 128
    %2052 = vxpose.xlu0.b32.cont [10/16] 0.0, 128
    %2053 = vxpose.xlu0.b32.cont [11/16] 0.0, 128
    %2054 = vxpose.xlu0.b32.cont [12/16] 0.0, 128
    %2055 = vxpose.xlu0.b32.cont [13/16] 0.0, 128
    %2056 = vxpose.xlu0.b32.cont [14/16] 0.0, 128
    %2057 = vxpose.xlu0.b32.cont [15/16] 0.0, 128
    %2058 = vxpose.xlu0.b32.end [16/16] 0.0, 128
    %v2059 = vpop.trf.xlu0
    %v2060 = vpop.trf.xlu0
    %v2061 = vpop.trf.xlu0
    %v2062 = vpop.trf.xlu0
    %v2063 = vpop.trf.xlu0
    %v2064 = vpop.trf.xlu0
    %v2065 = vpop.trf.xlu0
    %v2066 = vpop.trf.xlu0
    %v2067 = vpop.trf.xlu0
    %v2068 = vpop.trf.xlu0
    %v2069 = vpop.trf.xlu0
    %v2070 = vpop.trf.xlu0
    %v2071 = vpop.trf.xlu0
    %v2072 = vpop.trf.xlu0
    %v2073 = vpop.trf.xlu0
    %v2074 = vpop.trf.xlu0
    %2075 = vxpose.xlu0.b32.start [1/16] %v1953, 128
    %2076 = vxpose.xlu0.b32.cont [2/16] %v1958, 128
    %2077 = vxpose.xlu0.b32.cont [3/16] 0.0, 128
    %2078 = vxpose.xlu0.b32.cont [4/16] 0.0, 128
    %2079 = vxpose.xlu0.b32.cont [5/16] 0.0, 128
    %2080 = vxpose.xlu0.b32.cont [6/16] 0.0, 128
    %2081 = vxpose.xlu0.b32.cont [7/16] 0.0, 128
    %2082 = vxpose.xlu0.b32.cont [8/16] 0.0, 128
    %2083 = vxpose.xlu0.b32.cont [9/16] 0.0, 128
    %2084 = vxpose.xlu0.b32.cont [10/16] 0.0, 128
    %2085 = vxpose.xlu0.b32.cont [11/16] 0.0, 128
    %2086 = vxpose.xlu0.b32.cont [12/16] 0.0, 128
    %2087 = vxpose.xlu0.b32.cont [13/16] 0.0, 128
    %2088 = vxpose.xlu0.b32.cont [14/16] 0.0, 128
    %2089 = vxpose.xlu0.b32.cont [15/16] 0.0, 128
    %2090 = vxpose.xlu0.b32.end [16/16] 0.0, 128
    %v2091 = vpop.trf.xlu0
    %v2092 = vpop.trf.xlu0
    %v2093 = vpop.trf.xlu0
    %v2094 = vpop.trf.xlu0
    %v2095 = vpop.trf.xlu0
    %v2096 = vpop.trf.xlu0
    %v2097 = vpop.trf.xlu0
    %v2098 = vpop.trf.xlu0
    %v2099 = vpop.trf.xlu0
    %v2100 = vpop.trf.xlu0
    %v2101 = vpop.trf.xlu0
    %v2102 = vpop.trf.xlu0
    %v2103 = vpop.trf.xlu0
    %v2104 = vpop.trf.xlu0
    %v2105 = vpop.trf.xlu0
    %v2106 = vpop.trf.xlu0
    %2107 = vxpose.xlu0.b32.start [1/16] %v1963, 128
    %2108 = vxpose.xlu0.b32.cont [2/16] %v1968, 128
    %2109 = vxpose.xlu0.b32.cont [3/16] 0.0, 128
    %2110 = vxpose.xlu0.b32.cont [4/16] 0.0, 128
    %2111 = vxpose.xlu0.b32.cont [5/16] 0.0, 128
    %2112 = vxpose.xlu0.b32.cont [6/16] 0.0, 128
    %2113 = vxpose.xlu0.b32.cont [7/16] 0.0, 128
    %2114 = vxpose.xlu0.b32.cont [8/16] 0.0, 128
    %2115 = vxpose.xlu0.b32.cont [9/16] 0.0, 128
    %2116 = vxpose.xlu0.b32.cont [10/16] 0.0, 128
    %2117 = vxpose.xlu0.b32.cont [11/16] 0.0, 128
    %2118 = vxpose.xlu0.b32.cont [12/16] 0.0, 128
    %2119 = vxpose.xlu0.b32.cont [13/16] 0.0, 128
    %2120 = vxpose.xlu0.b32.cont [14/16] 0.0, 128
    %2121 = vxpose.xlu0.b32.cont [15/16] 0.0, 128
    %2122 = vxpose.xlu0.b32.end [16/16] 0.0, 128
    %v2123 = vpop.trf.xlu0
    %v2124 = vpop.trf.xlu0
    %v2125 = vpop.trf.xlu0
    %v2126 = vpop.trf.xlu0
    %v2127 = vpop.trf.xlu0
    %v2128 = vpop.trf.xlu0
    %v2129 = vpop.trf.xlu0
    %v2130 = vpop.trf.xlu0
    %v2131 = vpop.trf.xlu0
    %v2132 = vpop.trf.xlu0
    %v2133 = vpop.trf.xlu0
    %v2134 = vpop.trf.xlu0
    %v2135 = vpop.trf.xlu0
    %v2136 = vpop.trf.xlu0
    %v2137 = vpop.trf.xlu0
    %v2138 = vpop.trf.xlu0
    %2139 = vxpose.xlu0.b32.start [1/16] %v1973, 128
    %2140 = vxpose.xlu0.b32.cont [2/16] %v1978, 128
    %2141 = vxpose.xlu0.b32.cont [3/16] 0.0, 128
    %2142 = vxpose.xlu0.b32.cont [4/16] 0.0, 128
    %2143 = vxpose.xlu0.b32.cont [5/16] 0.0, 128
    %2144 = vxpose.xlu0.b32.cont [6/16] 0.0, 128
    %2145 = vxpose.xlu0.b32.cont [7/16] 0.0, 128
    %2146 = vxpose.xlu0.b32.cont [8/16] 0.0, 128
    %2147 = vxpose.xlu0.b32.cont [9/16] 0.0, 128
    %2148 = vxpose.xlu0.b32.cont [10/16] 0.0, 128
    %2149 = vxpose.xlu0.b32.cont [11/16] 0.0, 128
    %2150 = vxpose.xlu0.b32.cont [12/16] 0.0, 128
    %2151 = vxpose.xlu0.b32.cont [13/16] 0.0, 128
    %2152 = vxpose.xlu0.b32.cont [14/16] 0.0, 128
    %2153 = vxpose.xlu0.b32.cont [15/16] 0.0, 128
    %2154 = vxpose.xlu0.b32.end [16/16] 0.0, 128
    %v2155 = vpop.trf.xlu0
    %v2156 = vpop.trf.xlu0
    %v2157 = vpop.trf.xlu0
    %v2158 = vpop.trf.xlu0
    %v2159 = vpop.trf.xlu0
    %v2160 = vpop.trf.xlu0
    %v2161 = vpop.trf.xlu0
    %v2162 = vpop.trf.xlu0
    %v2163 = vpop.trf.xlu0
    %v2164 = vpop.trf.xlu0
    %v2165 = vpop.trf.xlu0
    %v2166 = vpop.trf.xlu0
    %v2167 = vpop.trf.xlu0
    %v2168 = vpop.trf.xlu0
    %v2169 = vpop.trf.xlu0
    %v2170 = vpop.trf.xlu0
    %2171 = vxpose.xlu0.b32.start [1/16] %v1983, 128
    %2172 = vxpose.xlu0.b32.cont [2/16] %v1988, 128
    %2173 = vxpose.xlu0.b32.cont [3/16] 0.0, 128
    %2174 = vxpose.xlu0.b32.cont [4/16] 0.0, 128
    %2175 = vxpose.xlu0.b32.cont [5/16] 0.0, 128
    %2176 = vxpose.xlu0.b32.cont [6/16] 0.0, 128
    %2177 = vxpose.xlu0.b32.cont [7/16] 0.0, 128
    %2178 = vxpose.xlu0.b32.cont [8/16] 0.0, 128
    %2179 = vxpose.xlu0.b32.cont [9/16] 0.0, 128
    %2180 = vxpose.xlu0.b32.cont [10/16] 0.0, 128
    %2181 = vxpose.xlu0.b32.cont [11/16] 0.0, 128
    %2182 = vxpose.xlu0.b32.cont [12/16] 0.0, 128
    %2183 = vxpose.xlu0.b32.cont [13/16] 0.0, 128
    %2184 = vxpose.xlu0.b32.cont [14/16] 0.0, 128
    %2185 = vxpose.xlu0.b32.cont [15/16] 0.0, 128
    %2186 = vxpose.xlu0.b32.end [16/16] 0.0, 128
    %v2187 = vpop.trf.xlu0
    %v2188 = vpop.trf.xlu0
    %v2189 = vpop.trf.xlu0
    %v2190 = vpop.trf.xlu0
    %v2191 = vpop.trf.xlu0
    %v2192 = vpop.trf.xlu0
    %v2193 = vpop.trf.xlu0
    %v2194 = vpop.trf.xlu0
    %v2195 = vpop.trf.xlu0
    %v2196 = vpop.trf.xlu0
    %v2197 = vpop.trf.xlu0
    %v2198 = vpop.trf.xlu0
    %v2199 = vpop.trf.xlu0
    %v2200 = vpop.trf.xlu0
    %v2201 = vpop.trf.xlu0
    %v2202 = vpop.trf.xlu0
    %2203 = vxpose.xlu0.b32.start [1/16] %v1993, 128
    %2204 = vxpose.xlu0.b32.cont [2/16] %v1998, 128
    %2205 = vxpose.xlu0.b32.cont [3/16] 0.0, 128
    %2206 = vxpose.xlu0.b32.cont [4/16] 0.0, 128
    %2207 = vxpose.xlu0.b32.cont [5/16] 0.0, 128
    %2208 = vxpose.xlu0.b32.cont [6/16] 0.0, 128
    %2209 = vxpose.xlu0.b32.cont [7/16] 0.0, 128
    %2210 = vxpose.xlu0.b32.cont [8/16] 0.0, 128
    %2211 = vxpose.xlu0.b32.cont [9/16] 0.0, 128
    %2212 = vxpose.xlu0.b32.cont [10/16] 0.0, 128
    %2213 = vxpose.xlu0.b32.cont [11/16] 0.0, 128
    %2214 = vxpose.xlu0.b32.cont [12/16] 0.0, 128
    %2215 = vxpose.xlu0.b32.cont [13/16] 0.0, 128
    %2216 = vxpose.xlu0.b32.cont [14/16] 0.0, 128
    %2217 = vxpose.xlu0.b32.cont [15/16] 0.0, 128
    %2218 = vxpose.xlu0.b32.end [16/16] 0.0, 128
    %v2219 = vpop.trf.xlu0
    %v2220 = vpop.trf.xlu0
    %v2221 = vpop.trf.xlu0
    %v2222 = vpop.trf.xlu0
    %v2223 = vpop.trf.xlu0
    %v2224 = vpop.trf.xlu0
    %v2225 = vpop.trf.xlu0
    %v2226 = vpop.trf.xlu0
    %v2227 = vpop.trf.xlu0
    %v2228 = vpop.trf.xlu0
    %v2229 = vpop.trf.xlu0
    %v2230 = vpop.trf.xlu0
    %v2231 = vpop.trf.xlu0
    %v2232 = vpop.trf.xlu0
    %v2233 = vpop.trf.xlu0
    %v2234 = vpop.trf.xlu0
    %2235 = vxpose.xlu0.b32.start [1/16] %v2003, 128
    %2236 = vxpose.xlu0.b32.cont [2/16] %v2008, 128
    %2237 = vxpose.xlu0.b32.cont [3/16] 0.0, 128
    %2238 = vxpose.xlu0.b32.cont [4/16] 0.0, 128
    %2239 = vxpose.xlu0.b32.cont [5/16] 0.0, 128
    %2240 = vxpose.xlu0.b32.cont [6/16] 0.0, 128
    %2241 = vxpose.xlu0.b32.cont [7/16] 0.0, 128
    %2242 = vxpose.xlu0.b32.cont [8/16] 0.0, 128
    %2243 = vxpose.xlu0.b32.cont [9/16] 0.0, 128
    %2244 = vxpose.xlu0.b32.cont [10/16] 0.0, 128
    %2245 = vxpose.xlu0.b32.cont [11/16] 0.0, 128
    %2246 = vxpose.xlu0.b32.cont [12/16] 0.0, 128
    %2247 = vxpose.xlu0.b32.cont [13/16] 0.0, 128
    %2248 = vxpose.xlu0.b32.cont [14/16] 0.0, 128
    %2249 = vxpose.xlu0.b32.cont [15/16] 0.0, 128
    %2250 = vxpose.xlu0.b32.end [16/16] 0.0, 128
    %v2251 = vpop.trf.xlu0
    %v2252 = vpop.trf.xlu0
    %v2253 = vpop.trf.xlu0
    %v2254 = vpop.trf.xlu0
    %v2255 = vpop.trf.xlu0
    %v2256 = vpop.trf.xlu0
    %v2257 = vpop.trf.xlu0
    %v2258 = vpop.trf.xlu0
    %v2259 = vpop.trf.xlu0
    %v2260 = vpop.trf.xlu0
    %v2261 = vpop.trf.xlu0
    %v2262 = vpop.trf.xlu0
    %v2263 = vpop.trf.xlu0
    %v2264 = vpop.trf.xlu0
    %v2265 = vpop.trf.xlu0
    %v2266 = vpop.trf.xlu0
    %v2268 = vsel %vm418, %v2027, 0
    %v2271 = vsel %vm418, %v2028, 0
    %v2274 = vsel %vm418, %v2059, 0
    %v2277 = vsel %vm418, %v2060, 0
    %v2280 = vsel %vm418, %v2091, 0
    %v2283 = vsel %vm418, %v2092, 0
    %v2286 = vsel %vm418, %v2123, 0
    %v2289 = vsel %vm418, %v2124, 0
    %v2292 = vsel %vm418, %v2155, 0
    %v2295 = vsel %vm418, %v2156, 0
    %v2298 = vsel %vm418, %v2187, 0
    %v2301 = vsel %vm418, %v2188, 0
    %v2304 = vsel %vm418, %v2219, 0
    %v2307 = vsel %vm418, %v2220, 0
    %v2310 = vsel %vm418, %v2251, 0
    %v2313 = vsel %vm418, %v2252, 0
    %2315 = vmatprep.subr.mxu0 0.0
    %2316 = vmatpush1.msra.mxu0 %v109
    %2317 = vmatprep.subr.mxu0 0.0
    %2318 = vmatpush1.msra.mxu0 %v110
    %2319 = vmatprep.subr.mxu0 0.0
    %2320 = vmatpush1.msra.mxu0 0.0
    %2321 = vmatprep.subr.mxu0 0.0
    %2322 = vmatpush1.msra.mxu0 0.0
    %2323 = vmatprep.subr.mxu0 0.0
    %2324 = vmatpush1.msra.mxu0 0.0
    %2325 = vmatprep.subr.mxu0 0.0
    %2326 = vmatpush1.msra.mxu0 0.0
    %2327 = vmatprep.subr.mxu0 0.0
    %2328 = vmatpush1.msra.mxu0 0.0
    %2329 = vmatprep.subr.mxu0 0.0
    %2330 = vmatpush1.msra.mxu0 0.0
    %2331 = vmatprep.subr.mxu0 0.0
    %2332 = vmatpush1.msra.mxu0 0.0
    %2333 = vmatprep.subr.mxu0 0.0
    %2334 = vmatpush1.msra.mxu0 0.0
    %2335 = vmatprep.subr.mxu0 0.0
    %2336 = vmatpush1.msra.mxu0 0.0
    %2337 = vmatprep.subr.mxu0 0.0
    %2338 = vmatpush1.msra.mxu0 0.0
    %2339 = vmatprep.subr.mxu0 0.0
    %2340 = vmatpush1.msra.mxu0 0.0
    %2341 = vmatprep.subr.mxu0 0.0
    %2342 = vmatpush1.msra.mxu0 0.0
    %2343 = vmatprep.subr.mxu0 0.0
    %2344 = vmatpush1.msra.mxu0 0.0
    %2345 = vmatprep.subr.mxu0 0.0
    %2346 = vmatpush1.msra.mxu0 0.0
    %2347 = vmatprep.subr.mxu0 0.0
    %2348 = vmatpush1.msra.mxu0 0.0
    %2349 = vmatprep.subr.mxu0 0.0
    %2350 = vmatpush1.msra.mxu0 0.0
    %2351 = vmatprep.subr.mxu0 0.0
    %2352 = vmatpush1.msra.mxu0 0.0
    %2353 = vmatprep.subr.mxu0 0.0
    %2354 = vmatpush1.msra.mxu0 0.0
    %2355 = vmatprep.subr.mxu0 0.0
    %2356 = vmatpush1.msra.mxu0 0.0
    %2357 = vmatprep.subr.mxu0 0.0
    %2358 = vmatpush1.msra.mxu0 0.0
    %2359 = vmatprep.subr.mxu0 0.0
    %2360 = vmatpush1.msra.mxu0 0.0
    %2361 = vmatprep.subr.mxu0 0.0
    %2362 = vmatpush1.msra.mxu0 0.0
    %2363 = vmatprep.subr.mxu0 0.0
    %2364 = vmatpush1.msra.mxu0 0.0
    %2365 = vmatprep.subr.mxu0 0.0
    %2366 = vmatpush1.msra.mxu0 0.0
    %2367 = vmatprep.subr.mxu0 0.0
    %2368 = vmatpush1.msra.mxu0 0.0
    %2369 = vmatprep.subr.mxu0 0.0
    %2370 = vmatpush1.msra.mxu0 0.0
    %2371 = vmatprep.subr.mxu0 0.0
    %2372 = vmatpush1.msra.mxu0 0.0
    %2373 = vmatprep.subr.mxu0 0.0
    %2374 = vmatpush1.msra.mxu0 0.0
    %2375 = vmatprep.subr.mxu0 0.0
    %2376 = vmatpush1.msra.mxu0 0.0
    %2377 = vmatprep.subr.mxu0 0.0
    %2378 = vmatpush1.msra.mxu0 0.0
    %2379 = vmatprep.mubr.f32.mxu0 0.0
    %2380 = vmatmul.mubr.f32.gmra.mrb[0].mxu0 %v2268
    %v2381 = vpop.f32.mrb[0].mxu0
    %v2382 = vadd.f32 0.0, %v2381
    %v2383 = vpop.f32.mrb[0].mxu0
    %2384 = vmatprep.mubr.f32.mxu0 0.0
    %2385 = vmatmul.mubr.f32.gmra.mrb[0].mxu0 %v2271
    %v2386 = vpop.f32.mrb[0].mxu0
    %v2387 = vadd.f32 0.0, %v2386
    %v2388 = vpop.f32.mrb[0].mxu0
    %2389 = vmatprep.mubr.f32.mxu0 0.0
    %2390 = vmatmul.mubr.f32.gmra.mrb[0].mxu0 %v2274
    %v2391 = vpop.f32.mrb[0].mxu0
    %v2392 = vadd.f32 0.0, %v2391
    %v2393 = vpop.f32.mrb[0].mxu0
    %2394 = vmatprep.mubr.f32.mxu0 0.0
    %2395 = vmatmul.mubr.f32.gmra.mrb[0].mxu0 %v2277
    %v2396 = vpop.f32.mrb[0].mxu0
    %v2397 = vadd.f32 0.0, %v2396
    %v2398 = vpop.f32.mrb[0].mxu0
    %2399 = vmatprep.mubr.f32.mxu0 0.0
    %2400 = vmatmul.mubr.f32.gmra.mrb[0].mxu0 %v2280
    %v2401 = vpop.f32.mrb[0].mxu0
    %v2402 = vadd.f32 0.0, %v2401
    %v2403 = vpop.f32.mrb[0].mxu0
    %2404 = vmatprep.mubr.f32.mxu0 0.0
    %2405 = vmatmul.mubr.f32.gmra.mrb[0].mxu0 %v2283
    %v2406 = vpop.f32.mrb[0].mxu0
    %v2407 = vadd.f32 0.0, %v2406
    %v2408 = vpop.f32.mrb[0].mxu0
    %2409 = vmatprep.mubr.f32.mxu0 0.0
    %2410 = vmatmul.mubr.f32.gmra.mrb[0].mxu0 %v2286
    %v2411 = vpop.f32.mrb[0].mxu0
    %v2412 = vadd.f32 0.0, %v2411
    %v2413 = vpop.f32.mrb[0].mxu0
    %2414 = vmatprep.mubr.f32.mxu0 0.0
    %2415 = vmatmul.mubr.f32.gmra.mrb[0].mxu0 %v2289
    %v2416 = vpop.f32.mrb[0].mxu0
    %v2417 = vadd.f32 0.0, %v2416
    %v2418 = vpop.f32.mrb[0].mxu0
    %2419 = vmatprep.mubr.f32.mxu0 0.0
    %2420 = vmatmul.mubr.f32.gmra.mrb[0].mxu0 %v2292
    %v2421 = vpop.f32.mrb[0].mxu0
    %v2422 = vadd.f32 0.0, %v2421
    %v2423 = vpop.f32.mrb[0].mxu0
    %2424 = vmatprep.mubr.f32.mxu0 0.0
    %2425 = vmatmul.mubr.f32.gmra.mrb[0].mxu0 %v2295
    %v2426 = vpop.f32.mrb[0].mxu0
    %v2427 = vadd.f32 0.0, %v2426
    %v2428 = vpop.f32.mrb[0].mxu0
    %2429 = vmatprep.mubr.f32.mxu0 0.0
    %2430 = vmatmul.mubr.f32.gmra.mrb[0].mxu0 %v2298
    %v2431 = vpop.f32.mrb[0].mxu0
    %v2432 = vadd.f32 0.0, %v2431
    %v2433 = vpop.f32.mrb[0].mxu0
    %2434 = vmatprep.mubr.f32.mxu0 0.0
    %2435 = vmatmul.mubr.f32.gmra.mrb[0].mxu0 %v2301
    %v2436 = vpop.f32.mrb[0].mxu0
    %v2437 = vadd.f32 0.0, %v2436
    %v2438 = vpop.f32.mrb[0].mxu0
    %2439 = vmatprep.mubr.f32.mxu0 0.0
    %2440 = vmatmul.mubr.f32.gmra.mrb[0].mxu0 %v2304
    %v2441 = vpop.f32.mrb[0].mxu0
    %v2442 = vadd.f32 0.0, %v2441
    %v2443 = vpop.f32.mrb[0].mxu0
    %2444 = vmatprep.mubr.f32.mxu0 0.0
    %2445 = vmatmul.mubr.f32.gmra.mrb[0].mxu0 %v2307
    %v2446 = vpop.f32.mrb[0].mxu0
    %v2447 = vadd.f32 0.0, %v2446
    %v2448 = vpop.f32.mrb[0].mxu0
    %2449 = vmatprep.mubr.f32.mxu0 0.0
    %2450 = vmatmul.mubr.f32.gmra.mrb[0].mxu0 %v2310
    %v2451 = vpop.f32.mrb[0].mxu0
    %v2452 = vadd.f32 0.0, %v2451
    %v2453 = vpop.f32.mrb[0].mxu0
    %2454 = vmatprep.mubr.f32.mxu0 0.0
    %2455 = vmatmul.mubr.f32.gmra.mrb[0].mxu0 %v2313
    %v2456 = vpop.f32.mrb[0].mxu0
    %v2457 = vadd.f32 0.0, %v2456
    %v2458 = vpop.f32.mrb[0].mxu0
    %2459 = vdwg.mxu0
    %v2460 = vmul.f32 %v502, %v502
    %v2461 = vmul.f32 %v503, %v503
    %v2462 = vmul.f32 %v504, %v504
    %v2463 = vmul.f32 %v505, %v505
    %v2464 = vmul.f32 %v506, %v506
    %v2465 = vmul.f32 %v507, %v507
    %v2466 = vmul.f32 %v508, %v508
    %v2467 = vmul.f32 %v509, %v509
    %v2468 = vmul.f32 %v510, %v510
    %v2469 = vmul.f32 %v511, %v511
    %v2470 = vmul.f32 %v512, %v512
    %v2471 = vmul.f32 %v513, %v513
    %v2472 = vmul.f32 %v514, %v514
    %v2473 = vmul.f32 %v515, %v515
    %v2474 = vmul.f32 %v516, %v516
    %v2475 = vmul.f32 %v517, %v517
    %v2477 = vsel %vm418, %v2460, 0
    %v2480 = vsel %vm418, %v2461, 0
    %v2483 = vsel %vm418, %v2462, 0
    %v2486 = vsel %vm418, %v2463, 0
    %v2489 = vsel %vm418, %v2464, 0
    %v2492 = vsel %vm418, %v2465, 0
    %v2495 = vsel %vm418, %v2466, 0
    %v2498 = vsel %vm418, %v2467, 0
    %v2501 = vsel %vm418, %v2468, 0
    %v2504 = vsel %vm418, %v2469, 0
    %v2507 = vsel %vm418, %v2470, 0
    %v2510 = vsel %vm418, %v2471, 0
    %v2513 = vsel %vm418, %v2472, 0
    %v2516 = vsel %vm418, %v2473, 0
    %v2519 = vsel %vm418, %v2474, 0
    %v2522 = vsel %vm418, %v2475, 0
    %2524 = vmatprep.subr.mxu0 0.0
    %2525 = vmatpush1.msra.mxu0 %v109
    %2526 = vmatprep.subr.mxu0 0.0
    %2527 = vmatpush1.msra.mxu0 %v110
    %2528 = vmatprep.subr.mxu0 0.0
    %2529 = vmatpush1.msra.mxu0 0.0
    %2530 = vmatprep.subr.mxu0 0.0
    %2531 = vmatpush1.msra.mxu0 0.0
    %2532 = vmatprep.subr.mxu0 0.0
    %2533 = vmatpush1.msra.mxu0 0.0
    %2534 = vmatprep.subr.mxu0 0.0
    %2535 = vmatpush1.msra.mxu0 0.0
    %2536 = vmatprep.subr.mxu0 0.0
    %2537 = vmatpush1.msra.mxu0 0.0
    %2538 = vmatprep.subr.mxu0 0.0
    %2539 = vmatpush1.msra.mxu0 0.0
    %2540 = vmatprep.subr.mxu0 0.0
    %2541 = vmatpush1.msra.mxu0 0.0
    %2542 = vmatprep.subr.mxu0 0.0
    %2543 = vmatpush1.msra.mxu0 0.0
    %2544 = vmatprep.subr.mxu0 0.0
    %2545 = vmatpush1.msra.mxu0 0.0
    %2546 = vmatprep.subr.mxu0 0.0
    %2547 = vmatpush1.msra.mxu0 0.0
    %2548 = vmatprep.subr.mxu0 0.0
    %2549 = vmatpush1.msra.mxu0 0.0
    %2550 = vmatprep.subr.mxu0 0.0
    %2551 = vmatpush1.msra.mxu0 0.0
    %2552 = vmatprep.subr.mxu0 0.0
    %2553 = vmatpush1.msra.mxu0 0.0
    %2554 = vmatprep.subr.mxu0 0.0
    %2555 = vmatpush1.msra.mxu0 0.0
    %2556 = vmatprep.subr.mxu0 0.0
    %2557 = vmatpush1.msra.mxu0 0.0
    %2558 = vmatprep.subr.mxu0 0.0
    %2559 = vmatpush1.msra.mxu0 0.0
    %2560 = vmatprep.subr.mxu0 0.0
    %2561 = vmatpush1.msra.mxu0 0.0
    %2562 = vmatprep.subr.mxu0 0.0
    %2563 = vmatpush1.msra.mxu0 0.0
    %2564 = vmatprep.subr.mxu0 0.0
    %2565 = vmatpush1.msra.mxu0 0.0
    %2566 = vmatprep.subr.mxu0 0.0
    %2567 = vmatpush1.msra.mxu0 0.0
    %2568 = vmatprep.subr.mxu0 0.0
    %2569 = vmatpush1.msra.mxu0 0.0
    %2570 = vmatprep.subr.mxu0 0.0
    %2571 = vmatpush1.msra.mxu0 0.0
    %2572 = vmatprep.subr.mxu0 0.0
    %2573 = vmatpush1.msra.mxu0 0.0
    %2574 = vmatprep.subr.mxu0 0.0
    %2575 = vmatpush1.msra.mxu0 0.0
    %2576 = vmatprep.subr.mxu0 0.0
    %2577 = vmatpush1.msra.mxu0 0.0
    %2578 = vmatprep.subr.mxu0 0.0
    %2579 = vmatpush1.msra.mxu0 0.0
    %2580 = vmatprep.subr.mxu0 0.0
    %2581 = vmatpush1.msra.mxu0 0.0
    %2582 = vmatprep.subr.mxu0 0.0
    %2583 = vmatpush1.msra.mxu0 0.0
    %2584 = vmatprep.subr.mxu0 0.0
    %2585 = vmatpush1.msra.mxu0 0.0
    %2586 = vmatprep.subr.mxu0 0.0
    %2587 = vmatpush1.msra.mxu0 0.0
    %2588 = vmatprep.mubr.f32.mxu0 0.0
    %2589 = vmatmul.mubr.f32.gmra.mrb[0].mxu0 %v2477
    %v2590 = vpop.f32.mrb[0].mxu0
    %v2591 = vadd.f32 0.0, %v2590
    %v2592 = vpop.f32.mrb[0].mxu0
    %2593 = vmatprep.mubr.f32.mxu0 0.0
    %2594 = vmatmul.mubr.f32.gmra.mrb[0].mxu0 %v2480
    %v2595 = vpop.f32.mrb[0].mxu0
    %v2596 = vadd.f32 0.0, %v2595
    %v2597 = vpop.f32.mrb[0].mxu0
    %2598 = vmatprep.mubr.f32.mxu0 0.0
    %2599 = vmatmul.mubr.f32.gmra.mrb[0].mxu0 %v2483
    %v2600 = vpop.f32.mrb[0].mxu0
    %v2601 = vadd.f32 0.0, %v2600
    %v2602 = vpop.f32.mrb[0].mxu0
    %2603 = vmatprep.mubr.f32.mxu0 0.0
    %2604 = vmatmul.mubr.f32.gmra.mrb[0].mxu0 %v2486
    %v2605 = vpop.f32.mrb[0].mxu0
    %v2606 = vadd.f32 0.0, %v2605
    %v2607 = vpop.f32.mrb[0].mxu0
    %2608 = vmatprep.mubr.f32.mxu0 0.0
    %2609 = vmatmul.mubr.f32.gmra.mrb[0].mxu0 %v2489
    %v2610 = vpop.f32.mrb[0].mxu0
    %v2611 = vadd.f32 0.0, %v2610
    %v2612 = vpop.f32.mrb[0].mxu0
    %2613 = vmatprep.mubr.f32.mxu0 0.0
    %2614 = vmatmul.mubr.f32.gmra.mrb[0].mxu0 %v2492
    %v2615 = vpop.f32.mrb[0].mxu0
    %v2616 = vadd.f32 0.0, %v2615
    %v2617 = vpop.f32.mrb[0].mxu0
    %2618 = vmatprep.mubr.f32.mxu0 0.0
    %2619 = vmatmul.mubr.f32.gmra.mrb[0].mxu0 %v2495
    %v2620 = vpop.f32.mrb[0].mxu0
    %v2621 = vadd.f32 0.0, %v2620
    %v2622 = vpop.f32.mrb[0].mxu0
    %2623 = vmatprep.mubr.f32.mxu0 0.0
    %2624 = vmatmul.mubr.f32.gmra.mrb[0].mxu0 %v2498
    %v2625 = vpop.f32.mrb[0].mxu0
    %v2626 = vadd.f32 0.0, %v2625
    %v2627 = vpop.f32.mrb[0].mxu0
    %2628 = vmatprep.mubr.f32.mxu0 0.0
    %2629 = vmatmul.mubr.f32.gmra.mrb[0].mxu0 %v2501
    %v2630 = vpop.f32.mrb[0].mxu0
    %v2631 = vadd.f32 0.0, %v2630
    %v2632 = vpop.f32.mrb[0].mxu0
    %2633 = vmatprep.mubr.f32.mxu0 0.0
    %2634 = vmatmul.mubr.f32.gmra.mrb[0].mxu0 %v2504
    %v2635 = vpop.f32.mrb[0].mxu0
    %v2636 = vadd.f32 0.0, %v2635
    %v2637 = vpop.f32.mrb[0].mxu0
    %2638 = vmatprep.mubr.f32.mxu0 0.0
    %2639 = vmatmul.mubr.f32.gmra.mrb[0].mxu0 %v2507
    %v2640 = vpop.f32.mrb[0].mxu0
    %v2641 = vadd.f32 0.0, %v2640
    %v2642 = vpop.f32.mrb[0].mxu0
    %2643 = vmatprep.mubr.f32.mxu0 0.0
    %2644 = vmatmul.mubr.f32.gmra.mrb[0].mxu0 %v2510
    %v2645 = vpop.f32.mrb[0].mxu0
    %v2646 = vadd.f32 0.0, %v2645
    %v2647 = vpop.f32.mrb[0].mxu0
    %2648 = vmatprep.mubr.f32.mxu0 0.0
    %2649 = vmatmul.mubr.f32.gmra.mrb[0].mxu0 %v2513
    %v2650 = vpop.f32.mrb[0].mxu0
    %v2651 = vadd.f32 0.0, %v2650
    %v2652 = vpop.f32.mrb[0].mxu0
    %2653 = vmatprep.mubr.f32.mxu0 0.0
    %2654 = vmatmul.mubr.f32.gmra.mrb[0].mxu0 %v2516
    %v2655 = vpop.f32.mrb[0].mxu0
    %v2656 = vadd.f32 0.0, %v2655
    %v2657 = vpop.f32.mrb[0].mxu0
    %2658 = vmatprep.mubr.f32.mxu0 0.0
    %2659 = vmatmul.mubr.f32.gmra.mrb[0].mxu0 %v2519
    %v2660 = vpop.f32.mrb[0].mxu0
    %v2661 = vadd.f32 0.0, %v2660
    %v2662 = vpop.f32.mrb[0].mxu0
    %2663 = vmatprep.mubr.f32.mxu0 0.0
    %2664 = vmatmul.mubr.f32.gmra.mrb[0].mxu0 %v2522
    %v2665 = vpop.f32.mrb[0].mxu0
    %v2666 = vadd.f32 0.0, %v2665
    %v2667 = vpop.f32.mrb[0].mxu0
    %2668 = vdwg.mxu0
    %2669 = vxpose.xlu0.b32.start [1/16] %v2591, 128
    %2670 = vxpose.xlu0.b32.cont [2/16] %v2596, 128
    %2671 = vxpose.xlu0.b32.cont [3/16] 0.0, 128
    %2672 = vxpose.xlu0.b32.cont [4/16] 0.0, 128
    %2673 = vxpose.xlu0.b32.cont [5/16] 0.0, 128
    %2674 = vxpose.xlu0.b32.cont [6/16] 0.0, 128
    %2675 = vxpose.xlu0.b32.cont [7/16] 0.0, 128
    %2676 = vxpose.xlu0.b32.cont [8/16] 0.0, 128
    %2677 = vxpose.xlu0.b32.cont [9/16] 0.0, 128
    %2678 = vxpose.xlu0.b32.cont [10/16] 0.0, 128
    %2679 = vxpose.xlu0.b32.cont [11/16] 0.0, 128
    %2680 = vxpose.xlu0.b32.cont [12/16] 0.0, 128
    %2681 = vxpose.xlu0.b32.cont [13/16] 0.0, 128
    %2682 = vxpose.xlu0.b32.cont [14/16] 0.0, 128
    %2683 = vxpose.xlu0.b32.cont [15/16] 0.0, 128
    %2684 = vxpose.xlu0.b32.end [16/16] 0.0, 128
    %v2685 = vpop.trf.xlu0
    %v2686 = vpop.trf.xlu0
    %v2687 = vpop.trf.xlu0
    %v2688 = vpop.trf.xlu0
    %v2689 = vpop.trf.xlu0
    %v2690 = vpop.trf.xlu0
    %v2691 = vpop.trf.xlu0
    %v2692 = vpop.trf.xlu0
    %v2693 = vpop.trf.xlu0
    %v2694 = vpop.trf.xlu0
    %v2695 = vpop.trf.xlu0
    %v2696 = vpop.trf.xlu0
    %v2697 = vpop.trf.xlu0
    %v2698 = vpop.trf.xlu0
    %v2699 = vpop.trf.xlu0
    %v2700 = vpop.trf.xlu0
    %2701 = vxpose.xlu0.b32.start [1/16] %v2601, 128
    %2702 = vxpose.xlu0.b32.cont [2/16] %v2606, 128
    %2703 = vxpose.xlu0.b32.cont [3/16] 0.0, 128
    %2704 = vxpose.xlu0.b32.cont [4/16] 0.0, 128
    %2705 = vxpose.xlu0.b32.cont [5/16] 0.0, 128
    %2706 = vxpose.xlu0.b32.cont [6/16] 0.0, 128
    %2707 = vxpose.xlu0.b32.cont [7/16] 0.0, 128
    %2708 = vxpose.xlu0.b32.cont [8/16] 0.0, 128
    %2709 = vxpose.xlu0.b32.cont [9/16] 0.0, 128
    %2710 = vxpose.xlu0.b32.cont [10/16] 0.0, 128
    %2711 = vxpose.xlu0.b32.cont [11/16] 0.0, 128
    %2712 = vxpose.xlu0.b32.cont [12/16] 0.0, 128
    %2713 = vxpose.xlu0.b32.cont [13/16] 0.0, 128
    %2714 = vxpose.xlu0.b32.cont [14/16] 0.0, 128
    %2715 = vxpose.xlu0.b32.cont [15/16] 0.0, 128
    %2716 = vxpose.xlu0.b32.end [16/16] 0.0, 128
    %v2717 = vpop.trf.xlu0
    %v2718 = vpop.trf.xlu0
    %v2719 = vpop.trf.xlu0
    %v2720 = vpop.trf.xlu0
    %v2721 = vpop.trf.xlu0
    %v2722 = vpop.trf.xlu0
    %v2723 = vpop.trf.xlu0
    %v2724 = vpop.trf.xlu0
    %v2725 = vpop.trf.xlu0
    %v2726 = vpop.trf.xlu0
    %v2727 = vpop.trf.xlu0
    %v2728 = vpop.trf.xlu0
    %v2729 = vpop.trf.xlu0
    %v2730 = vpop.trf.xlu0
    %v2731 = vpop.trf.xlu0
    %v2732 = vpop.trf.xlu0
    %2733 = vxpose.xlu0.b32.start [1/16] %v2611, 128
    %2734 = vxpose.xlu0.b32.cont [2/16] %v2616, 128
    %2735 = vxpose.xlu0.b32.cont [3/16] 0.0, 128
    %2736 = vxpose.xlu0.b32.cont [4/16] 0.0, 128
    %2737 = vxpose.xlu0.b32.cont [5/16] 0.0, 128
    %2738 = vxpose.xlu0.b32.cont [6/16] 0.0, 128
    %2739 = vxpose.xlu0.b32.cont [7/16] 0.0, 128
    %2740 = vxpose.xlu0.b32.cont [8/16] 0.0, 128
    %2741 = vxpose.xlu0.b32.cont [9/16] 0.0, 128
    %2742 = vxpose.xlu0.b32.cont [10/16] 0.0, 128
    %2743 = vxpose.xlu0.b32.cont [11/16] 0.0, 128
    %2744 = vxpose.xlu0.b32.cont [12/16] 0.0, 128
    %2745 = vxpose.xlu0.b32.cont [13/16] 0.0, 128
    %2746 = vxpose.xlu0.b32.cont [14/16] 0.0, 128
    %2747 = vxpose.xlu0.b32.cont [15/16] 0.0, 128
    %2748 = vxpose.xlu0.b32.end [16/16] 0.0, 128
    %v2749 = vpop.trf.xlu0
    %v2750 = vpop.trf.xlu0
    %v2751 = vpop.trf.xlu0
    %v2752 = vpop.trf.xlu0
    %v2753 = vpop.trf.xlu0
    %v2754 = vpop.trf.xlu0
    %v2755 = vpop.trf.xlu0
    %v2756 = vpop.trf.xlu0
    %v2757 = vpop.trf.xlu0
    %v2758 = vpop.trf.xlu0
    %v2759 = vpop.trf.xlu0
    %v2760 = vpop.trf.xlu0
    %v2761 = vpop.trf.xlu0
    %v2762 = vpop.trf.xlu0
    %v2763 = vpop.trf.xlu0
    %v2764 = vpop.trf.xlu0
    %2765 = vxpose.xlu0.b32.start [1/16] %v2621, 128
    %2766 = vxpose.xlu0.b32.cont [2/16] %v2626, 128
    %2767 = vxpose.xlu0.b32.cont [3/16] 0.0, 128
    %2768 = vxpose.xlu0.b32.cont [4/16] 0.0, 128
    %2769 = vxpose.xlu0.b32.cont [5/16] 0.0, 128
    %2770 = vxpose.xlu0.b32.cont [6/16] 0.0, 128
    %2771 = vxpose.xlu0.b32.cont [7/16] 0.0, 128
    %2772 = vxpose.xlu0.b32.cont [8/16] 0.0, 128
    %2773 = vxpose.xlu0.b32.cont [9/16] 0.0, 128
    %2774 = vxpose.xlu0.b32.cont [10/16] 0.0, 128
    %2775 = vxpose.xlu0.b32.cont [11/16] 0.0, 128
    %2776 = vxpose.xlu0.b32.cont [12/16] 0.0, 128
    %2777 = vxpose.xlu0.b32.cont [13/16] 0.0, 128
    %2778 = vxpose.xlu0.b32.cont [14/16] 0.0, 128
    %2779 = vxpose.xlu0.b32.cont [15/16] 0.0, 128
    %2780 = vxpose.xlu0.b32.end [16/16] 0.0, 128
    %v2781 = vpop.trf.xlu0
    %v2782 = vpop.trf.xlu0
    %v2783 = vpop.trf.xlu0
    %v2784 = vpop.trf.xlu0
    %v2785 = vpop.trf.xlu0
    %v2786 = vpop.trf.xlu0
    %v2787 = vpop.trf.xlu0
    %v2788 = vpop.trf.xlu0
    %v2789 = vpop.trf.xlu0
    %v2790 = vpop.trf.xlu0
    %v2791 = vpop.trf.xlu0
    %v2792 = vpop.trf.xlu0
    %v2793 = vpop.trf.xlu0
    %v2794 = vpop.trf.xlu0
    %v2795 = vpop.trf.xlu0
    %v2796 = vpop.trf.xlu0
    %2797 = vxpose.xlu0.b32.start [1/16] %v2631, 128
    %2798 = vxpose.xlu0.b32.cont [2/16] %v2636, 128
    %2799 = vxpose.xlu0.b32.cont [3/16] 0.0, 128
    %2800 = vxpose.xlu0.b32.cont [4/16] 0.0, 128
    %2801 = vxpose.xlu0.b32.cont [5/16] 0.0, 128
    %2802 = vxpose.xlu0.b32.cont [6/16] 0.0, 128
    %2803 = vxpose.xlu0.b32.cont [7/16] 0.0, 128
    %2804 = vxpose.xlu0.b32.cont [8/16] 0.0, 128
    %2805 = vxpose.xlu0.b32.cont [9/16] 0.0, 128
    %2806 = vxpose.xlu0.b32.cont [10/16] 0.0, 128
    %2807 = vxpose.xlu0.b32.cont [11/16] 0.0, 128
    %2808 = vxpose.xlu0.b32.cont [12/16] 0.0, 128
    %2809 = vxpose.xlu0.b32.cont [13/16] 0.0, 128
    %2810 = vxpose.xlu0.b32.cont [14/16] 0.0, 128
    %2811 = vxpose.xlu0.b32.cont [15/16] 0.0, 128
    %2812 = vxpose.xlu0.b32.end [16/16] 0.0, 128
    %v2813 = vpop.trf.xlu0
    %v2814 = vpop.trf.xlu0
    %v2815 = vpop.trf.xlu0
    %v2816 = vpop.trf.xlu0
    %v2817 = vpop.trf.xlu0
    %v2818 = vpop.trf.xlu0
    %v2819 = vpop.trf.xlu0
    %v2820 = vpop.trf.xlu0
    %v2821 = vpop.trf.xlu0
    %v2822 = vpop.trf.xlu0
    %v2823 = vpop.trf.xlu0
    %v2824 = vpop.trf.xlu0
    %v2825 = vpop.trf.xlu0
    %v2826 = vpop.trf.xlu0
    %v2827 = vpop.trf.xlu0
    %v2828 = vpop.trf.xlu0
    %2829 = vxpose.xlu0.b32.start [1/16] %v2641, 128
    %2830 = vxpose.xlu0.b32.cont [2/16] %v2646, 128
    %2831 = vxpose.xlu0.b32.cont [3/16] 0.0, 128
    %2832 = vxpose.xlu0.b32.cont [4/16] 0.0, 128
    %2833 = vxpose.xlu0.b32.cont [5/16] 0.0, 128
    %2834 = vxpose.xlu0.b32.cont [6/16] 0.0, 128
    %2835 = vxpose.xlu0.b32.cont [7/16] 0.0, 128
    %2836 = vxpose.xlu0.b32.cont [8/16] 0.0, 128
    %2837 = vxpose.xlu0.b32.cont [9/16] 0.0, 128
    %2838 = vxpose.xlu0.b32.cont [10/16] 0.0, 128
    %2839 = vxpose.xlu0.b32.cont [11/16] 0.0, 128
    %2840 = vxpose.xlu0.b32.cont [12/16] 0.0, 128
    %2841 = vxpose.xlu0.b32.cont [13/16] 0.0, 128
    %2842 = vxpose.xlu0.b32.cont [14/16] 0.0, 128
    %2843 = vxpose.xlu0.b32.cont [15/16] 0.0, 128
    %2844 = vxpose.xlu0.b32.end [16/16] 0.0, 128
    %v2845 = vpop.trf.xlu0
    %v2846 = vpop.trf.xlu0
    %v2847 = vpop.trf.xlu0
    %v2848 = vpop.trf.xlu0
    %v2849 = vpop.trf.xlu0
    %v2850 = vpop.trf.xlu0
    %v2851 = vpop.trf.xlu0
    %v2852 = vpop.trf.xlu0
    %v2853 = vpop.trf.xlu0
    %v2854 = vpop.trf.xlu0
    %v2855 = vpop.trf.xlu0
    %v2856 = vpop.trf.xlu0
    %v2857 = vpop.trf.xlu0
    %v2858 = vpop.trf.xlu0
    %v2859 = vpop.trf.xlu0
    %v2860 = vpop.trf.xlu0
    %2861 = vxpose.xlu0.b32.start [1/16] %v2651, 128
    %2862 = vxpose.xlu0.b32.cont [2/16] %v2656, 128
    %2863 = vxpose.xlu0.b32.cont [3/16] 0.0, 128
    %2864 = vxpose.xlu0.b32.cont [4/16] 0.0, 128
    %2865 = vxpose.xlu0.b32.cont [5/16] 0.0, 128
    %2866 = vxpose.xlu0.b32.cont [6/16] 0.0, 128
    %2867 = vxpose.xlu0.b32.cont [7/16] 0.0, 128
    %2868 = vxpose.xlu0.b32.cont [8/16] 0.0, 128
    %2869 = vxpose.xlu0.b32.cont [9/16] 0.0, 128
    %2870 = vxpose.xlu0.b32.cont [10/16] 0.0, 128
    %2871 = vxpose.xlu0.b32.cont [11/16] 0.0, 128
    %2872 = vxpose.xlu0.b32.cont [12/16] 0.0, 128
    %2873 = vxpose.xlu0.b32.cont [13/16] 0.0, 128
    %2874 = vxpose.xlu0.b32.cont [14/16] 0.0, 128
    %2875 = vxpose.xlu0.b32.cont [15/16] 0.0, 128
    %2876 = vxpose.xlu0.b32.end [16/16] 0.0, 128
    %v2877 = vpop.trf.xlu0
    %v2878 = vpop.trf.xlu0
    %v2879 = vpop.trf.xlu0
    %v2880 = vpop.trf.xlu0
    %v2881 = vpop.trf.xlu0
    %v2882 = vpop.trf.xlu0
    %v2883 = vpop.trf.xlu0
    %v2884 = vpop.trf.xlu0
    %v2885 = vpop.trf.xlu0
    %v2886 = vpop.trf.xlu0
    %v2887 = vpop.trf.xlu0
    %v2888 = vpop.trf.xlu0
    %v2889 = vpop.trf.xlu0
    %v2890 = vpop.trf.xlu0
    %v2891 = vpop.trf.xlu0
    %v2892 = vpop.trf.xlu0
    %2893 = vxpose.xlu0.b32.start [1/16] %v2661, 128
    %2894 = vxpose.xlu0.b32.cont [2/16] %v2666, 128
    %2895 = vxpose.xlu0.b32.cont [3/16] 0.0, 128
    %2896 = vxpose.xlu0.b32.cont [4/16] 0.0, 128
    %2897 = vxpose.xlu0.b32.cont [5/16] 0.0, 128
    %2898 = vxpose.xlu0.b32.cont [6/16] 0.0, 128
    %2899 = vxpose.xlu0.b32.cont [7/16] 0.0, 128
    %2900 = vxpose.xlu0.b32.cont [8/16] 0.0, 128
    %2901 = vxpose.xlu0.b32.cont [9/16] 0.0, 128
    %2902 = vxpose.xlu0.b32.cont [10/16] 0.0, 128
    %2903 = vxpose.xlu0.b32.cont [11/16] 0.0, 128
    %2904 = vxpose.xlu0.b32.cont [12/16] 0.0, 128
    %2905 = vxpose.xlu0.b32.cont [13/16] 0.0, 128
    %2906 = vxpose.xlu0.b32.cont [14/16] 0.0, 128
    %2907 = vxpose.xlu0.b32.cont [15/16] 0.0, 128
    %2908 = vxpose.xlu0.b32.end [16/16] 0.0, 128
    %v2909 = vpop.trf.xlu0
    %v2910 = vpop.trf.xlu0
    %v2911 = vpop.trf.xlu0
    %v2912 = vpop.trf.xlu0
    %v2913 = vpop.trf.xlu0
    %v2914 = vpop.trf.xlu0
    %v2915 = vpop.trf.xlu0
    %v2916 = vpop.trf.xlu0
    %v2917 = vpop.trf.xlu0
    %v2918 = vpop.trf.xlu0
    %v2919 = vpop.trf.xlu0
    %v2920 = vpop.trf.xlu0
    %v2921 = vpop.trf.xlu0
    %v2922 = vpop.trf.xlu0
    %v2923 = vpop.trf.xlu0
    %v2924 = vpop.trf.xlu0
    %v2926 = vsel %vm418, %v2685, 0
    %v2929 = vsel %vm418, %v2686, 0
    %v2932 = vsel %vm418, %v2717, 0
    %v2935 = vsel %vm418, %v2718, 0
    %v2938 = vsel %vm418, %v2749, 0
    %v2941 = vsel %vm418, %v2750, 0
    %v2944 = vsel %vm418, %v2781, 0
    %v2947 = vsel %vm418, %v2782, 0
    %v2950 = vsel %vm418, %v2813, 0
    %v2953 = vsel %vm418, %v2814, 0
    %v2956 = vsel %vm418, %v2845, 0
    %v2959 = vsel %vm418, %v2846, 0
    %v2962 = vsel %vm418, %v2877, 0
    %v2965 = vsel %vm418, %v2878, 0
    %v2968 = vsel %vm418, %v2909, 0
    %v2971 = vsel %vm418, %v2910, 0
    %2973 = vmatprep.subr.mxu0 0.0
    %2974 = vmatpush1.msra.mxu0 %v109
    %2975 = vmatprep.subr.mxu0 0.0
    %2976 = vmatpush1.msra.mxu0 %v110
    %2977 = vmatprep.subr.mxu0 0.0
    %2978 = vmatpush1.msra.mxu0 0.0
    %2979 = vmatprep.subr.mxu0 0.0
    %2980 = vmatpush1.msra.mxu0 0.0
    %2981 = vmatprep.subr.mxu0 0.0
    %2982 = vmatpush1.msra.mxu0 0.0
    %2983 = vmatprep.subr.mxu0 0.0
    %2984 = vmatpush1.msra.mxu0 0.0
    %2985 = vmatprep.subr.mxu0 0.0
    %2986 = vmatpush1.msra.mxu0 0.0
    %2987 = vmatprep.subr.mxu0 0.0
    %2988 = vmatpush1.msra.mxu0 0.0
    %2989 = vmatprep.subr.mxu0 0.0
    %2990 = vmatpush1.msra.mxu0 0.0
    %2991 = vmatprep.subr.mxu0 0.0
    %2992 = vmatpush1.msra.mxu0 0.0
    %2993 = vmatprep.subr.mxu0 0.0
    %2994 = vmatpush1.msra.mxu0 0.0
    %2995 = vmatprep.subr.mxu0 0.0
    %2996 = vmatpush1.msra.mxu0 0.0
    %2997 = vmatprep.subr.mxu0 0.0
    %2998 = vmatpush1.msra.mxu0 0.0
    %2999 = vmatprep.subr.mxu0 0.0
    %3000 = vmatpush1.msra.mxu0 0.0
    %3001 = vmatprep.subr.mxu0 0.0
    %3002 = vmatpush1.msra.mxu0 0.0
    %3003 = vmatprep.subr.mxu0 0.0
    %3004 = vmatpush1.msra.mxu0 0.0
    %3005 = vmatprep.subr.mxu0 0.0
    %3006 = vmatpush1.msra.mxu0 0.0
    %3007 = vmatprep.subr.mxu0 0.0
    %3008 = vmatpush1.msra.mxu0 0.0
    %3009 = vmatprep.subr.mxu0 0.0
    %3010 = vmatpush1.msra.mxu0 0.0
    %3011 = vmatprep.subr.mxu0 0.0
    %3012 = vmatpush1.msra.mxu0 0.0
    %3013 = vmatprep.subr.mxu0 0.0
    %3014 = vmatpush1.msra.mxu0 0.0
    %3015 = vmatprep.subr.mxu0 0.0
    %3016 = vmatpush1.msra.mxu0 0.0
    %3017 = vmatprep.subr.mxu0 0.0
    %3018 = vmatpush1.msra.mxu0 0.0
    %3019 = vmatprep.subr.mxu0 0.0
    %3020 = vmatpush1.msra.mxu0 0.0
    %3021 = vmatprep.subr.mxu0 0.0
    %3022 = vmatpush1.msra.mxu0 0.0
    %3023 = vmatprep.subr.mxu0 0.0
    %3024 = vmatpush1.msra.mxu0 0.0
    %3025 = vmatprep.subr.mxu0 0.0
    %3026 = vmatpush1.msra.mxu0 0.0
    %3027 = vmatprep.subr.mxu0 0.0
    %3028 = vmatpush1.msra.mxu0 0.0
    %3029 = vmatprep.subr.mxu0 0.0
    %3030 = vmatpush1.msra.mxu0 0.0
    %3031 = vmatprep.subr.mxu0 0.0
    %3032 = vmatpush1.msra.mxu0 0.0
    %3033 = vmatprep.subr.mxu0 0.0
    %3034 = vmatpush1.msra.mxu0 0.0
    %3035 = vmatprep.subr.mxu0 0.0
    %3036 = vmatpush1.msra.mxu0 0.0
    %3037 = vmatprep.mubr.f32.mxu0 0.0
    %3038 = vmatmul.mubr.f32.gmra.mrb[0].mxu0 %v2926
    %v3039 = vpop.f32.mrb[0].mxu0
    %v3040 = vadd.f32 0.0, %v3039
    %v3041 = vpop.f32.mrb[0].mxu0
    %3042 = vmatprep.mubr.f32.mxu0 0.0
    %3043 = vmatmul.mubr.f32.gmra.mrb[0].mxu0 %v2929
    %v3044 = vpop.f32.mrb[0].mxu0
    %v3045 = vadd.f32 0.0, %v3044
    %v3046 = vpop.f32.mrb[0].mxu0
    %3047 = vmatprep.mubr.f32.mxu0 0.0
    %3048 = vmatmul.mubr.f32.gmra.mrb[0].mxu0 %v2932
    %v3049 = vpop.f32.mrb[0].mxu0
    %v3050 = vadd.f32 0.0, %v3049
    %v3051 = vpop.f32.mrb[0].mxu0
    %3052 = vmatprep.mubr.f32.mxu0 0.0
    %3053 = vmatmul.mubr.f32.gmra.mrb[0].mxu0 %v2935
    %v3054 = vpop.f32.mrb[0].mxu0
    %v3055 = vadd.f32 0.0, %v3054
    %v3056 = vpop.f32.mrb[0].mxu0
    %3057 = vmatprep.mubr.f32.mxu0 0.0
    %3058 = vmatmul.mubr.f32.gmra.mrb[0].mxu0 %v2938
    %v3059 = vpop.f32.mrb[0].mxu0
    %v3060 = vadd.f32 0.0, %v3059
    %v3061 = vpop.f32.mrb[0].mxu0
    %3062 = vmatprep.mubr.f32.mxu0 0.0
    %3063 = vmatmul.mubr.f32.gmra.mrb[0].mxu0 %v2941
    %v3064 = vpop.f32.mrb[0].mxu0
    %v3065 = vadd.f32 0.0, %v3064
    %v3066 = vpop.f32.mrb[0].mxu0
    %3067 = vmatprep.mubr.f32.mxu0 0.0
    %3068 = vmatmul.mubr.f32.gmra.mrb[0].mxu0 %v2944
    %v3069 = vpop.f32.mrb[0].mxu0
    %v3070 = vadd.f32 0.0, %v3069
    %v3071 = vpop.f32.mrb[0].mxu0
    %3072 = vmatprep.mubr.f32.mxu0 0.0
    %3073 = vmatmul.mubr.f32.gmra.mrb[0].mxu0 %v2947
    %v3074 = vpop.f32.mrb[0].mxu0
    %v3075 = vadd.f32 0.0, %v3074
    %v3076 = vpop.f32.mrb[0].mxu0
    %3077 = vmatprep.mubr.f32.mxu0 0.0
    %3078 = vmatmul.mubr.f32.gmra.mrb[0].mxu0 %v2950
    %v3079 = vpop.f32.mrb[0].mxu0
    %v3080 = vadd.f32 0.0, %v3079
    %v3081 = vpop.f32.mrb[0].mxu0
    %3082 = vmatprep.mubr.f32.mxu0 0.0
    %3083 = vmatmul.mubr.f32.gmra.mrb[0].mxu0 %v2953
    %v3084 = vpop.f32.mrb[0].mxu0
    %v3085 = vadd.f32 0.0, %v3084
    %v3086 = vpop.f32.mrb[0].mxu0
    %3087 = vmatprep.mubr.f32.mxu0 0.0
    %3088 = vmatmul.mubr.f32.gmra.mrb[0].mxu0 %v2956
    %v3089 = vpop.f32.mrb[0].mxu0
    %v3090 = vadd.f32 0.0, %v3089
    %v3091 = vpop.f32.mrb[0].mxu0
    %3092 = vmatprep.mubr.f32.mxu0 0.0
    %3093 = vmatmul.mubr.f32.gmra.mrb[0].mxu0 %v2959
    %v3094 = vpop.f32.mrb[0].mxu0
    %v3095 = vadd.f32 0.0, %v3094
    %v3096 = vpop.f32.mrb[0].mxu0
    %3097 = vmatprep.mubr.f32.mxu0 0.0
    %3098 = vmatmul.mubr.f32.gmra.mrb[0].mxu0 %v2962
    %v3099 = vpop.f32.mrb[0].mxu0
    %v3100 = vadd.f32 0.0, %v3099
    %v3101 = vpop.f32.mrb[0].mxu0
    %3102 = vmatprep.mubr.f32.mxu0 0.0
    %3103 = vmatmul.mubr.f32.gmra.mrb[0].mxu0 %v2965
    %v3104 = vpop.f32.mrb[0].mxu0
    %v3105 = vadd.f32 0.0, %v3104
    %v3106 = vpop.f32.mrb[0].mxu0
    %3107 = vmatprep.mubr.f32.mxu0 0.0
    %3108 = vmatmul.mubr.f32.gmra.mrb[0].mxu0 %v2968
    %v3109 = vpop.f32.mrb[0].mxu0
    %v3110 = vadd.f32 0.0, %v3109
    %v3111 = vpop.f32.mrb[0].mxu0
    %3112 = vmatprep.mubr.f32.mxu0 0.0
    %3113 = vmatmul.mubr.f32.gmra.mrb[0].mxu0 %v2971
    %v3114 = vpop.f32.mrb[0].mxu0
    %v3115 = vadd.f32 0.0, %v3114
    %v3116 = vpop.f32.mrb[0].mxu0
    %3117 = vdwg.mxu0
    %v3118 = vmul.f32 %v470, %v502
    %v3119 = vmul.f32 %v471, %v503
    %v3120 = vmul.f32 %v472, %v504
    %v3121 = vmul.f32 %v473, %v505
    %v3122 = vmul.f32 %v474, %v506
    %v3123 = vmul.f32 %v475, %v507
    %v3124 = vmul.f32 %v476, %v508
    %v3125 = vmul.f32 %v477, %v509
    %v3126 = vmul.f32 %v478, %v510
    %v3127 = vmul.f32 %v479, %v511
    %v3128 = vmul.f32 %v480, %v512
    %v3129 = vmul.f32 %v481, %v513
    %v3130 = vmul.f32 %v482, %v514
    %v3131 = vmul.f32 %v483, %v515
    %v3132 = vmul.f32 %v484, %v516
    %v3133 = vmul.f32 %v485, %v517
    %v3135 = vsel %vm418, %v3118, 0
    %v3138 = vsel %vm418, %v3119, 0
    %v3141 = vsel %vm418, %v3120, 0
    %v3144 = vsel %vm418, %v3121, 0
    %v3147 = vsel %vm418, %v3122, 0
    %v3150 = vsel %vm418, %v3123, 0
    %v3153 = vsel %vm418, %v3124, 0
    %v3156 = vsel %vm418, %v3125, 0
    %v3159 = vsel %vm418, %v3126, 0
    %v3162 = vsel %vm418, %v3127, 0
    %v3165 = vsel %vm418, %v3128, 0
    %v3168 = vsel %vm418, %v3129, 0
    %v3171 = vsel %vm418, %v3130, 0
    %v3174 = vsel %vm418, %v3131, 0
    %v3177 = vsel %vm418, %v3132, 0
    %v3180 = vsel %vm418, %v3133, 0
    %3182 = vmatprep.subr.mxu0 0.0
    %3183 = vmatpush1.msra.mxu0 %v109
    %3184 = vmatprep.subr.mxu0 0.0
    %3185 = vmatpush1.msra.mxu0 %v110
    %3186 = vmatprep.subr.mxu0 0.0
    %3187 = vmatpush1.msra.mxu0 0.0
    %3188 = vmatprep.subr.mxu0 0.0
    %3189 = vmatpush1.msra.mxu0 0.0
    %3190 = vmatprep.subr.mxu0 0.0
    %3191 = vmatpush1.msra.mxu0 0.0
    %3192 = vmatprep.subr.mxu0 0.0
    %3193 = vmatpush1.msra.mxu0 0.0
    %3194 = vmatprep.subr.mxu0 0.0
    %3195 = vmatpush1.msra.mxu0 0.0
    %3196 = vmatprep.subr.mxu0 0.0
    %3197 = vmatpush1.msra.mxu0 0.0
    %3198 = vmatprep.subr.mxu0 0.0
    %3199 = vmatpush1.msra.mxu0 0.0
    %3200 = vmatprep.subr.mxu0 0.0
    %3201 = vmatpush1.msra.mxu0 0.0
    %3202 = vmatprep.subr.mxu0 0.0
    %3203 = vmatpush1.msra.mxu0 0.0
    %3204 = vmatprep.subr.mxu0 0.0
    %3205 = vmatpush1.msra.mxu0 0.0
    %3206 = vmatprep.subr.mxu0 0.0
    %3207 = vmatpush1.msra.mxu0 0.0
    %3208 = vmatprep.subr.mxu0 0.0
    %3209 = vmatpush1.msra.mxu0 0.0
    %3210 = vmatprep.subr.mxu0 0.0
    %3211 = vmatpush1.msra.mxu0 0.0
    %3212 = vmatprep.subr.mxu0 0.0
    %3213 = vmatpush1.msra.mxu0 0.0
    %3214 = vmatprep.subr.mxu0 0.0
    %3215 = vmatpush1.msra.mxu0 0.0
    %3216 = vmatprep.subr.mxu0 0.0
    %3217 = vmatpush1.msra.mxu0 0.0
    %3218 = vmatprep.subr.mxu0 0.0
    %3219 = vmatpush1.msra.mxu0 0.0
    %3220 = vmatprep.subr.mxu0 0.0
    %3221 = vmatpush1.msra.mxu0 0.0
    %3222 = vmatprep.subr.mxu0 0.0
    %3223 = vmatpush1.msra.mxu0 0.0
    %3224 = vmatprep.subr.mxu0 0.0
    %3225 = vmatpush1.msra.mxu0 0.0
    %3226 = vmatprep.subr.mxu0 0.0
    %3227 = vmatpush1.msra.mxu0 0.0
    %3228 = vmatprep.subr.mxu0 0.0
    %3229 = vmatpush1.msra.mxu0 0.0
    %3230 = vmatprep.subr.mxu0 0.0
    %3231 = vmatpush1.msra.mxu0 0.0
    %3232 = vmatprep.subr.mxu0 0.0
    %3233 = vmatpush1.msra.mxu0 0.0
    %3234 = vmatprep.subr.mxu0 0.0
    %3235 = vmatpush1.msra.mxu0 0.0
    %3236 = vmatprep.subr.mxu0 0.0
    %3237 = vmatpush1.msra.mxu0 0.0
    %3238 = vmatprep.subr.mxu0 0.0
    %3239 = vmatpush1.msra.mxu0 0.0
    %3240 = vmatprep.subr.mxu0 0.0
    %3241 = vmatpush1.msra.mxu0 0.0
    %3242 = vmatprep.subr.mxu0 0.0
    %3243 = vmatpush1.msra.mxu0 0.0
    %3244 = vmatprep.subr.mxu0 0.0
    %3245 = vmatpush1.msra.mxu0 0.0
    %3246 = vmatprep.mubr.f32.mxu0 0.0
    %3247 = vmatmul.mubr.f32.gmra.mrb[0].mxu0 %v3135
    %v3248 = vpop.f32.mrb[0].mxu0
    %v3249 = vadd.f32 0.0, %v3248
    %v3250 = vpop.f32.mrb[0].mxu0
    %3251 = vmatprep.mubr.f32.mxu0 0.0
    %3252 = vmatmul.mubr.f32.gmra.mrb[0].mxu0 %v3138
    %v3253 = vpop.f32.mrb[0].mxu0
    %v3254 = vadd.f32 0.0, %v3253
    %v3255 = vpop.f32.mrb[0].mxu0
    %3256 = vmatprep.mubr.f32.mxu0 0.0
    %3257 = vmatmul.mubr.f32.gmra.mrb[0].mxu0 %v3141
    %v3258 = vpop.f32.mrb[0].mxu0
    %v3259 = vadd.f32 0.0, %v3258
    %v3260 = vpop.f32.mrb[0].mxu0
    %3261 = vmatprep.mubr.f32.mxu0 0.0
    %3262 = vmatmul.mubr.f32.gmra.mrb[0].mxu0 %v3144
    %v3263 = vpop.f32.mrb[0].mxu0
    %v3264 = vadd.f32 0.0, %v3263
    %v3265 = vpop.f32.mrb[0].mxu0
    %3266 = vmatprep.mubr.f32.mxu0 0.0
    %3267 = vmatmul.mubr.f32.gmra.mrb[0].mxu0 %v3147
    %v3268 = vpop.f32.mrb[0].mxu0
    %v3269 = vadd.f32 0.0, %v3268
    %v3270 = vpop.f32.mrb[0].mxu0
    %3271 = vmatprep.mubr.f32.mxu0 0.0
    %3272 = vmatmul.mubr.f32.gmra.mrb[0].mxu0 %v3150
    %v3273 = vpop.f32.mrb[0].mxu0
    %v3274 = vadd.f32 0.0, %v3273
    %v3275 = vpop.f32.mrb[0].mxu0
    %3276 = vmatprep.mubr.f32.mxu0 0.0
    %3277 = vmatmul.mubr.f32.gmra.mrb[0].mxu0 %v3153
    %v3278 = vpop.f32.mrb[0].mxu0
    %v3279 = vadd.f32 0.0, %v3278
    %v3280 = vpop.f32.mrb[0].mxu0
    %3281 = vmatprep.mubr.f32.mxu0 0.0
    %3282 = vmatmul.mubr.f32.gmra.mrb[0].mxu0 %v3156
    %v3283 = vpop.f32.mrb[0].mxu0
    %v3284 = vadd.f32 0.0, %v3283
    %v3285 = vpop.f32.mrb[0].mxu0
    %3286 = vmatprep.mubr.f32.mxu0 0.0
    %3287 = vmatmul.mubr.f32.gmra.mrb[0].mxu0 %v3159
    %v3288 = vpop.f32.mrb[0].mxu0
    %v3289 = vadd.f32 0.0, %v3288
    %v3290 = vpop.f32.mrb[0].mxu0
    %3291 = vmatprep.mubr.f32.mxu0 0.0
    %3292 = vmatmul.mubr.f32.gmra.mrb[0].mxu0 %v3162
    %v3293 = vpop.f32.mrb[0].mxu0
    %v3294 = vadd.f32 0.0, %v3293
    %v3295 = vpop.f32.mrb[0].mxu0
    %3296 = vmatprep.mubr.f32.mxu0 0.0
    %3297 = vmatmul.mubr.f32.gmra.mrb[0].mxu0 %v3165
    %v3298 = vpop.f32.mrb[0].mxu0
    %v3299 = vadd.f32 0.0, %v3298
    %v3300 = vpop.f32.mrb[0].mxu0
    %3301 = vmatprep.mubr.f32.mxu0 0.0
    %3302 = vmatmul.mubr.f32.gmra.mrb[0].mxu0 %v3168
    %v3303 = vpop.f32.mrb[0].mxu0
    %v3304 = vadd.f32 0.0, %v3303
    %v3305 = vpop.f32.mrb[0].mxu0
    %3306 = vmatprep.mubr.f32.mxu0 0.0
    %3307 = vmatmul.mubr.f32.gmra.mrb[0].mxu0 %v3171
    %v3308 = vpop.f32.mrb[0].mxu0
    %v3309 = vadd.f32 0.0, %v3308
    %v3310 = vpop.f32.mrb[0].mxu0
    %3311 = vmatprep.mubr.f32.mxu0 0.0
    %3312 = vmatmul.mubr.f32.gmra.mrb[0].mxu0 %v3174
    %v3313 = vpop.f32.mrb[0].mxu0
    %v3314 = vadd.f32 0.0, %v3313
    %v3315 = vpop.f32.mrb[0].mxu0
    %3316 = vmatprep.mubr.f32.mxu0 0.0
    %3317 = vmatmul.mubr.f32.gmra.mrb[0].mxu0 %v3177
    %v3318 = vpop.f32.mrb[0].mxu0
    %v3319 = vadd.f32 0.0, %v3318
    %v3320 = vpop.f32.mrb[0].mxu0
    %3321 = vmatprep.mubr.f32.mxu0 0.0
    %3322 = vmatmul.mubr.f32.gmra.mrb[0].mxu0 %v3180
    %v3323 = vpop.f32.mrb[0].mxu0
    %v3324 = vadd.f32 0.0, %v3323
    %v3325 = vpop.f32.mrb[0].mxu0
    %3326 = vdwg.mxu0
    %3327 = vxpose.xlu0.b32.start [1/16] %v3249, 128
    %3328 = vxpose.xlu0.b32.cont [2/16] %v3254, 128
    %3329 = vxpose.xlu0.b32.cont [3/16] 0.0, 128
    %3330 = vxpose.xlu0.b32.cont [4/16] 0.0, 128
    %3331 = vxpose.xlu0.b32.cont [5/16] 0.0, 128
    %3332 = vxpose.xlu0.b32.cont [6/16] 0.0, 128
    %3333 = vxpose.xlu0.b32.cont [7/16] 0.0, 128
    %3334 = vxpose.xlu0.b32.cont [8/16] 0.0, 128
    %3335 = vxpose.xlu0.b32.cont [9/16] 0.0, 128
    %3336 = vxpose.xlu0.b32.cont [10/16] 0.0, 128
    %3337 = vxpose.xlu0.b32.cont [11/16] 0.0, 128
    %3338 = vxpose.xlu0.b32.cont [12/16] 0.0, 128
    %3339 = vxpose.xlu0.b32.cont [13/16] 0.0, 128
    %3340 = vxpose.xlu0.b32.cont [14/16] 0.0, 128
    %3341 = vxpose.xlu0.b32.cont [15/16] 0.0, 128
    %3342 = vxpose.xlu0.b32.end [16/16] 0.0, 128
    %v3343 = vpop.trf.xlu0
    %v3344 = vpop.trf.xlu0
    %v3345 = vpop.trf.xlu0
    %v3346 = vpop.trf.xlu0
    %v3347 = vpop.trf.xlu0
    %v3348 = vpop.trf.xlu0
    %v3349 = vpop.trf.xlu0
    %v3350 = vpop.trf.xlu0
    %v3351 = vpop.trf.xlu0
    %v3352 = vpop.trf.xlu0
    %v3353 = vpop.trf.xlu0
    %v3354 = vpop.trf.xlu0
    %v3355 = vpop.trf.xlu0
    %v3356 = vpop.trf.xlu0
    %v3357 = vpop.trf.xlu0
    %v3358 = vpop.trf.xlu0
    %3359 = vxpose.xlu0.b32.start [1/16] %v3259, 128
    %3360 = vxpose.xlu0.b32.cont [2/16] %v3264, 128
    %3361 = vxpose.xlu0.b32.cont [3/16] 0.0, 128
    %3362 = vxpose.xlu0.b32.cont [4/16] 0.0, 128
    %3363 = vxpose.xlu0.b32.cont [5/16] 0.0, 128
    %3364 = vxpose.xlu0.b32.cont [6/16] 0.0, 128
    %3365 = vxpose.xlu0.b32.cont [7/16] 0.0, 128
    %3366 = vxpose.xlu0.b32.cont [8/16] 0.0, 128
    %3367 = vxpose.xlu0.b32.cont [9/16] 0.0, 128
    %3368 = vxpose.xlu0.b32.cont [10/16] 0.0, 128
    %3369 = vxpose.xlu0.b32.cont [11/16] 0.0, 128
    %3370 = vxpose.xlu0.b32.cont [12/16] 0.0, 128
    %3371 = vxpose.xlu0.b32.cont [13/16] 0.0, 128
    %3372 = vxpose.xlu0.b32.cont [14/16] 0.0, 128
    %3373 = vxpose.xlu0.b32.cont [15/16] 0.0, 128
    %3374 = vxpose.xlu0.b32.end [16/16] 0.0, 128
    %v3375 = vpop.trf.xlu0
    %v3376 = vpop.trf.xlu0
    %v3377 = vpop.trf.xlu0
    %v3378 = vpop.trf.xlu0
    %v3379 = vpop.trf.xlu0
    %v3380 = vpop.trf.xlu0
    %v3381 = vpop.trf.xlu0
    %v3382 = vpop.trf.xlu0
    %v3383 = vpop.trf.xlu0
    %v3384 = vpop.trf.xlu0
    %v3385 = vpop.trf.xlu0
    %v3386 = vpop.trf.xlu0
    %v3387 = vpop.trf.xlu0
    %v3388 = vpop.trf.xlu0
    %v3389 = vpop.trf.xlu0
    %v3390 = vpop.trf.xlu0
    %3391 = vxpose.xlu0.b32.start [1/16] %v3269, 128
    %3392 = vxpose.xlu0.b32.cont [2/16] %v3274, 128
    %3393 = vxpose.xlu0.b32.cont [3/16] 0.0, 128
    %3394 = vxpose.xlu0.b32.cont [4/16] 0.0, 128
    %3395 = vxpose.xlu0.b32.cont [5/16] 0.0, 128
    %3396 = vxpose.xlu0.b32.cont [6/16] 0.0, 128
    %3397 = vxpose.xlu0.b32.cont [7/16] 0.0, 128
    %3398 = vxpose.xlu0.b32.cont [8/16] 0.0, 128
    %3399 = vxpose.xlu0.b32.cont [9/16] 0.0, 128
    %3400 = vxpose.xlu0.b32.cont [10/16] 0.0, 128
    %3401 = vxpose.xlu0.b32.cont [11/16] 0.0, 128
    %3402 = vxpose.xlu0.b32.cont [12/16] 0.0, 128
    %3403 = vxpose.xlu0.b32.cont [13/16] 0.0, 128
    %3404 = vxpose.xlu0.b32.cont [14/16] 0.0, 128
    %3405 = vxpose.xlu0.b32.cont [15/16] 0.0, 128
    %3406 = vxpose.xlu0.b32.end [16/16] 0.0, 128
    %v3407 = vpop.trf.xlu0
    %v3408 = vpop.trf.xlu0
    %v3409 = vpop.trf.xlu0
    %v3410 = vpop.trf.xlu0
    %v3411 = vpop.trf.xlu0
    %v3412 = vpop.trf.xlu0
    %v3413 = vpop.trf.xlu0
    %v3414 = vpop.trf.xlu0
    %v3415 = vpop.trf.xlu0
    %v3416 = vpop.trf.xlu0
    %v3417 = vpop.trf.xlu0
    %v3418 = vpop.trf.xlu0
    %v3419 = vpop.trf.xlu0
    %v3420 = vpop.trf.xlu0
    %v3421 = vpop.trf.xlu0
    %v3422 = vpop.trf.xlu0
    %3423 = vxpose.xlu0.b32.start [1/16] %v3279, 128
    %3424 = vxpose.xlu0.b32.cont [2/16] %v3284, 128
    %3425 = vxpose.xlu0.b32.cont [3/16] 0.0, 128
    %3426 = vxpose.xlu0.b32.cont [4/16] 0.0, 128
    %3427 = vxpose.xlu0.b32.cont [5/16] 0.0, 128
    %3428 = vxpose.xlu0.b32.cont [6/16] 0.0, 128
    %3429 = vxpose.xlu0.b32.cont [7/16] 0.0, 128
    %3430 = vxpose.xlu0.b32.cont [8/16] 0.0, 128
    %3431 = vxpose.xlu0.b32.cont [9/16] 0.0, 128
    %3432 = vxpose.xlu0.b32.cont [10/16] 0.0, 128
    %3433 = vxpose.xlu0.b32.cont [11/16] 0.0, 128
    %3434 = vxpose.xlu0.b32.cont [12/16] 0.0, 128
    %3435 = vxpose.xlu0.b32.cont [13/16] 0.0, 128
    %3436 = vxpose.xlu0.b32.cont [14/16] 0.0, 128
    %3437 = vxpose.xlu0.b32.cont [15/16] 0.0, 128
    %3438 = vxpose.xlu0.b32.end [16/16] 0.0, 128
    %v3439 = vpop.trf.xlu0
    %v3440 = vpop.trf.xlu0
    %v3441 = vpop.trf.xlu0
    %v3442 = vpop.trf.xlu0
    %v3443 = vpop.trf.xlu0
    %v3444 = vpop.trf.xlu0
    %v3445 = vpop.trf.xlu0
    %v3446 = vpop.trf.xlu0
    %v3447 = vpop.trf.xlu0
    %v3448 = vpop.trf.xlu0
    %v3449 = vpop.trf.xlu0
    %v3450 = vpop.trf.xlu0
    %v3451 = vpop.trf.xlu0
    %v3452 = vpop.trf.xlu0
    %v3453 = vpop.trf.xlu0
    %v3454 = vpop.trf.xlu0
    %3455 = vxpose.xlu0.b32.start [1/16] %v3289, 128
    %3456 = vxpose.xlu0.b32.cont [2/16] %v3294, 128
    %3457 = vxpose.xlu0.b32.cont [3/16] 0.0, 128
    %3458 = vxpose.xlu0.b32.cont [4/16] 0.0, 128
    %3459 = vxpose.xlu0.b32.cont [5/16] 0.0, 128
    %3460 = vxpose.xlu0.b32.cont [6/16] 0.0, 128
    %3461 = vxpose.xlu0.b32.cont [7/16] 0.0, 128
    %3462 = vxpose.xlu0.b32.cont [8/16] 0.0, 128
    %3463 = vxpose.xlu0.b32.cont [9/16] 0.0, 128
    %3464 = vxpose.xlu0.b32.cont [10/16] 0.0, 128
    %3465 = vxpose.xlu0.b32.cont [11/16] 0.0, 128
    %3466 = vxpose.xlu0.b32.cont [12/16] 0.0, 128
    %3467 = vxpose.xlu0.b32.cont [13/16] 0.0, 128
    %3468 = vxpose.xlu0.b32.cont [14/16] 0.0, 128
    %3469 = vxpose.xlu0.b32.cont [15/16] 0.0, 128
    %3470 = vxpose.xlu0.b32.end [16/16] 0.0, 128
    %v3471 = vpop.trf.xlu0
    %v3472 = vpop.trf.xlu0
    %v3473 = vpop.trf.xlu0
    %v3474 = vpop.trf.xlu0
    %v3475 = vpop.trf.xlu0
    %v3476 = vpop.trf.xlu0
    %v3477 = vpop.trf.xlu0
    %v3478 = vpop.trf.xlu0
    %v3479 = vpop.trf.xlu0
    %v3480 = vpop.trf.xlu0
    %v3481 = vpop.trf.xlu0
    %v3482 = vpop.trf.xlu0
    %v3483 = vpop.trf.xlu0
    %v3484 = vpop.trf.xlu0
    %v3485 = vpop.trf.xlu0
    %v3486 = vpop.trf.xlu0
    %3487 = vxpose.xlu0.b32.start [1/16] %v3299, 128
    %3488 = vxpose.xlu0.b32.cont [2/16] %v3304, 128
    %3489 = vxpose.xlu0.b32.cont [3/16] 0.0, 128
    %3490 = vxpose.xlu0.b32.cont [4/16] 0.0, 128
    %3491 = vxpose.xlu0.b32.cont [5/16] 0.0, 128
    %3492 = vxpose.xlu0.b32.cont [6/16] 0.0, 128
    %3493 = vxpose.xlu0.b32.cont [7/16] 0.0, 128
    %3494 = vxpose.xlu0.b32.cont [8/16] 0.0, 128
    %3495 = vxpose.xlu0.b32.cont [9/16] 0.0, 128
    %3496 = vxpose.xlu0.b32.cont [10/16] 0.0, 128
    %3497 = vxpose.xlu0.b32.cont [11/16] 0.0, 128
    %3498 = vxpose.xlu0.b32.cont [12/16] 0.0, 128
    %3499 = vxpose.xlu0.b32.cont [13/16] 0.0, 128
    %3500 = vxpose.xlu0.b32.cont [14/16] 0.0, 128
    %3501 = vxpose.xlu0.b32.cont [15/16] 0.0, 128
    %3502 = vxpose.xlu0.b32.end [16/16] 0.0, 128
    %v3503 = vpop.trf.xlu0
    %v3504 = vpop.trf.xlu0
    %v3505 = vpop.trf.xlu0
    %v3506 = vpop.trf.xlu0
    %v3507 = vpop.trf.xlu0
    %v3508 = vpop.trf.xlu0
    %v3509 = vpop.trf.xlu0
    %v3510 = vpop.trf.xlu0
    %v3511 = vpop.trf.xlu0
    %v3512 = vpop.trf.xlu0
    %v3513 = vpop.trf.xlu0
    %v3514 = vpop.trf.xlu0
    %v3515 = vpop.trf.xlu0
    %v3516 = vpop.trf.xlu0
    %v3517 = vpop.trf.xlu0
    %v3518 = vpop.trf.xlu0
    %3519 = vxpose.xlu0.b32.start [1/16] %v3309, 128
    %3520 = vxpose.xlu0.b32.cont [2/16] %v3314, 128
    %3521 = vxpose.xlu0.b32.cont [3/16] 0.0, 128
    %3522 = vxpose.xlu0.b32.cont [4/16] 0.0, 128
    %3523 = vxpose.xlu0.b32.cont [5/16] 0.0, 128
    %3524 = vxpose.xlu0.b32.cont [6/16] 0.0, 128
    %3525 = vxpose.xlu0.b32.cont [7/16] 0.0, 128
    %3526 = vxpose.xlu0.b32.cont [8/16] 0.0, 128
    %3527 = vxpose.xlu0.b32.cont [9/16] 0.0, 128
    %3528 = vxpose.xlu0.b32.cont [10/16] 0.0, 128
    %3529 = vxpose.xlu0.b32.cont [11/16] 0.0, 128
    %3530 = vxpose.xlu0.b32.cont [12/16] 0.0, 128
    %3531 = vxpose.xlu0.b32.cont [13/16] 0.0, 128
    %3532 = vxpose.xlu0.b32.cont [14/16] 0.0, 128
    %3533 = vxpose.xlu0.b32.cont [15/16] 0.0, 128
    %3534 = vxpose.xlu0.b32.end [16/16] 0.0, 128
    %v3535 = vpop.trf.xlu0
    %v3536 = vpop.trf.xlu0
    %v3537 = vpop.trf.xlu0
    %v3538 = vpop.trf.xlu0
    %v3539 = vpop.trf.xlu0
    %v3540 = vpop.trf.xlu0
    %v3541 = vpop.trf.xlu0
    %v3542 = vpop.trf.xlu0
    %v3543 = vpop.trf.xlu0
    %v3544 = vpop.trf.xlu0
    %v3545 = vpop.trf.xlu0
    %v3546 = vpop.trf.xlu0
    %v3547 = vpop.trf.xlu0
    %v3548 = vpop.trf.xlu0
    %v3549 = vpop.trf.xlu0
    %v3550 = vpop.trf.xlu0
    %3551 = vxpose.xlu0.b32.start [1/16] %v3319, 128
    %3552 = vxpose.xlu0.b32.cont [2/16] %v3324, 128
    %3553 = vxpose.xlu0.b32.cont [3/16] 0.0, 128
    %3554 = vxpose.xlu0.b32.cont [4/16] 0.0, 128
    %3555 = vxpose.xlu0.b32.cont [5/16] 0.0, 128
    %3556 = vxpose.xlu0.b32.cont [6/16] 0.0, 128
    %3557 = vxpose.xlu0.b32.cont [7/16] 0.0, 128
    %3558 = vxpose.xlu0.b32.cont [8/16] 0.0, 128
    %3559 = vxpose.xlu0.b32.cont [9/16] 0.0, 128
    %3560 = vxpose.xlu0.b32.cont [10/16] 0.0, 128
    %3561 = vxpose.xlu0.b32.cont [11/16] 0.0, 128
    %3562 = vxpose.xlu0.b32.cont [12/16] 0.0, 128
    %3563 = vxpose.xlu0.b32.cont [13/16] 0.0, 128
    %3564 = vxpose.xlu0.b32.cont [14/16] 0.0, 128
    %3565 = vxpose.xlu0.b32.cont [15/16] 0.0, 128
    %3566 = vxpose.xlu0.b32.end [16/16] 0.0, 128
    %v3567 = vpop.trf.xlu0
    %v3568 = vpop.trf.xlu0
    %v3569 = vpop.trf.xlu0
    %v3570 = vpop.trf.xlu0
    %v3571 = vpop.trf.xlu0
    %v3572 = vpop.trf.xlu0
    %v3573 = vpop.trf.xlu0
    %v3574 = vpop.trf.xlu0
    %v3575 = vpop.trf.xlu0
    %v3576 = vpop.trf.xlu0
    %v3577 = vpop.trf.xlu0
    %v3578 = vpop.trf.xlu0
    %v3579 = vpop.trf.xlu0
    %v3580 = vpop.trf.xlu0
    %v3581 = vpop.trf.xlu0
    %v3582 = vpop.trf.xlu0
    %v3584 = vsel %vm418, %v3343, 0
    %v3587 = vsel %vm418, %v3344, 0
    %v3590 = vsel %vm418, %v3375, 0
    %v3593 = vsel %vm418, %v3376, 0
    %v3596 = vsel %vm418, %v3407, 0
    %v3599 = vsel %vm418, %v3408, 0
    %v3602 = vsel %vm418, %v3439, 0
    %v3605 = vsel %vm418, %v3440, 0
    %v3608 = vsel %vm418, %v3471, 0
    %v3611 = vsel %vm418, %v3472, 0
    %v3614 = vsel %vm418, %v3503, 0
    %v3617 = vsel %vm418, %v3504, 0
    %v3620 = vsel %vm418, %v3535, 0
    %v3623 = vsel %vm418, %v3536, 0
    %v3626 = vsel %vm418, %v3567, 0
    %v3629 = vsel %vm418, %v3568, 0
    %3631 = vmatprep.subr.mxu0 0.0
    %3632 = vmatpush1.msra.mxu0 %v109
    %3633 = vmatprep.subr.mxu0 0.0
    %3634 = vmatpush1.msra.mxu0 %v110
    %3635 = vmatprep.subr.mxu0 0.0
    %3636 = vmatpush1.msra.mxu0 0.0
    %3637 = vmatprep.subr.mxu0 0.0
    %3638 = vmatpush1.msra.mxu0 0.0
    %3639 = vmatprep.subr.mxu0 0.0
    %3640 = vmatpush1.msra.mxu0 0.0
    %3641 = vmatprep.subr.mxu0 0.0
    %3642 = vmatpush1.msra.mxu0 0.0
    %3643 = vmatprep.subr.mxu0 0.0
    %3644 = vmatpush1.msra.mxu0 0.0
    %3645 = vmatprep.subr.mxu0 0.0
    %3646 = vmatpush1.msra.mxu0 0.0
    %3647 = vmatprep.subr.mxu0 0.0
    %3648 = vmatpush1.msra.mxu0 0.0
    %3649 = vmatprep.subr.mxu0 0.0
    %3650 = vmatpush1.msra.mxu0 0.0
    %3651 = vmatprep.subr.mxu0 0.0
    %3652 = vmatpush1.msra.mxu0 0.0
    %3653 = vmatprep.subr.mxu0 0.0
    %3654 = vmatpush1.msra.mxu0 0.0
    %3655 = vmatprep.subr.mxu0 0.0
    %3656 = vmatpush1.msra.mxu0 0.0
    %3657 = vmatprep.subr.mxu0 0.0
    %3658 = vmatpush1.msra.mxu0 0.0
    %3659 = vmatprep.subr.mxu0 0.0
    %3660 = vmatpush1.msra.mxu0 0.0
    %3661 = vmatprep.subr.mxu0 0.0
    %3662 = vmatpush1.msra.mxu0 0.0
    %3663 = vmatprep.subr.mxu0 0.0
    %3664 = vmatpush1.msra.mxu0 0.0
    %3665 = vmatprep.subr.mxu0 0.0
    %3666 = vmatpush1.msra.mxu0 0.0
    %3667 = vmatprep.subr.mxu0 0.0
    %3668 = vmatpush1.msra.mxu0 0.0
    %3669 = vmatprep.subr.mxu0 0.0
    %3670 = vmatpush1.msra.mxu0 0.0
    %3671 = vmatprep.subr.mxu0 0.0
    %3672 = vmatpush1.msra.mxu0 0.0
    %3673 = vmatprep.subr.mxu0 0.0
    %3674 = vmatpush1.msra.mxu0 0.0
    %3675 = vmatprep.subr.mxu0 0.0
    %3676 = vmatpush1.msra.mxu0 0.0
    %3677 = vmatprep.subr.mxu0 0.0
    %3678 = vmatpush1.msra.mxu0 0.0
    %3679 = vmatprep.subr.mxu0 0.0
    %3680 = vmatpush1.msra.mxu0 0.0
    %3681 = vmatprep.subr.mxu0 0.0
    %3682 = vmatpush1.msra.mxu0 0.0
    %3683 = vmatprep.subr.mxu0 0.0
    %3684 = vmatpush1.msra.mxu0 0.0
    %3685 = vmatprep.subr.mxu0 0.0
    %3686 = vmatpush1.msra.mxu0 0.0
    %3687 = vmatprep.subr.mxu0 0.0
    %3688 = vmatpush1.msra.mxu0 0.0
    %3689 = vmatprep.subr.mxu0 0.0
    %3690 = vmatpush1.msra.mxu0 0.0
    %3691 = vmatprep.subr.mxu0 0.0
    %3692 = vmatpush1.msra.mxu0 0.0
    %3693 = vmatprep.subr.mxu0 0.0
    %3694 = vmatpush1.msra.mxu0 0.0
    %3695 = vmatprep.mubr.f32.mxu0 0.0
    %3696 = vmatmul.mubr.f32.gmra.mrb[0].mxu0 %v3584
    %v3697 = vpop.f32.mrb[0].mxu0
    %v3698 = vadd.f32 0.0, %v3697
    %v3699 = vpop.f32.mrb[0].mxu0
    %3700 = vmatprep.mubr.f32.mxu0 0.0
    %3701 = vmatmul.mubr.f32.gmra.mrb[0].mxu0 %v3587
    %v3702 = vpop.f32.mrb[0].mxu0
    %v3703 = vadd.f32 0.0, %v3702
    %v3704 = vpop.f32.mrb[0].mxu0
    %3705 = vmatprep.mubr.f32.mxu0 0.0
    %3706 = vmatmul.mubr.f32.gmra.mrb[0].mxu0 %v3590
    %v3707 = vpop.f32.mrb[0].mxu0
    %v3708 = vadd.f32 0.0, %v3707
    %v3709 = vpop.f32.mrb[0].mxu0
    %3710 = vmatprep.mubr.f32.mxu0 0.0
    %3711 = vmatmul.mubr.f32.gmra.mrb[0].mxu0 %v3593
    %v3712 = vpop.f32.mrb[0].mxu0
    %v3713 = vadd.f32 0.0, %v3712
    %v3714 = vpop.f32.mrb[0].mxu0
    %3715 = vmatprep.mubr.f32.mxu0 0.0
    %3716 = vmatmul.mubr.f32.gmra.mrb[0].mxu0 %v3596
    %v3717 = vpop.f32.mrb[0].mxu0
    %v3718 = vadd.f32 0.0, %v3717
    %v3719 = vpop.f32.mrb[0].mxu0
    %3720 = vmatprep.mubr.f32.mxu0 0.0
    %3721 = vmatmul.mubr.f32.gmra.mrb[0].mxu0 %v3599
    %v3722 = vpop.f32.mrb[0].mxu0
    %v3723 = vadd.f32 0.0, %v3722
    %v3724 = vpop.f32.mrb[0].mxu0
    %3725 = vmatprep.mubr.f32.mxu0 0.0
    %3726 = vmatmul.mubr.f32.gmra.mrb[0].mxu0 %v3602
    %v3727 = vpop.f32.mrb[0].mxu0
    %v3728 = vadd.f32 0.0, %v3727
    %v3729 = vpop.f32.mrb[0].mxu0
    %3730 = vmatprep.mubr.f32.mxu0 0.0
    %3731 = vmatmul.mubr.f32.gmra.mrb[0].mxu0 %v3605
    %v3732 = vpop.f32.mrb[0].mxu0
    %v3733 = vadd.f32 0.0, %v3732
    %v3734 = vpop.f32.mrb[0].mxu0
    %3735 = vmatprep.mubr.f32.mxu0 0.0
    %3736 = vmatmul.mubr.f32.gmra.mrb[0].mxu0 %v3608
    %v3737 = vpop.f32.mrb[0].mxu0
    %v3738 = vadd.f32 0.0, %v3737
    %v3739 = vpop.f32.mrb[0].mxu0
    %3740 = vmatprep.mubr.f32.mxu0 0.0
    %3741 = vmatmul.mubr.f32.gmra.mrb[0].mxu0 %v3611
    %v3742 = vpop.f32.mrb[0].mxu0
    %v3743 = vadd.f32 0.0, %v3742
    %v3744 = vpop.f32.mrb[0].mxu0
    %3745 = vmatprep.mubr.f32.mxu0 0.0
    %3746 = vmatmul.mubr.f32.gmra.mrb[0].mxu0 %v3614
    %v3747 = vpop.f32.mrb[0].mxu0
    %v3748 = vadd.f32 0.0, %v3747
    %v3749 = vpop.f32.mrb[0].mxu0
    %3750 = vmatprep.mubr.f32.mxu0 0.0
    %3751 = vmatmul.mubr.f32.gmra.mrb[0].mxu0 %v3617
    %v3752 = vpop.f32.mrb[0].mxu0
    %v3753 = vadd.f32 0.0, %v3752
    %v3754 = vpop.f32.mrb[0].mxu0
    %3755 = vmatprep.mubr.f32.mxu0 0.0
    %3756 = vmatmul.mubr.f32.gmra.mrb[0].mxu0 %v3620
    %v3757 = vpop.f32.mrb[0].mxu0
    %v3758 = vadd.f32 0.0, %v3757
    %v3759 = vpop.f32.mrb[0].mxu0
    %3760 = vmatprep.mubr.f32.mxu0 0.0
    %3761 = vmatmul.mubr.f32.gmra.mrb[0].mxu0 %v3623
    %v3762 = vpop.f32.mrb[0].mxu0
    %v3763 = vadd.f32 0.0, %v3762
    %v3764 = vpop.f32.mrb[0].mxu0
    %3765 = vmatprep.mubr.f32.mxu0 0.0
    %3766 = vmatmul.mubr.f32.gmra.mrb[0].mxu0 %v3626
    %v3767 = vpop.f32.mrb[0].mxu0
    %v3768 = vadd.f32 0.0, %v3767
    %v3769 = vpop.f32.mrb[0].mxu0
    %3770 = vmatprep.mubr.f32.mxu0 0.0
    %3771 = vmatmul.mubr.f32.gmra.mrb[0].mxu0 %v3629
    %v3772 = vpop.f32.mrb[0].mxu0
    %v3773 = vadd.f32 0.0, %v3772
    %v3774 = vpop.f32.mrb[0].mxu0
    %3775 = vdwg.mxu0
    %v3776 = vmul.f32 %v1082, %v1082
    %v3777 = vmul.f32 %v1087, %v1087
    %v3778 = vmul.f32 %v1092, %v1092
    %v3779 = vmul.f32 %v1097, %v1097
    %v3780 = vmul.f32 %v1102, %v1102
    %v3781 = vmul.f32 %v1107, %v1107
    %v3782 = vmul.f32 %v1112, %v1112
    %v3783 = vmul.f32 %v1117, %v1117
    %v3784 = vmul.f32 %v1122, %v1122
    %v3785 = vmul.f32 %v1127, %v1127
    %v3786 = vmul.f32 %v1132, %v1132
    %v3787 = vmul.f32 %v1137, %v1137
    %v3788 = vmul.f32 %v1142, %v1142
    %v3789 = vmul.f32 %v1147, %v1147
    %v3790 = vmul.f32 %v1152, %v1152
    %v3791 = vmul.f32 %v1157, %v1157
    %v3792 = vmul.f32 %v1724, %v1724
    %v3793 = vmul.f32 %v1729, %v1729
    %v3794 = vmul.f32 %v1734, %v1734
    %v3795 = vmul.f32 %v1739, %v1739
    %v3796 = vmul.f32 %v1744, %v1744
    %v3797 = vmul.f32 %v1749, %v1749
    %v3798 = vmul.f32 %v1754, %v1754
    %v3799 = vmul.f32 %v1759, %v1759
    %v3800 = vmul.f32 %v1764, %v1764
    %v3801 = vmul.f32 %v1769, %v1769
    %v3802 = vmul.f32 %v1774, %v1774
    %v3803 = vmul.f32 %v1779, %v1779
    %v3804 = vmul.f32 %v1784, %v1784
    %v3805 = vmul.f32 %v1789, %v1789
    %v3806 = vmul.f32 %v1794, %v1794
    %v3807 = vmul.f32 %v1799, %v1799
    %v3808 = vmul.f32 %v1082, %v1724
    %v3809 = vmul.f32 %v1087, %v1729
    %v3810 = vmul.f32 %v1092, %v1734
    %v3811 = vmul.f32 %v1097, %v1739
    %v3812 = vmul.f32 %v1102, %v1744
    %v3813 = vmul.f32 %v1107, %v1749
    %v3814 = vmul.f32 %v1112, %v1754
    %v3815 = vmul.f32 %v1117, %v1759
    %v3816 = vmul.f32 %v1122, %v1764
    %v3817 = vmul.f32 %v1127, %v1769
    %v3818 = vmul.f32 %v1132, %v1774
    %v3819 = vmul.f32 %v1137, %v1779
    %v3820 = vmul.f32 %v1142, %v1784
    %v3821 = vmul.f32 %v1147, %v1789
    %v3822 = vmul.f32 %v1152, %v1794
    %v3823 = vmul.f32 %v1157, %v1799
    %v3824 = vsub.f32 %v2382, %v3776
    %v3825 = vsub.f32 %v2387, %v3777
    %v3826 = vsub.f32 %v2392, %v3778
    %v3827 = vsub.f32 %v2397, %v3779
    %v3828 = vsub.f32 %v2402, %v3780
    %v3829 = vsub.f32 %v2407, %v3781
    %v3830 = vsub.f32 %v2412, %v3782
    %v3831 = vsub.f32 %v2417, %v3783
    %v3832 = vsub.f32 %v2422, %v3784
    %v3833 = vsub.f32 %v2427, %v3785
    %v3834 = vsub.f32 %v2432, %v3786
    %v3835 = vsub.f32 %v2437, %v3787
    %v3836 = vsub.f32 %v2442, %v3788
    %v3837 = vsub.f32 %v2447, %v3789
    %v3838 = vsub.f32 %v2452, %v3790
    %v3839 = vsub.f32 %v2457, %v3791
    %v3840 = vsub.f32 %v3040, %v3792
    %v3841 = vsub.f32 %v3045, %v3793
    %v3842 = vsub.f32 %v3050, %v3794
    %v3843 = vsub.f32 %v3055, %v3795
    %v3844 = vsub.f32 %v3060, %v3796
    %v3845 = vsub.f32 %v3065, %v3797
    %v3846 = vsub.f32 %v3070, %v3798
    %v3847 = vsub.f32 %v3075, %v3799
    %v3848 = vsub.f32 %v3080, %v3800
    %v3849 = vsub.f32 %v3085, %v3801
    %v3850 = vsub.f32 %v3090, %v3802
    %v3851 = vsub.f32 %v3095, %v3803
    %v3852 = vsub.f32 %v3100, %v3804
    %v3853 = vsub.f32 %v3105, %v3805
    %v3854 = vsub.f32 %v3110, %v3806
    %v3855 = vsub.f32 %v3115, %v3807
    %v3856 = vsub.f32 %v3698, %v3808
    %v3857 = vsub.f32 %v3703, %v3809
    %v3858 = vsub.f32 %v3708, %v3810
    %v3859 = vsub.f32 %v3713, %v3811
    %v3860 = vsub.f32 %v3718, %v3812
    %v3861 = vsub.f32 %v3723, %v3813
    %v3862 = vsub.f32 %v3728, %v3814
    %v3863 = vsub.f32 %v3733, %v3815
    %v3864 = vsub.f32 %v3738, %v3816
    %v3865 = vsub.f32 %v3743, %v3817
    %v3866 = vsub.f32 %v3748, %v3818
    %v3867 = vsub.f32 %v3753, %v3819
    %v3868 = vsub.f32 %v3758, %v3820
    %v3869 = vsub.f32 %v3763, %v3821
    %v3870 = vsub.f32 %v3768, %v3822
    %v3871 = vsub.f32 %v3773, %v3823
    %v3872 = vmul.f32 %v3808, 2.0
    %v3873 = vmul.f32 %v3809, 2.0
    %v3874 = vmul.f32 %v3810, 2.0
    %v3875 = vmul.f32 %v3811, 2.0
    %v3876 = vmul.f32 %v3812, 2.0
    %v3877 = vmul.f32 %v3813, 2.0
    %v3878 = vmul.f32 %v3814, 2.0
    %v3879 = vmul.f32 %v3815, 2.0
    %v3880 = vmul.f32 %v3816, 2.0
    %v3881 = vmul.f32 %v3817, 2.0
    %v3882 = vmul.f32 %v3818, 2.0
    %v3883 = vmul.f32 %v3819, 2.0
    %v3884 = vmul.f32 %v3820, 2.0
    %v3885 = vmul.f32 %v3821, 2.0
    %v3886 = vmul.f32 %v3822, 2.0
    %v3887 = vmul.f32 %v3823, 2.0
    %v3888 = vadd.f32 %v3872, 0.0001
    %v3889 = vadd.f32 %v3873, 0.0001
    %v3890 = vadd.f32 %v3874, 0.0001
    %v3891 = vadd.f32 %v3875, 0.0001
    %v3892 = vadd.f32 %v3876, 0.0001
    %v3893 = vadd.f32 %v3877, 0.0001
    %v3894 = vadd.f32 %v3878, 0.0001
    %v3895 = vadd.f32 %v3879, 0.0001
    %v3896 = vadd.f32 %v3880, 0.0001
    %v3897 = vadd.f32 %v3881, 0.0001
    %v3898 = vadd.f32 %v3882, 0.0001
    %v3899 = vadd.f32 %v3883, 0.0001
    %v3900 = vadd.f32 %v3884, 0.0001
    %v3901 = vadd.f32 %v3885, 0.0001
    %v3902 = vadd.f32 %v3886, 0.0001
    %v3903 = vadd.f32 %v3887, 0.0001
    %v3904 = vmul.f32 %v3856, 2.0
    %v3905 = vmul.f32 %v3857, 2.0
    %v3906 = vmul.f32 %v3858, 2.0
    %v3907 = vmul.f32 %v3859, 2.0
    %v3908 = vmul.f32 %v3860, 2.0
    %v3909 = vmul.f32 %v3861, 2.0
    %v3910 = vmul.f32 %v3862, 2.0
    %v3911 = vmul.f32 %v3863, 2.0
    %v3912 = vmul.f32 %v3864, 2.0
    %v3913 = vmul.f32 %v3865, 2.0
    %v3914 = vmul.f32 %v3866, 2.0
    %v3915 = vmul.f32 %v3867, 2.0
    %v3916 = vmul.f32 %v3868, 2.0
    %v3917 = vmul.f32 %v3869, 2.0
    %v3918 = vmul.f32 %v3870, 2.0
    %v3919 = vmul.f32 %v3871, 2.0
    %v3920 = vadd.f32 %v3904, 0.0009
    %v3921 = vadd.f32 %v3905, 0.0009
    %v3922 = vadd.f32 %v3906, 0.0009
    %v3923 = vadd.f32 %v3907, 0.0009
    %v3924 = vadd.f32 %v3908, 0.0009
    %v3925 = vadd.f32 %v3909, 0.0009
    %v3926 = vadd.f32 %v3910, 0.0009
    %v3927 = vadd.f32 %v3911, 0.0009
    %v3928 = vadd.f32 %v3912, 0.0009
    %v3929 = vadd.f32 %v3913, 0.0009
    %v3930 = vadd.f32 %v3914, 0.0009
    %v3931 = vadd.f32 %v3915, 0.0009
    %v3932 = vadd.f32 %v3916, 0.0009
    %v3933 = vadd.f32 %v3917, 0.0009
    %v3934 = vadd.f32 %v3918, 0.0009
    %v3935 = vadd.f32 %v3919, 0.0009
    %v3936 = vmul.f32 %v3888, %v3920
    %v3937 = vmul.f32 %v3889, %v3921
    %v3938 = vmul.f32 %v3890, %v3922
    %v3939 = vmul.f32 %v3891, %v3923
    %v3940 = vmul.f32 %v3892, %v3924
    %v3941 = vmul.f32 %v3893, %v3925
    %v3942 = vmul.f32 %v3894, %v3926
    %v3943 = vmul.f32 %v3895, %v3927
    %v3944 = vmul.f32 %v3896, %v3928
    %v3945 = vmul.f32 %v3897, %v3929
    %v3946 = vmul.f32 %v3898, %v3930
    %v3947 = vmul.f32 %v3899, %v3931
    %v3948 = vmul.f32 %v3900, %v3932
    %v3949 = vmul.f32 %v3901, %v3933
    %v3950 = vmul.f32 %v3902, %v3934
    %v3951 = vmul.f32 %v3903, %v3935
    %v3952 = vadd.f32 %v3776, %v3792
    %v3953 = vadd.f32 %v3777, %v3793
    %v3954 = vadd.f32 %v3778, %v3794
    %v3955 = vadd.f32 %v3779, %v3795
    %v3956 = vadd.f32 %v3780, %v3796
    %v3957 = vadd.f32 %v3781, %v3797
    %v3958 = vadd.f32 %v3782, %v3798
    %v3959 = vadd.f32 %v3783, %v3799
    %v3960 = vadd.f32 %v3784, %v3800
    %v3961 = vadd.f32 %v3785, %v3801
    %v3962 = vadd.f32 %v3786, %v3802
    %v3963 = vadd.f32 %v3787, %v3803
    %v3964 = vadd.f32 %v3788, %v3804
    %v3965 = vadd.f32 %v3789, %v3805
    %v3966 = vadd.f32 %v3790, %v3806
    %v3967 = vadd.f32 %v3791, %v3807
    %v3968 = vadd.f32 %v3952, 0.0001
    %v3969 = vadd.f32 %v3953, 0.0001
    %v3970 = vadd.f32 %v3954, 0.0001
    %v3971 = vadd.f32 %v3955, 0.0001
    %v3972 = vadd.f32 %v3956, 0.0001
    %v3973 = vadd.f32 %v3957, 0.0001
    %v3974 = vadd.f32 %v3958, 0.0001
    %v3975 = vadd.f32 %v3959, 0.0001
    %v3976 = vadd.f32 %v3960, 0.0001
    %v3977 = vadd.f32 %v3961, 0.0001
    %v3978 = vadd.f32 %v3962, 0.0001
    %v3979 = vadd.f32 %v3963, 0.0001
    %v3980 = vadd.f32 %v3964, 0.0001
    %v3981 = vadd.f32 %v3965, 0.0001
    %v3982 = vadd.f32 %v3966, 0.0001
    %v3983 = vadd.f32 %v3967, 0.0001
    %v3984 = vadd.f32 %v3824, %v3840
    %v3985 = vadd.f32 %v3825, %v3841
    %v3986 = vadd.f32 %v3826, %v3842
    %v3987 = vadd.f32 %v3827, %v3843
    %v3988 = vadd.f32 %v3828, %v3844
    %v3989 = vadd.f32 %v3829, %v3845
    %v3990 = vadd.f32 %v3830, %v3846
    %v3991 = vadd.f32 %v3831, %v3847
    %v3992 = vadd.f32 %v3832, %v3848
    %v3993 = vadd.f32 %v3833, %v3849
    %v3994 = vadd.f32 %v3834, %v3850
    %v3995 = vadd.f32 %v3835, %v3851
    %v3996 = vadd.f32 %v3836, %v3852
    %v3997 = vadd.f32 %v3837, %v3853
    %v3998 = vadd.f32 %v3838, %v3854
    %v3999 = vadd.f32 %v3839, %v3855
    %v4000 = vadd.f32 %v3984, 0.0009
    %v4001 = vadd.f32 %v3985, 0.0009
    %v4002 = vadd.f32 %v3986, 0.0009
    %v4003 = vadd.f32 %v3987, 0.0009
    %v4004 = vadd.f32 %v3988, 0.0009
    %v4005 = vadd.f32 %v3989, 0.0009
    %v4006 = vadd.f32 %v3990, 0.0009
    %v4007 = vadd.f32 %v3991, 0.0009
    %v4008 = vadd.f32 %v3992, 0.0009
    %v4009 = vadd.f32 %v3993, 0.0009
    %v4010 = vadd.f32 %v3994, 0.0009
    %v4011 = vadd.f32 %v3995, 0.0009
    %v4012 = vadd.f32 %v3996, 0.0009
    %v4013 = vadd.f32 %v3997, 0.0009
    %v4014 = vadd.f32 %v3998, 0.0009
    %v4015 = vadd.f32 %v3999, 0.0009
    %v4016 = vmul.f32 %v3968, %v4000
    %v4017 = vmul.f32 %v3969, %v4001
    %v4018 = vmul.f32 %v3970, %v4002
    %v4019 = vmul.f32 %v3971, %v4003
    %v4020 = vmul.f32 %v3972, %v4004
    %v4021 = vmul.f32 %v3973, %v4005
    %v4022 = vmul.f32 %v3974, %v4006
    %v4023 = vmul.f32 %v3975, %v4007
    %v4024 = vmul.f32 %v3976, %v4008
    %v4025 = vmul.f32 %v3977, %v4009
    %v4026 = vmul.f32 %v3978, %v4010
    %v4027 = vmul.f32 %v3979, %v4011
    %v4028 = vmul.f32 %v3980, %v4012
    %v4029 = vmul.f32 %v3981, %v4013
    %v4030 = vmul.f32 %v3982, %v4014
    %v4031 = vmul.f32 %v3983, %v4015
    %v4032 = vld [vmem:[#allocation3] sm:$0xff]
    %v4033 = vrcp.pop %v4016
    %v4034 = vmul.f32 %v3936, %v4033
    %v4035 = vrcp.pop %v4017
    %v4036 = vmul.f32 %v3937, %v4035
    %v4037 = vrcp.pop %v4018
    %v4038 = vmul.f32 %v3938, %v4037
    %v4039 = vrcp.pop %v4019
    %v4040 = vmul.f32 %v3939, %v4039
    %v4041 = vrcp.pop %v4020
    %v4042 = vmul.f32 %v3940, %v4041
    %v4043 = vrcp.pop %v4021
    %v4044 = vmul.f32 %v3941, %v4043
    %v4045 = vrcp.pop %v4022
    %v4046 = vmul.f32 %v3942, %v4045
    %v4047 = vrcp.pop %v4023
    %v4048 = vmul.f32 %v3943, %v4047
    %v4049 = vrcp.pop %v4024
    %v4050 = vmul.f32 %v3944, %v4049
    %v4051 = vrcp.pop %v4025
    %v4052 = vmul.f32 %v3945, %v4051
    %v4053 = vrcp.pop %v4026
    %v4054 = vmul.f32 %v3946, %v4053
    %v4055 = vrcp.pop %v4027
    %v4056 = vmul.f32 %v3947, %v4055
    %v4057 = vrcp.pop %v4028
    %v4058 = vmul.f32 %v3948, %v4057
    %v4059 = vrcp.pop %v4029
    %v4060 = vmul.f32 %v3949, %v4059
    %v4061 = vrcp.pop %v4030
    %v4062 = vmul.f32 %v3950, %v4061
    %v4063 = vrcp.pop %v4031
    %v4064 = vmul.f32 %v3951, %v4063
    %v4065 = vsel %vm418, %v4034, 0.0
    %v4066 = vsel %vm418, %v4038, 0.0
    %v4067 = vadd.f32 %v4065, %v4066
    %v4068 = vsel %vm418, %v4042, 0.0
    %v4069 = vadd.f32 %v4067, %v4068
    %v4070 = vsel %vm418, %v4046, 0.0
    %v4071 = vadd.f32 %v4069, %v4070
    %v4072 = vsel %vm418, %v4050, 0.0
    %v4073 = vadd.f32 %v4071, %v4072
    %v4074 = vsel %vm418, %v4054, 0.0
    %v4075 = vadd.f32 %v4073, %v4074
    %v4076 = vsel %vm418, %v4058, 0.0
    %v4077 = vadd.f32 %v4075, %v4076
    %v4078 = vsel %vm418, %v4062, 0.0
    %v4079 = vadd.f32 %v4077, %v4078
    %v4080 = vsel %vm418, %v4036, 0.0
    %v4081 = vsel %vm418, %v4040, 0.0
    %v4082 = vadd.f32 %v4080, %v4081
    %v4083 = vsel %vm418, %v4044, 0.0
    %v4084 = vadd.f32 %v4082, %v4083
    %v4085 = vsel %vm418, %v4048, 0.0
    %v4086 = vadd.f32 %v4084, %v4085
    %v4087 = vsel %vm418, %v4052, 0.0
    %v4088 = vadd.f32 %v4086, %v4087
    %v4089 = vsel %vm418, %v4056, 0.0
    %v4090 = vadd.f32 %v4088, %v4089
    %v4091 = vsel %vm418, %v4060, 0.0
    %v4092 = vadd.f32 %v4090, %v4091
    %v4093 = vsel %vm418, %v4064, 0.0
    %v4094 = vadd.f32 %v4092, %v4093
    %v4095 = vsel %vm418, %v4079, 0.0
    %v4096 = vsel %vm418, %v4094, 0.0
    %v4097 = vadd.f32 %v4095, %v4096
    %v4098 = vadd.f32 %v4032, %v4097
    %4099 = vst.msk [vmem:[#allocation3] sm:$0xff] %vm418, %v4098
    // Predicated region
    $region30: #{tpu_custom_call.1} parent=1 // pred_check
      %p4100 = pneg %p70
    $region31: #{tpu_custom_call.1} parent=1 // pred_check_branch
      %4102 = sbr.rel (%p4100) target = $region33
    $region32: #{tpu_custom_call.1} parent=1 // pred_region
      %v4103 = vld [vmem:[#allocation2] sm:$0xff]
      %v4104 = vsel %vm418, %v4103, 0.0
      %4105 = vadd.xlane.f32.xlu0 %v4104
      %v4106 = vpop.xlane.xlu0 %4105
      %v4107 = vrot.slane %v4106, 4
      %v4108 = vadd.f32 %v4106, %v4107
      %v4109 = vrot.slane %v4108, 2
      %v4110 = vadd.f32 %v4108, %v4109
      %v4111 = vrot.slane %v4110, 1
      %v4112 = vadd.f32 %v4110, %v4111
      %s4113 = vtos %v4112
      %v4114 = vld [vmem:[#allocation3] sm:$0xff]
      %v4115 = vsel %vm418, %v4114, 0.0
      %4116 = vadd.xlane.f32.xlu0 %v4115
      %v4117 = vpop.xlane.xlu0 %4116
      %v4118 = vrot.slane %v4117, 4
      %v4119 = vadd.f32 %v4117, %v4118
      %v4120 = vrot.slane %v4119, 2
      %v4121 = vadd.f32 %v4119, %v4120
      %v4122 = vrot.slane %v4121, 1
      %v4123 = vadd.f32 %v4121, %v4122
      %s4124 = vtos %v4123
      %v4125 = vlaneseq
      %v4126 = vand.u32 %v4125, 127
      %vm4127 = vcmp.eq.s32.totalorder %v4126, 0
      %v4128 = vstv %s4113
      %v4129 = vsel %vm4127, %v4128, 0.0
      %vm4130 = vcmp.eq.s32.totalorder %v4126, 1
      %v4131 = vstv %s4124
      %v4132 = vsel %vm4130, %v4131, 0.0
      %v4133 = vadd.f32 %v4129, %v4132
      %4134 = vst [vmem:[#allocation10] sm:$0xff] %v4133
    $region33: #{tpu_custom_call.1} parent=1 // pred_fallthru
      _
    // Predicated region
    $region34: #{tpu_custom_call.1} parent=1 // pred_check
      _
    $region35: #{tpu_custom_call.1} parent=1 // pred_check_branch
      %4136 = sbr.rel (0) target = $region37
    $region36: #{tpu_custom_call.1} parent=1 // pred_region
      %s4138 = ssub.s32 128, 128
      %4139 = vsyncadd [#allocation6], %s4138
      %s4141 = sshll.u32 [#allocation10], 4
      %s4142 = int_to_ptr.vmem [resolvable:$true] %s4141
      %4144 = dma.vmem_to_hbm [thread:$0]  %s4142, 128, %s3, [#allocation6]
    $region37: #{tpu_custom_call.1} parent=1 // pred_fallthru
      _
    // Predicated region
    $region38: #{tpu_custom_call.1} parent=1 // pred_check
      _
    $region39: #{tpu_custom_call.1} parent=1 // pred_check_branch
      %4146 = sbr.rel (0) target = $region41
    $region40: #{tpu_custom_call.1} parent=1 // pred_region
      %4147 = dma.done [#allocation6], 128
    $region41: #{tpu_custom_call.1} parent=1 // pred_fallthru
      _
    %4148 = vsyncpa [#allocation5], 1
    %4149 = vsyncpa [#allocation8], 1
    %4150 = vsyncpa [#allocation6], 1

</llo_original>
